<compile_context>
chip_gen: v6e
topology: v6e:2x2x1
jax: 0.10.0
libtpu: 0.0.40
codegen_flags: <defaults>
</compile_context>

<pallas_src>
import math

import jax
import jax.numpy as jnp
from jax.experimental import pallas as pl
from jax.experimental.pallas import tpu as pltpu

HIDDEN = 768
FC1 = 512
NUM_CLASSES = 2
OUT_PAD = 128            # lane-dense padded class dimension (multiple of 128)
VOCAB = 128              # surrogate vocab (MXU-friendly); real RuBERT ~120k
TILE_B_MAX = 256         # saturates the 256x256 MXU on v6e/v7x
ONEHOT_VMEM_BUDGET = 8 << 20   # cap for the (tile_b, S, VOCAB) f32 intermediate


def _round_up(x, m):
    return ((x + m - 1) // m) * m


def head_kernel(ids_ref, mask_ref, emb_ref, wp_ref, bp_ref, w1_ref, b1_ref,
                w2_ref, b2_ref, out_ref):
    """Fused embedding gather + mask-mean pooling + pooler + BERT_Arch head.

    ids_ref : (Tb, S)    int32  token ids (streamed per batch tile)
    mask_ref: (Tb, S)    f32    attention mask (streamed per batch tile)
    emb_ref : (V, 768)   bf16   embedding table (VMEM-resident)
    wp_ref  : (768, 768) bf16, bp_ref: (1, 768) f32   surrogate BERT pooler
    w1_ref  : (768, 512) bf16, b1_ref: (1, 512) f32   fc1
    w2_ref  : (512, 128) bf16, b2_ref: (1, 128) f32   fc2 (zero-padded to 128)
    out_ref : (Tb, 128)  f32    log-softmax (cols >= NUM_CLASSES are padding)
    """
    ids = ids_ref[...]                                        # (Tb, S) int32
    m = mask_ref[...]                                         # (Tb, S) f32
    # Pre-normalize the mask: one small (Tb, S) divide instead of (Tb, 768).
    m_norm = m / jnp.maximum(jnp.sum(m, axis=1, keepdims=True), 1.0)

    # Fused embedding gather + masked mean pooling as one MXU matmul:
    #   counts[b, v] = sum_s m_norm[b, s] * [ids[b, s] == v]
    #   pooled[b, :] = counts[b, :] @ E
    vocab_iota = jax.lax.broadcasted_iota(jnp.int32, ids.shape + (VOCAB,), 2)
    onehot_w = jnp.where(ids[:, :, None] == vocab_iota, m_norm[:, :, None], 0.0)
    counts = jnp.sum(onehot_w, axis=1)                        # (Tb, V) f32
    x = jnp.dot(counts.astype(jnp.bfloat16), emb_ref[...],
                preferred_element_type=jnp.float32)           # (Tb, H) f32

    # Surrogate BERT pooler: tanh(dense(x)); MXU bf16, f32 accumulation.
    pooled = jnp.tanh(
        jnp.dot(x.astype(jnp.bfloat16), wp_ref[...],
                preferred_element_type=jnp.float32) + bp_ref[...])

    # fc1 + ReLU (dropout p=0.1 is identity at inference).
    h = jnp.dot(pooled.astype(jnp.bfloat16), w1_ref[...],
                preferred_element_type=jnp.float32) + b1_ref[...]
    h = jnp.maximum(h, 0.0)

    # fc2 (lane-padded to 128 classes for lane-dense stores).
    logits = jnp.dot(h.astype(jnp.bfloat16), w2_ref[...],
                     preferred_element_type=jnp.float32) + b2_ref[...]
    col = jax.lax.broadcasted_iota(jnp.int32, logits.shape, 1)
    logits = jnp.where(col < NUM_CLASSES, logits, -1e30)      # keep pads out

    # LogSoftmax(dim=1), f32.
    mx = jnp.max(logits, axis=1, keepdims=True)
    shifted = logits - mx
    lse = jnp.log(jnp.sum(jnp.exp(shifted), axis=1, keepdims=True))
    out_ref[...] = shifted - lse


def _choose_tiling(B, S):
    """S-aware, balanced batch tiling with >=2 grid steps."""
    # Per-row VMEM is dominated by the in-kernel (tile_b, S, VOCAB) f32
    # one-hot intermediate, so scale tile_b down as S grows.
    max_rows = max(8, ONEHOT_VMEM_BUDGET // (S * VOCAB * 4))
    max_tile = max(8, min(TILE_B_MAX, (max_rows // 8) * 8))
    # >=2 grid steps (DMA/compute pipelining); >=4 when B allows so both of
    # v7x's TensorCores get tiles under dimension_semantics=("parallel",).
    min_tiles = min(4, max(2, pl.cdiv(B, 8)))
    n_tiles = max(min_tiles, pl.cdiv(B, max_tile))
    tile_b = min(max_tile, _round_up(pl.cdiv(B, n_tiles), 8))  # balanced tiles
    b_pad = n_tiles * tile_b
    return tile_b, n_tiles, b_pad


def bert_arch_head(sent_id, mask, emb_bf, wp_bf, bp, w1_bf, b1, w2_bf, b2p):
    """Batch-tiled Pallas call. sent_id: (B, S) int32, mask: (B, S) f32."""
    B, S = sent_id.shape
    tile_b, n_tiles, b_pad = _choose_tiling(B, S)
    if b_pad != B:
        sent_id = jnp.pad(sent_id, ((0, b_pad - B), (0, 0)))
        mask = jnp.pad(mask, ((0, b_pad - B), (0, 0)))

    # Weight/embedding blocks are grid-invariant (index_map -> (0,0)); total
    # resident bf16 weights are ~2.3 MiB so default double-buffering is cheap.
    in_specs = [
        pl.BlockSpec((tile_b, S), lambda i: (i, 0)),          # ids tile
        pl.BlockSpec((tile_b, S), lambda i: (i, 0)),          # mask tile
        pl.BlockSpec((VOCAB, HIDDEN), lambda i: (0, 0)),      # emb table (resident)
        pl.BlockSpec((HIDDEN, HIDDEN), lambda i: (0, 0)),     # pooler W (resident)
        pl.BlockSpec((1, HIDDEN), lambda i: (0, 0)),          # pooler b
        pl.BlockSpec((HIDDEN, FC1), lambda i: (0, 0)),        # fc1 W (resident)
        pl.BlockSpec((1, FC1), lambda i: (0, 0)),             # fc1 b
        pl.BlockSpec((FC1, OUT_PAD), lambda i: (0, 0)),       # fc2 W (resident)
        pl.BlockSpec((1, OUT_PAD), lambda i: (0, 0)),         # fc2 b
    ]
    out_specs = pl.BlockSpec((tile_b, OUT_PAD), lambda i: (i, 0))

    # Advisory cost estimate for XLA's scheduler around the custom call.
    flops = 2 * b_pad * (VOCAB * HIDDEN + HIDDEN * HIDDEN + HIDDEN * FC1
                         + FC1 * OUT_PAD)
    transcendentals = b_pad * (HIDDEN + OUT_PAD)              # tanh + exp
    weight_bytes = ((VOCAB * HIDDEN + HIDDEN * HIDDEN + HIDDEN * FC1
                     + FC1 * OUT_PAD) * 2                     # bf16 weights
                    + (HIDDEN + FC1 + OUT_PAD) * 4)           # f32 biases
    bytes_accessed = (2 * b_pad * S * 4 + weight_bytes + b_pad * OUT_PAD * 4)

    # VMEM budget: actual need, capped at 75% of physical VMEM (64 MiB on v7x,
    # 128 MiB on v5e/v6e) so we never request more than the chip has.
    try:
        phys_vmem = pltpu.get_tpu_info().vmem_capacity_bytes
    except Exception:
        phys_vmem = 64 << 20
    need = (2 * weight_bytes                                  # resident (2-buf) weights
            + 2 * 2 * tile_b * S * 4                          # ids + mask, 2-buf
            + 2 * tile_b * OUT_PAD * 4                        # output tile, 2-buf
            + tile_b * S * VOCAB * 4                          # one-hot intermediate
            + tile_b * (2 * HIDDEN + FC1 + OUT_PAD) * 4       # activations
            + (16 << 20))                                     # compiler headroom
    vmem_limit = min(max(need, 32 << 20), int(0.75 * phys_vmem))

    out = pl.pallas_call(
        head_kernel,
        out_shape=jax.ShapeDtypeStruct((b_pad, OUT_PAD), jnp.float32),
        grid=(n_tiles,),
        in_specs=in_specs,
        out_specs=out_specs,
        compiler_params=pltpu.CompilerParams(
            dimension_semantics=("parallel",),   # shard tiles over v7x's 2 TCs
            vmem_limit_bytes=vmem_limit),
        cost_estimate=pl.CostEstimate(
            flops=flops, transcendentals=transcendentals,
            bytes_accessed=bytes_accessed),
    )(sent_id, mask, emb_bf, wp_bf, bp, w1_bf, b1, w2_bf, b2p)

    return out[:B, :NUM_CLASSES]


def init_params(key):
    """Deterministic init + host-side prep hoisted out of the per-call path."""
    ks = jax.random.split(key, 7)

    def linear(kw, kb, fan_in, fan_out):
        bound = 1.0 / math.sqrt(fan_in)
        w = jax.random.uniform(kw, (fan_in, fan_out), jnp.float32, -bound, bound)
        b = jax.random.uniform(kb, (1, fan_out), jnp.float32, -bound, bound)
        return w, b

    w_pool, b_pool = linear(ks[0], ks[1], HIDDEN, HIDDEN)
    w1, b1 = linear(ks[2], ks[3], HIDDEN, FC1)
    w2, b2 = linear(ks[4], ks[5], FC1, NUM_CLASSES)
    emb = 0.02 * jax.random.normal(ks[6], (VOCAB, HIDDEN), jnp.float32)

    # fc2 padded to a lane-dense 128-wide output; MXU operands pre-cast to bf16.
    w2p = jnp.zeros((FC1, OUT_PAD), jnp.float32).at[:, :NUM_CLASSES].set(w2)
    b2p = jnp.zeros((1, OUT_PAD), jnp.float32).at[:, :NUM_CLASSES].set(b2)
    return (emb.astype(jnp.bfloat16), w_pool.astype(jnp.bfloat16), b_pool,
            w1.astype(jnp.bfloat16), b1, w2p.astype(jnp.bfloat16), b2p)


@jax.jit
def forward(params, sent_id, mask):
    # Everything (embedding lookup, mask-mean pooling, pooler, fc1/relu,
    # fc2, log-softmax) runs inside the single Pallas kernel.
    return bert_arch_head(sent_id.astype(jnp.int32), mask.astype(jnp.float32),
                          *params)


if __name__ == "__main__":
    key = jax.random.PRNGKey(0)
    k_param, k_ids, k_len = jax.random.split(key, 3)

    params = init_params(k_param)

    B, S = 8, 16
    sent_id = jax.random.randint(k_ids, (B, S), 0, VOCAB, dtype=jnp.int32)
    # deterministic mask: each sequence keeps a prefix of valid tokens
    lengths = jax.random.randint(k_len, (B,), 4, S + 1, dtype=jnp.int32)
    mask = (jnp.arange(S)[None, :] < lengths[:, None]).astype(jnp.int32)

    out = jax.block_until_ready(forward(params, sent_id, mask))

    assert out.shape == (B, NUM_CLASSES)
    # log-softmax rows must exp-sum to 1
    row_sums = jnp.sum(jnp.exp(out), axis=1)
    assert jnp.allclose(row_sums, 1.0, atol=1e-5)

    print("KERNEL_OK")
</pallas_src>

<mosaic_0001>
module attributes {stable_mosaic.version = 11 : i64} {
  func.func @head_kernel(%arg0: i32, %arg1: memref<8x16xi32, #tpu.memory_space<vmem>>, %arg2: memref<8x16xf32, #tpu.memory_space<vmem>>, %arg3: memref<128x768xbf16, #tpu.memory_space<vmem>>, %arg4: memref<768x768xbf16, #tpu.memory_space<vmem>>, %arg5: memref<1x768xf32, #tpu.memory_space<vmem>>, %arg6: memref<768x512xbf16, #tpu.memory_space<vmem>>, %arg7: memref<1x512xf32, #tpu.memory_space<vmem>>, %arg8: memref<512x128xbf16, #tpu.memory_space<vmem>>, %arg9: memref<1x128xf32, #tpu.memory_space<vmem>>, %arg10: memref<8x128xf32, #tpu.memory_space<vmem>>) attributes {dimension_semantics = [#tpu.dimension_semantics<parallel>], iteration_bounds = array<i64: 2>, scalar_prefetch = 0 : i64, scratch_operands = 0 : i64, tpu.core_type = #tpu.core_type<tc>, window_params = [{transform_indices = @transform_0, window_bounds = array<i64: 8, 16>}, {transform_indices = @transform_1, window_bounds = array<i64: 8, 16>}, {pipeline_mode = #tpu.pipeline_mode<synchronous>, transform_indices = @transform_2, window_bounds = array<i64: 128, 768>}, {pipeline_mode = #tpu.pipeline_mode<synchronous>, transform_indices = @transform_3, window_bounds = array<i64: 768, 768>}, {pipeline_mode = #tpu.pipeline_mode<synchronous>, transform_indices = @transform_4, window_bounds = array<i64: 1, 768>}, {pipeline_mode = #tpu.pipeline_mode<synchronous>, transform_indices = @transform_5, window_bounds = array<i64: 768, 512>}, {pipeline_mode = #tpu.pipeline_mode<synchronous>, transform_indices = @transform_6, window_bounds = array<i64: 1, 512>}, {pipeline_mode = #tpu.pipeline_mode<synchronous>, transform_indices = @transform_7, window_bounds = array<i64: 512, 128>}, {pipeline_mode = #tpu.pipeline_mode<synchronous>, transform_indices = @transform_8, window_bounds = array<i64: 1, 128>}, {transform_indices = @transform_9, window_bounds = array<i64: 8, 128>}]} {
    %c0 = arith.constant 0 : index
    %c0_0 = arith.constant 0 : index
    %0 = vector.load %arg1[%c0, %c0_0] : memref<8x16xi32, #tpu.memory_space<vmem>>, vector<8x16xi32>
    %c0_1 = arith.constant 0 : index
    %c0_2 = arith.constant 0 : index
    %1 = vector.load %arg2[%c0_1, %c0_2] : memref<8x16xf32, #tpu.memory_space<vmem>>, vector<8x16xf32>
    %cst = arith.constant dense<0.000000e+00> : vector<8xf32>
    %2 = vector.multi_reduction <add>, %1, %cst [1] : vector<8x16xf32> to vector<8xf32>
    %3 = vector.shape_cast %2 : vector<8xf32> to vector<8x1xf32>
    %cst_3 = arith.constant 1.000000e+00 : f32
    %4 = vector.broadcast %cst_3 : f32 to vector<8x1xf32>
    %5 = arith.maximumf %3, %4 : vector<8x1xf32>
    %6 = vector.broadcast %5 : vector<8x1xf32> to vector<8x16xf32>
    %7 = arith.divf %1, %6 : vector<8x16xf32>
    %8 = tpu.iota {dimensions = array<i32: 2>} : vector<8x16x128xi32>
    %9 = vector.shape_cast %0 : vector<8x16xi32> to vector<8x16x1xi32>
    %10 = vector.broadcast %9 : vector<8x16x1xi32> to vector<8x16x128xi32>
    %11 = arith.cmpi eq, %10, %8 : vector<8x16x128xi32>
    %12 = vector.shape_cast %7 : vector<8x16xf32> to vector<8x16x1xf32>
    %cst_4 = arith.constant 0.000000e+00 : f32
    %13 = vector.shape_cast %12 : vector<8x16x1xf32> to vector<8x16x1xf32>
    %14 = vector.broadcast %13 : vector<8x16x1xf32> to vector<8x16x128xf32>
    %15 = vector.broadcast %cst_4 : f32 to vector<8x16x128xf32>
    %16 = arith.select %11, %14, %15 : vector<8x16x128xi1>, vector<8x16x128xf32>
    %cst_5 = arith.constant dense<0.000000e+00> : vector<8x128xf32>
    %17 = vector.multi_reduction <add>, %16, %cst_5 [1] : vector<8x16x128xf32> to vector<8x128xf32>
    %18 = arith.truncf %17 : vector<8x128xf32> to vector<8x128xbf16>
    %c0_6 = arith.constant 0 : index
    %c0_7 = arith.constant 0 : index
    %19 = vector.load %arg3[%c0_6, %c0_7] : memref<128x768xbf16, #tpu.memory_space<vmem>>, vector<128x768xbf16>
    %cst_8 = arith.constant dense<0.000000e+00> : vector<8x768xf32>
    %20 = tpu.matmul %18, %19, %cst_8 {dimension_numbers = #tpu.dot_dimension_numbers<[1], [0], [0], [1], [0, 0, 1, 1], [], []>} : vector<8x128xbf16>, vector<128x768xbf16>, vector<8x768xf32> -> vector<8x768xf32>
    %21 = arith.truncf %20 : vector<8x768xf32> to vector<8x768xbf16>
    %c0_9 = arith.constant 0 : index
    %c0_10 = arith.constant 0 : index
    %22 = vector.load %arg4[%c0_9, %c0_10] : memref<768x768xbf16, #tpu.memory_space<vmem>>, vector<768x768xbf16>
    %cst_11 = arith.constant dense<0.000000e+00> : vector<8x768xf32>
    %23 = tpu.matmul %21, %22, %cst_11 {dimension_numbers = #tpu.dot_dimension_numbers<[1], [0], [0], [1], [0, 0, 1, 1], [], []>} : vector<8x768xbf16>, vector<768x768xbf16>, vector<8x768xf32> -> vector<8x768xf32>
    %c0_12 = arith.constant 0 : index
    %c0_13 = arith.constant 0 : index
    %24 = vector.load %arg5[%c0_12, %c0_13] : memref<1x768xf32, #tpu.memory_space<vmem>>, vector<1x768xf32>
    %25 = vector.broadcast %24 : vector<1x768xf32> to vector<8x768xf32>
    %26 = arith.addf %23, %25 : vector<8x768xf32>
    %27 = math.tanh %26 : vector<8x768xf32>
    %28 = arith.truncf %27 : vector<8x768xf32> to vector<8x768xbf16>
    %c0_14 = arith.constant 0 : index
    %c0_15 = arith.constant 0 : index
    %29 = vector.load %arg6[%c0_14, %c0_15] : memref<768x512xbf16, #tpu.memory_space<vmem>>, vector<768x512xbf16>
    %cst_16 = arith.constant dense<0.000000e+00> : vector<8x512xf32>
    %30 = tpu.matmul %28, %29, %cst_16 {dimension_numbers = #tpu.dot_dimension_numbers<[1], [0], [0], [1], [0, 0, 1, 1], [], []>} : vector<8x768xbf16>, vector<768x512xbf16>, vector<8x512xf32> -> vector<8x512xf32>
    %c0_17 = arith.constant 0 : index
    %c0_18 = arith.constant 0 : index
    %31 = vector.load %arg7[%c0_17, %c0_18] : memref<1x512xf32, #tpu.memory_space<vmem>>, vector<1x512xf32>
    %32 = vector.broadcast %31 : vector<1x512xf32> to vector<8x512xf32>
    %33 = arith.addf %30, %32 : vector<8x512xf32>
    %cst_19 = arith.constant 0.000000e+00 : f32
    %34 = vector.broadcast %cst_19 : f32 to vector<8x512xf32>
    %35 = arith.maximumf %33, %34 : vector<8x512xf32>
    %36 = arith.truncf %35 : vector<8x512xf32> to vector<8x512xbf16>
    %c0_20 = arith.constant 0 : index
    %c0_21 = arith.constant 0 : index
    %37 = vector.load %arg8[%c0_20, %c0_21] : memref<512x128xbf16, #tpu.memory_space<vmem>>, vector<512x128xbf16>
    %cst_22 = arith.constant dense<0.000000e+00> : vector<8x128xf32>
    %38 = tpu.matmul %36, %37, %cst_22 {dimension_numbers = #tpu.dot_dimension_numbers<[1], [0], [0], [1], [0, 0, 1, 1], [], []>} : vector<8x512xbf16>, vector<512x128xbf16>, vector<8x128xf32> -> vector<8x128xf32>
    %c0_23 = arith.constant 0 : index
    %c0_24 = arith.constant 0 : index
    %39 = vector.load %arg9[%c0_23, %c0_24] : memref<1x128xf32, #tpu.memory_space<vmem>>, vector<1x128xf32>
    %40 = vector.broadcast %39 : vector<1x128xf32> to vector<8x128xf32>
    %41 = arith.addf %38, %40 : vector<8x128xf32>
    %42 = tpu.iota {dimensions = array<i32: 1>} : vector<8x128xi32>
    %c2_i32 = arith.constant 2 : i32
    %43 = vector.broadcast %c2_i32 : i32 to vector<8x128xi32>
    %44 = arith.cmpi slt, %42, %43 : vector<8x128xi32>
    %cst_25 = arith.constant -1.000000e+30 : f32
    %45 = vector.broadcast %cst_25 : f32 to vector<8x128xf32>
    %46 = arith.select %44, %41, %45 : vector<8x128xi1>, vector<8x128xf32>
    %cst_26 = arith.constant dense<0xFF800000> : vector<8xf32>
    %47 = vector.multi_reduction <maximumf>, %46, %cst_26 [1] : vector<8x128xf32> to vector<8xf32>
    %48 = vector.shape_cast %47 : vector<8xf32> to vector<8x1xf32>
    %49 = vector.broadcast %48 : vector<8x1xf32> to vector<8x128xf32>
    %50 = arith.subf %46, %49 : vector<8x128xf32>
    %51 = math.exp %50 : vector<8x128xf32>
    %cst_27 = arith.constant dense<0.000000e+00> : vector<8xf32>
    %52 = vector.multi_reduction <add>, %51, %cst_27 [1] : vector<8x128xf32> to vector<8xf32>
    %53 = vector.shape_cast %52 : vector<8xf32> to vector<8x1xf32>
    %54 = math.log %53 : vector<8x1xf32>
    %55 = vector.broadcast %54 : vector<8x1xf32> to vector<8x128xf32>
    %56 = arith.subf %50, %55 : vector<8x128xf32>
    %c0_28 = arith.constant 0 : index
    %c0_29 = arith.constant 0 : index
    %57 = vector.load %arg10[%c0_28, %c0_29] : memref<8x128xf32, #tpu.memory_space<vmem>>, vector<8x128xf32>
    tpu.vector_store %arg10[%c0_28, %c0_29], %56 {strides = array<i32>} : memref<8x128xf32, #tpu.memory_space<vmem>>, vector<8x128xf32>,
    return
  }
  func.func @transform_0(%arg0: i32) -> (i32, i32) {
    %c0_i32 = arith.constant 0 : i32
    %c0_i32_0 = arith.constant 0 : i32
    return %arg0, %c0_i32 : i32, i32
  }
  func.func @transform_1(%arg0: i32) -> (i32, i32) {
    %c0_i32 = arith.constant 0 : i32
    %c0_i32_0 = arith.constant 0 : i32
    return %arg0, %c0_i32 : i32, i32
  }
  func.func @transform_2(%arg0: i32) -> (i32, i32) {
    %c0_i32 = arith.constant 0 : i32
    %c0_i32_0 = arith.constant 0 : i32
    %c0_i32_1 = arith.constant 0 : i32
    return %c0_i32, %c0_i32_0 : i32, i32
  }
  func.func @transform_3(%arg0: i32) -> (i32, i32) {
    %c0_i32 = arith.constant 0 : i32
    %c0_i32_0 = arith.constant 0 : i32
    %c0_i32_1 = arith.constant 0 : i32
    return %c0_i32, %c0_i32_0 : i32, i32
  }
  func.func @transform_4(%arg0: i32) -> (i32, i32) {
    %c0_i32 = arith.constant 0 : i32
    %c0_i32_0 = arith.constant 0 : i32
    %c0_i32_1 = arith.constant 0 : i32
    return %c0_i32, %c0_i32_0 : i32, i32
  }
  func.func @transform_5(%arg0: i32) -> (i32, i32) {
    %c0_i32 = arith.constant 0 : i32
    %c0_i32_0 = arith.constant 0 : i32
    %c0_i32_1 = arith.constant 0 : i32
    return %c0_i32, %c0_i32_0 : i32, i32
  }
  func.func @transform_6(%arg0: i32) -> (i32, i32) {
    %c0_i32 = arith.constant 0 : i32
    %c0_i32_0 = arith.constant 0 : i32
    %c0_i32_1 = arith.constant 0 : i32
    return %c0_i32, %c0_i32_0 : i32, i32
  }
  func.func @transform_7(%arg0: i32) -> (i32, i32) {
    %c0_i32 = arith.constant 0 : i32
    %c0_i32_0 = arith.constant 0 : i32
    %c0_i32_1 = arith.constant 0 : i32
    return %c0_i32, %c0_i32_0 : i32, i32
  }
  func.func @transform_8(%arg0: i32) -> (i32, i32) {
    %c0_i32 = arith.constant 0 : i32
    %c0_i32_0 = arith.constant 0 : i32
    %c0_i32_1 = arith.constant 0 : i32
    return %c0_i32, %c0_i32_0 : i32, i32
  }
  func.func @transform_9(%arg0: i32) -> (i32, i32) {
    %c0_i32 = arith.constant 0 : i32
    %c0_i32_0 = arith.constant 0 : i32
    return %arg0, %c0_i32 : i32, i32
  }
}

</mosaic_0001>

<llo_original>
// kernel: forward.1
$region0: #{forward.1}
  #allocation0 [shape = 'u32[]', space=smem, size = 0x4, offset = 0x4, fixed_abs, tag = 'smem constant byte address 0x4 - core index']
  #allocation1 [shape = 'u32[144,128]{1,0:T(1,128)}', space=vmem, size = 0x12000, scoped, tag = 'internal scratch']
  %s0 = inlined_call_operand.vmem [shape: s32[16,16], index: 0, kind: input, shape index: {}]
  %s1 = inlined_call_operand.vmem [shape: f32[16,16], index: 1, kind: input, shape index: {}]
  %s2 = inlined_call_operand.hbm [shape: bf16[128,768], index: 2, kind: input, shape index: {}]
  %s3 = inlined_call_operand.hbm [shape: bf16[768,768], index: 3, kind: input, shape index: {}]
  %s4 = inlined_call_operand.hbm [shape: f32[1,768], index: 4, kind: input, shape index: {}]
  %s5 = inlined_call_operand.hbm [shape: bf16[768,512], index: 5, kind: input, shape index: {}]
  %s6 = inlined_call_operand.hbm [shape: f32[1,512], index: 6, kind: input, shape index: {}]
  %s7 = inlined_call_operand.hbm [shape: bf16[512,128], index: 7, kind: input, shape index: {}]
  %s8 = inlined_call_operand.hbm [shape: f32[1,128], index: 8, kind: input, shape index: {}]
  %s9 = inlined_call_operand.vmem [shape: f32[16,128], index: 9, kind: output, shape index: {}]
  %s10 = sld [smem:[#allocation0]]
  $region97: #{forward.1} parent=0
    _
  %s12 = ssub.s32 1, %s10
  %s13 = scalar_select 0, %s12, %s10
  $region1: #{forward.1} parent=0
    #allocation2 [shape = 'u8[196608]{0}', space=vmem, size = 0x30000, scoped, tag = 'input window, operand 2, single buffered']
    #allocation3 [shape = 's32[2]{0}', space=sflag, size = 0x8, scoped, tag = 'scoped memory for forward.1']
    #allocation4 [shape = 'u8[1179648]{0}', space=vmem, size = 0x120000, scoped, tag = 'input window, operand 3, single buffered']
    #allocation5 [shape = 's32[1]{0}', space=sflag, size = 0x4, scoped, tag = 'scoped memory for forward.1']
    #allocation6 [shape = 'u8[3072]{0}', space=vmem, size = 0xc00, scoped, tag = 'input window, operand 4, single buffered']
    #allocation7 [shape = 'u8[786432]{0}', space=vmem, size = 0xc0000, scoped, tag = 'input window, operand 5, single buffered']
    #allocation8 [shape = 's32[1]{0}', space=sflag, size = 0x4, scoped, tag = 'scoped memory for forward.1']
    #allocation9 [shape = 'u8[2048]{0}', space=vmem, size = 0x800, scoped, tag = 'input window, operand 6, single buffered']
    #allocation10 [shape = 'u8[131072]{0}', space=vmem, size = 0x20000, scoped, tag = 'input window, operand 7, single buffered']
    #allocation11 [shape = 's32[1]{0}', space=sflag, size = 0x4, scoped, tag = 'scoped memory for forward.1']
    #allocation12 [shape = 'u8[512]{0}', space=vmem, size = 0x400, scoped, tag = 'input window, operand 8, single buffered']
    %14 = vsyncpa [#allocation3], 0
    %15 = vsyncpa [#allocation5], 0
    %16 = vsyncpa [#allocation8], 0
    %17 = vsyncpa [#allocation11], 0
    loop: start=0, step=1, limit=4
    $region2: #{forward.1} parent=1 // loop_pre_header
      _
    $region3: #{forward.1} parent=1 // loop_header
      %s19 = sphi 0, %s23
      %p20 = scmp.ge.s32.totalorder %s19, 4
      %s29 = sphi 0, %s31
      %s32 = sphi 0, %s29
      %s33 = sphi 0, %s32
      %s49 = sphi 0, %s33
      %s55 = sphi 0, %s57
      %s58 = sphi 0, %s55
      %s59 = sphi 0, %s58
      %s75 = sphi 0, %s59
      %s79 = sphi 0, %s79
      %s81 = sphi 0, %s79
      %s82 = sphi 0, %s81
      %s96 = sphi 0, %s82
      %s100 = sphi 0, %s100
      %s102 = sphi 0, %s100
      %s103 = sphi 0, %s102
      %s117 = sphi 0, %s103
      %s121 = sphi 0, %s121
      %s123 = sphi 0, %s121
      %s124 = sphi 0, %s123
      %s138 = sphi 0, %s124
      %s142 = sphi 0, %s142
      %s144 = sphi 0, %s142
      %s145 = sphi 0, %s144
      %s159 = sphi 0, %s145
      %s163 = sphi 0, %s163
      %s165 = sphi 0, %s163
      %s166 = sphi 0, %s165
      %s180 = sphi 0, %s166
      %s184 = sphi 0, %s184
      %s186 = sphi 0, %s184
      %s187 = sphi 0, %s186
      %s201 = sphi 0, %s187
      %s205 = sphi 0, %s205
      %s207 = sphi 0, %s205
      %s208 = sphi 0, %s207
      %s222 = sphi 0, %s208
      %s228 = sphi 0, %s230
      %s231 = sphi 0, %s228
      %s232 = sphi 0, %s231
      %s248 = sphi 0, %s232
    $region4: #{forward.1} parent=1 // loop_header_branch
      %22 = sbr.rel (%p20) target = $region8
    $region5: #{forward.1} parent=1 // loop_body
      %s24 = ssub.s32 %s19, 1
      %s25 = ssub.s32 %s19, 2
      %s26 = sadd.s32 %s19, 1
      %s27 = ssub.s32 %s19, %s26
      %p28 = scmp.eq.s32.totalorder %s27, 0
      %s30 = sadd.s32 %s29, 1
      %s31 = scalar_select %p28, %s29, %s30
      %p34 = pneg %p28
      %p35 = scmp.eq.s32.totalorder %s19, 1
      %p36 = por %p34, %p35
      %p37 = scmp.ne.s32.totalorder %s29, %s32
      %p38 = scmp.eq.s32.totalorder %s19, 0
      %p39 = por %p37, %p38
      %p40 = scmp.ne.s32.totalorder %s29, %s32
      %p41 = scmp.eq.s32.totalorder %s24, 1
      %p42 = por %p40, %p41
      %p43 = scmp.ne.s32.totalorder %s32, %s33
      %p44 = scmp.eq.s32.totalorder %s24, 0
      %p45 = por %p43, %p44
      %p46 = scmp.ne.s32.totalorder %s32, %s33
      %p47 = scmp.eq.s32.totalorder %s25, 1
      %p48 = por %p46, %p47
      %p50 = scmp.ne.s32.totalorder %s33, %s49
      %p51 = scmp.eq.s32.totalorder %s25, 0
      %p52 = por %p50, %p51
      %s53 = ssub.s32 %s19, %s26
      %p54 = scmp.eq.s32.totalorder %s53, 0
      %s56 = sadd.s32 %s55, 1
      %s57 = scalar_select %p54, %s55, %s56
      %p60 = pneg %p54
      %p61 = scmp.eq.s32.totalorder %s19, 1
      %p62 = por %p60, %p61
      %p63 = scmp.ne.s32.totalorder %s55, %s58
      %p64 = scmp.eq.s32.totalorder %s19, 0
      %p65 = por %p63, %p64
      %p66 = scmp.ne.s32.totalorder %s55, %s58
      %p67 = scmp.eq.s32.totalorder %s24, 1
      %p68 = por %p66, %p67
      %p69 = scmp.ne.s32.totalorder %s58, %s59
      %p70 = scmp.eq.s32.totalorder %s24, 0
      %p71 = por %p69, %p70
      %p72 = scmp.ne.s32.totalorder %s58, %s59
      %p73 = scmp.eq.s32.totalorder %s25, 1
      %p74 = por %p72, %p73
      %p76 = scmp.ne.s32.totalorder %s59, %s75
      %p77 = scmp.eq.s32.totalorder %s25, 0
      %p78 = por %p76, %p77
      %s80 = sadd.s32 %s79, 1
      %p83 = scmp.eq.s32.totalorder %s19, 1
      %p84 = scmp.ne.s32.totalorder %s79, %s81
      %p85 = scmp.eq.s32.totalorder %s19, 0
      %p86 = por %p84, %p85
      %p87 = scmp.ne.s32.totalorder %s79, %s81
      %p88 = scmp.eq.s32.totalorder %s24, 1
      %p89 = por %p87, %p88
      %p90 = scmp.ne.s32.totalorder %s81, %s82
      %p91 = scmp.eq.s32.totalorder %s24, 0
      %p92 = por %p90, %p91
      %p93 = scmp.ne.s32.totalorder %s81, %s82
      %p94 = scmp.eq.s32.totalorder %s25, 1
      %p95 = por %p93, %p94
      %p97 = scmp.ne.s32.totalorder %s82, %s96
      %p98 = scmp.eq.s32.totalorder %s25, 0
      %p99 = por %p97, %p98
      %s101 = sadd.s32 %s100, 1
      %p104 = scmp.eq.s32.totalorder %s19, 1
      %p105 = scmp.ne.s32.totalorder %s100, %s102
      %p106 = scmp.eq.s32.totalorder %s19, 0
      %p107 = por %p105, %p106
      %p108 = scmp.ne.s32.totalorder %s100, %s102
      %p109 = scmp.eq.s32.totalorder %s24, 1
      %p110 = por %p108, %p109
      %p111 = scmp.ne.s32.totalorder %s102, %s103
      %p112 = scmp.eq.s32.totalorder %s24, 0
      %p113 = por %p111, %p112
      %p114 = scmp.ne.s32.totalorder %s102, %s103
      %p115 = scmp.eq.s32.totalorder %s25, 1
      %p116 = por %p114, %p115
      %p118 = scmp.ne.s32.totalorder %s103, %s117
      %p119 = scmp.eq.s32.totalorder %s25, 0
      %p120 = por %p118, %p119
      %s122 = sadd.s32 %s121, 1
      %p125 = scmp.eq.s32.totalorder %s19, 1
      %p126 = scmp.ne.s32.totalorder %s121, %s123
      %p127 = scmp.eq.s32.totalorder %s19, 0
      %p128 = por %p126, %p127
      %p129 = scmp.ne.s32.totalorder %s121, %s123
      %p130 = scmp.eq.s32.totalorder %s24, 1
      %p131 = por %p129, %p130
      %p132 = scmp.ne.s32.totalorder %s123, %s124
      %p133 = scmp.eq.s32.totalorder %s24, 0
      %p134 = por %p132, %p133
      %p135 = scmp.ne.s32.totalorder %s123, %s124
      %p136 = scmp.eq.s32.totalorder %s25, 1
      %p137 = por %p135, %p136
      %p139 = scmp.ne.s32.totalorder %s124, %s138
      %p140 = scmp.eq.s32.totalorder %s25, 0
      %p141 = por %p139, %p140
      %s143 = sadd.s32 %s142, 1
      %p146 = scmp.eq.s32.totalorder %s19, 1
      %p147 = scmp.ne.s32.totalorder %s142, %s144
      %p148 = scmp.eq.s32.totalorder %s19, 0
      %p149 = por %p147, %p148
      %p150 = scmp.ne.s32.totalorder %s142, %s144
      %p151 = scmp.eq.s32.totalorder %s24, 1
      %p152 = por %p150, %p151
      %p153 = scmp.ne.s32.totalorder %s144, %s145
      %p154 = scmp.eq.s32.totalorder %s24, 0
      %p155 = por %p153, %p154
      %p156 = scmp.ne.s32.totalorder %s144, %s145
      %p157 = scmp.eq.s32.totalorder %s25, 1
      %p158 = por %p156, %p157
      %p160 = scmp.ne.s32.totalorder %s145, %s159
      %p161 = scmp.eq.s32.totalorder %s25, 0
      %p162 = por %p160, %p161
      %s164 = sadd.s32 %s163, 1
      %p167 = scmp.eq.s32.totalorder %s19, 1
      %p168 = scmp.ne.s32.totalorder %s163, %s165
      %p169 = scmp.eq.s32.totalorder %s19, 0
      %p170 = por %p168, %p169
      %p171 = scmp.ne.s32.totalorder %s163, %s165
      %p172 = scmp.eq.s32.totalorder %s24, 1
      %p173 = por %p171, %p172
      %p174 = scmp.ne.s32.totalorder %s165, %s166
      %p175 = scmp.eq.s32.totalorder %s24, 0
      %p176 = por %p174, %p175
      %p177 = scmp.ne.s32.totalorder %s165, %s166
      %p178 = scmp.eq.s32.totalorder %s25, 1
      %p179 = por %p177, %p178
      %p181 = scmp.ne.s32.totalorder %s166, %s180
      %p182 = scmp.eq.s32.totalorder %s25, 0
      %p183 = por %p181, %p182
      %s185 = sadd.s32 %s184, 1
      %p188 = scmp.eq.s32.totalorder %s19, 1
      %p189 = scmp.ne.s32.totalorder %s184, %s186
      %p190 = scmp.eq.s32.totalorder %s19, 0
      %p191 = por %p189, %p190
      %p192 = scmp.ne.s32.totalorder %s184, %s186
      %p193 = scmp.eq.s32.totalorder %s24, 1
      %p194 = por %p192, %p193
      %p195 = scmp.ne.s32.totalorder %s186, %s187
      %p196 = scmp.eq.s32.totalorder %s24, 0
      %p197 = por %p195, %p196
      %p198 = scmp.ne.s32.totalorder %s186, %s187
      %p199 = scmp.eq.s32.totalorder %s25, 1
      %p200 = por %p198, %p199
      %p202 = scmp.ne.s32.totalorder %s187, %s201
      %p203 = scmp.eq.s32.totalorder %s25, 0
      %p204 = por %p202, %p203
      %s206 = sadd.s32 %s205, 1
      %p209 = scmp.eq.s32.totalorder %s19, 1
      %p210 = scmp.ne.s32.totalorder %s205, %s207
      %p211 = scmp.eq.s32.totalorder %s19, 0
      %p212 = por %p210, %p211
      %p213 = scmp.ne.s32.totalorder %s205, %s207
      %p214 = scmp.eq.s32.totalorder %s24, 1
      %p215 = por %p213, %p214
      %p216 = scmp.ne.s32.totalorder %s207, %s208
      %p217 = scmp.eq.s32.totalorder %s24, 0
      %p218 = por %p216, %p217
      %p219 = scmp.ne.s32.totalorder %s207, %s208
      %p220 = scmp.eq.s32.totalorder %s25, 1
      %p221 = por %p219, %p220
      %p223 = scmp.ne.s32.totalorder %s208, %s222
      %p224 = scmp.eq.s32.totalorder %s25, 0
      %p225 = por %p223, %p224
      %s226 = ssub.s32 %s19, %s26
      %p227 = scmp.eq.s32.totalorder %s226, 0
      %s229 = sadd.s32 %s228, 1
      %s230 = scalar_select %p227, %s228, %s229
      %p233 = pneg %p227
      %p234 = scmp.eq.s32.totalorder %s19, 1
      %p235 = por %p233, %p234
      %p236 = scmp.ne.s32.totalorder %s228, %s231
      %p237 = scmp.eq.s32.totalorder %s19, 0
      %p238 = por %p236, %p237
      %p239 = scmp.ne.s32.totalorder %s228, %s231
      %p240 = scmp.eq.s32.totalorder %s24, 1
      %p241 = por %p239, %p240
      %p242 = scmp.ne.s32.totalorder %s231, %s232
      %p243 = scmp.eq.s32.totalorder %s24, 0
      %p244 = por %p242, %p243
      %p245 = scmp.ne.s32.totalorder %s231, %s232
      %p246 = scmp.eq.s32.totalorder %s25, 1
      %p247 = por %p245, %p246
      %p249 = scmp.ne.s32.totalorder %s232, %s248
      %p250 = scmp.eq.s32.totalorder %s25, 0
      %p251 = por %p249, %p250
      %p252 = scmp.le.s32.totalorder 1, %s19
      %p253 = scmp.lt.s32.totalorder %s19, 3
      %p254 = pnand %p252, %p253
      %p255 = pneg %p254
      // Predicated region
      $region9: #{forward.1} parent=5 // pred_check
        _
      $region10: #{forward.1} parent=5 // pred_check_branch
        %257 = sbr.rel (%p254) target = $region12
      $region11: #{forward.1} parent=5 // pred_region
        %s258 = ssub.s32 %s19, 1
        // Predicated region
        $region13: #{forward.1} parent=11 // pred_check
          %p259 = pneg %p92
        $region14: #{forward.1} parent=11 // pred_check_branch
          %261 = sbr.rel (%p259) target = $region16
        $region15: #{forward.1} parent=11 // pred_region
          %s263 = ssub.s32 6144, 6144
          %264 = vsyncadd [#allocation3], %s263
          %s265 = sshll.u32 [#allocation2], 4
          %s266 = int_to_ptr.vmem [resolvable:$true] %s265
          %271 = dma.hbm_to_vmem [thread:$0]  %s2, 6144, %s266, [#allocation3], 384, 384, 24
        $region16: #{forward.1} parent=11 // pred_fallthru
          _
        // Predicated region
        $region17: #{forward.1} parent=11 // pred_check
          %p272 = pneg %p113
        $region18: #{forward.1} parent=11 // pred_check_branch
          %274 = sbr.rel (%p272) target = $region20
        $region19: #{forward.1} parent=11 // pred_region
          %s276 = ssub.s32 36864, 36864
          %277 = vsyncadd [#allocation5], %s276
          %s278 = sshll.u32 [#allocation4], 4
          %s279 = int_to_ptr.vmem [resolvable:$true] %s278
          %284 = dma.hbm_to_vmem [thread:$0]  %s3, 36864, %s279, [#allocation5], 384, 384, 24
        $region20: #{forward.1} parent=11 // pred_fallthru
          _
        // Predicated region
        $region21: #{forward.1} parent=11 // pred_check
          %p285 = pneg %p134
        $region22: #{forward.1} parent=11 // pred_check_branch
          %287 = sbr.rel (%p285) target = $region24
        $region23: #{forward.1} parent=11 // pred_region
          %s289 = ssub.s32 96, 96
          %290 = vsyncadd [#allocation5], %s289
          %s292 = sshll.u32 [#allocation6], 4
          %s293 = int_to_ptr.vmem [resolvable:$true] %s292
          %295 = dma.hbm_to_vmem [thread:$0]  %s4, 96, %s293, [#allocation5]
        $region24: #{forward.1} parent=11 // pred_fallthru
          _
        // Predicated region
        $region25: #{forward.1} parent=11 // pred_check
          %p296 = pneg %p155
        $region26: #{forward.1} parent=11 // pred_check_branch
          %298 = sbr.rel (%p296) target = $region28
        $region27: #{forward.1} parent=11 // pred_region
          %s300 = ssub.s32 24576, 24576
          %301 = vsyncadd [#allocation8], %s300
          %s302 = sshll.u32 [#allocation7], 4
          %s303 = int_to_ptr.vmem [resolvable:$true] %s302
          %308 = dma.hbm_to_vmem [thread:$0]  %s5, 24576, %s303, [#allocation8], 256, 256, 16
        $region28: #{forward.1} parent=11 // pred_fallthru
          _
        // Predicated region
        $region29: #{forward.1} parent=11 // pred_check
          %p309 = pneg %p176
        $region30: #{forward.1} parent=11 // pred_check_branch
          %311 = sbr.rel (%p309) target = $region32
        $region31: #{forward.1} parent=11 // pred_region
          %s313 = ssub.s32 64, 64
          %314 = vsyncadd [#allocation8], %s313
          %s316 = sshll.u32 [#allocation9], 4
          %s317 = int_to_ptr.vmem [resolvable:$true] %s316
          %319 = dma.hbm_to_vmem [thread:$0]  %s6, 64, %s317, [#allocation8]
        $region32: #{forward.1} parent=11 // pred_fallthru
          _
        // Predicated region
        $region33: #{forward.1} parent=11 // pred_check
          %p320 = pneg %p197
        $region34: #{forward.1} parent=11 // pred_check_branch
          %322 = sbr.rel (%p320) target = $region36
        $region35: #{forward.1} parent=11 // pred_region
          %s324 = ssub.s32 4096, 4096
          %325 = vsyncadd [#allocation11], %s324
          %s326 = sshll.u32 [#allocation10], 4
          %s327 = int_to_ptr.vmem [resolvable:$true] %s326
          %332 = dma.hbm_to_vmem [thread:$0]  %s7, 4096, %s327, [#allocation11], 64, 64, 4
        $region36: #{forward.1} parent=11 // pred_fallthru
          _
        // Predicated region
        $region37: #{forward.1} parent=11 // pred_check
          %p333 = pneg %p218
        $region38: #{forward.1} parent=11 // pred_check_branch
          %335 = sbr.rel (%p333) target = $region40
        $region39: #{forward.1} parent=11 // pred_region
          %s337 = ssub.s32 16, 16
          %338 = vsyncadd [#allocation11], %s337
          %s340 = sshll.u32 [#allocation12], 4
          %s341 = int_to_ptr.vmem [resolvable:$true] %s340
          %343 = dma.hbm_to_vmem [thread:$0]  %s8, 16, %s341, [#allocation11]
        $region40: #{forward.1} parent=11 // pred_fallthru
          _
      $region12: #{forward.1} parent=5 // pred_fallthru
        _
      %p344 = scmp.lt.s32.totalorder %s19, 2
      // Predicated region
      $region41: #{forward.1} parent=5 // pred_check
        %p345 = pneg %p344
      $region42: #{forward.1} parent=5 // pred_check_branch
        %347 = sbr.rel (%p345) target = $region44
      $region43: #{forward.1} parent=5 // pred_region
        // Predicated region
        $region45: #{forward.1} parent=43 // pred_check
          %p348 = pneg %p39
        $region46: #{forward.1} parent=43 // pred_check_branch
          %350 = sbr.rel (%p348) target = $region48
        $region47: #{forward.1} parent=43 // pred_region
          %p351 = scmp.lt.s32.totalorder %s19, 1
          %s352 = scalar_select %p351, %s19, 1
          %s353 = smul.addr %s352, 8
          %s354 = scalar_lea.vmem %s0, %s353
        $region48: #{forward.1} parent=43 // pred_fallthru
          _
        // Predicated region
        $region49: #{forward.1} parent=43 // pred_check
          %p355 = pneg %p65
        $region50: #{forward.1} parent=43 // pred_check_branch
          %357 = sbr.rel (%p355) target = $region52
        $region51: #{forward.1} parent=43 // pred_region
          %p358 = scmp.lt.s32.totalorder %s19, 1
          %s359 = scalar_select %p358, %s19, 1
          %s360 = smul.addr %s359, 8
          %s361 = scalar_lea.vmem %s1, %s360
        $region52: #{forward.1} parent=43 // pred_fallthru
          _
      $region44: #{forward.1} parent=5 // pred_fallthru
        _
      %p362 = scmp.le.s32.totalorder 1, %s19
      %p363 = scmp.lt.s32.totalorder %s19, 3
      %p364 = pnand %p362, %p363
      %p365 = pneg %p364
      // Predicated region
      $region53: #{forward.1} parent=5 // pred_check
        _
      $region54: #{forward.1} parent=5 // pred_check_branch
        %367 = sbr.rel (%p364) target = $region56
      $region55: #{forward.1} parent=5 // pred_region
        %s368 = ssub.s32 %s19, 1
        // Predicated region
        $region57: #{forward.1} parent=55 // pred_check
          %p369 = pneg %p92
        $region58: #{forward.1} parent=55 // pred_check_branch
          %371 = sbr.rel (%p369) target = $region60
        $region59: #{forward.1} parent=55 // pred_region
          %372 = dma.done [#allocation3], 6144
        $region60: #{forward.1} parent=55 // pred_fallthru
          _
        // Predicated region
        $region61: #{forward.1} parent=55 // pred_check
          %p373 = pneg %p113
        $region62: #{forward.1} parent=55 // pred_check_branch
          %375 = sbr.rel (%p373) target = $region64
        $region63: #{forward.1} parent=55 // pred_region
          %376 = dma.done [#allocation5], 36864
        $region64: #{forward.1} parent=55 // pred_fallthru
          _
        // Predicated region
        $region65: #{forward.1} parent=55 // pred_check
          %p377 = pneg %p134
        $region66: #{forward.1} parent=55 // pred_check_branch
          %379 = sbr.rel (%p377) target = $region68
        $region67: #{forward.1} parent=55 // pred_region
          %380 = dma.done [#allocation5], 96
        $region68: #{forward.1} parent=55 // pred_fallthru
          _
        // Predicated region
        $region69: #{forward.1} parent=55 // pred_check
          %p381 = pneg %p155
        $region70: #{forward.1} parent=55 // pred_check_branch
          %383 = sbr.rel (%p381) target = $region72
        $region71: #{forward.1} parent=55 // pred_region
          %384 = dma.done [#allocation8], 24576
        $region72: #{forward.1} parent=55 // pred_fallthru
          _
        // Predicated region
        $region73: #{forward.1} parent=55 // pred_check
          %p385 = pneg %p176
        $region74: #{forward.1} parent=55 // pred_check_branch
          %387 = sbr.rel (%p385) target = $region76
        $region75: #{forward.1} parent=55 // pred_region
          %388 = dma.done [#allocation8], 64
        $region76: #{forward.1} parent=55 // pred_fallthru
          _
        // Predicated region
        $region77: #{forward.1} parent=55 // pred_check
          %p389 = pneg %p197
        $region78: #{forward.1} parent=55 // pred_check_branch
          %391 = sbr.rel (%p389) target = $region80
        $region79: #{forward.1} parent=55 // pred_region
          %392 = dma.done [#allocation11], 4096
        $region80: #{forward.1} parent=55 // pred_fallthru
          _
        // Predicated region
        $region81: #{forward.1} parent=55 // pred_check
          %p393 = pneg %p218
        $region82: #{forward.1} parent=55 // pred_check_branch
          %395 = sbr.rel (%p393) target = $region84
        $region83: #{forward.1} parent=55 // pred_region
          %396 = dma.done [#allocation11], 16
        $region84: #{forward.1} parent=55 // pred_fallthru
          _
        %p397 = scmp.lt.s32.totalorder %s24, 1
        %s398 = scalar_select %p397, %s24, 1
        %s399 = smul.addr %s398, 8
        %s400 = scalar_lea.vmem %s0, %s399
        %p401 = pneg %p45
        %p402 = pneg %p42
        %p403 = scmp.lt.s32.totalorder %s24, 1
        %s404 = scalar_select %p403, %s24, 1
        %s405 = smul.addr %s404, 8
        %s406 = scalar_lea.vmem %s1, %s405
        %p407 = pneg %p71
        %p408 = pneg %p68
        %p409 = pneg %p92
        %p410 = pneg %p89
        %p411 = pneg %p113
        %p412 = pneg %p110
        %p413 = pneg %p134
        %p414 = pneg %p131
        %p415 = pneg %p155
        %p416 = pneg %p152
        %p417 = pneg %p176
        %p418 = pneg %p173
        %p419 = pneg %p197
        %p420 = pneg %p194
        %p421 = pneg %p218
        %p422 = pneg %p215
        %p423 = pneg %p244
        %p424 = pneg %p241
        %p425 = scmp.lt.s32.totalorder %s24, 1
        %s426 = scalar_select %p425, %s24, 1
        %s427 = smul.addr %s426, 8
        %s428 = scalar_lea.vmem %s9, %s427
        %p429 = scmp.lt.s32.totalorder %s24, 1
        %s430 = scalar_select %p429, %s24, 1
        %s431 = smul.addr %s430, 8
        %s432 = scalar_lea.vmem %s0, %s431
        %p433 = scmp.lt.s32.totalorder %s24, 1
        %s434 = scalar_select %p433, %s24, 1
        %s435 = smul.addr %s434, 8
        %s436 = scalar_lea.vmem %s1, %s435
        %p437 = scmp.lt.s32.totalorder %s24, 1
        %s438 = scalar_select %p437, %s24, 1
        %s439 = smul.addr %s438, 8
        %s440 = scalar_lea.vmem %s9, %s439
        %v442 = vld [vmem:[%s432] sm:$0xff]
        %v443 = vld [vmem:[%s436] sm:$0xff]
        %vm444 = vcmask 130048
        %v445 = vsel %vm444, %v443, 0.0
        %446 = vadd.xlane.f32.xlu0 %v445
        %v447 = vpop.xlane.xlu0 %446
        %v448 = vmax.f32 %v447, 1.0
        %v449 = vrcp.pop %v448
        %v450 = vmul.f32 %v443, %v449
        %v451 = vlaneseq
        %v452 = vand.u32 %v451, 127
        %v453 = vlaneseq
        %v454 = vshrl.u32 %v453, 7
        %v455 = vsub.s32 0, %v454
        %v456 = vrot.slane %v442, %v455
        %458 = vbcast.lane.b32.xlu0 %v456, 256
        %v459 = vpop.permute.xlu0 %458
        %s461 = sor.u32 256, 8
        %462 = vbcast.lane.b32.xlu0 %v456, %s461
        %v463 = vpop.permute.xlu0 %462
        %v464 = vlaneseq
        %v465 = vshrl.u32 %v464, 7
        %v466 = vsub.s32 1, %v465
        %v467 = vrot.slane %v442, %v466
        %469 = vbcast.lane.b32.xlu0 %v467, 256
        %v470 = vpop.permute.xlu0 %469
        %s472 = sor.u32 256, 8
        %473 = vbcast.lane.b32.xlu0 %v467, %s472
        %v474 = vpop.permute.xlu0 %473
        %v475 = vlaneseq
        %v476 = vshrl.u32 %v475, 7
        %v477 = vsub.s32 2, %v476
        %v478 = vrot.slane %v442, %v477
        %480 = vbcast.lane.b32.xlu0 %v478, 256
        %v481 = vpop.permute.xlu0 %480
        %s483 = sor.u32 256, 8
        %484 = vbcast.lane.b32.xlu0 %v478, %s483
        %v485 = vpop.permute.xlu0 %484
        %v486 = vlaneseq
        %v487 = vshrl.u32 %v486, 7
        %v488 = vsub.s32 3, %v487
        %v489 = vrot.slane %v442, %v488
        %491 = vbcast.lane.b32.xlu0 %v489, 256
        %v492 = vpop.permute.xlu0 %491
        %s494 = sor.u32 256, 8
        %495 = vbcast.lane.b32.xlu0 %v489, %s494
        %v496 = vpop.permute.xlu0 %495
        %v497 = vlaneseq
        %v498 = vshrl.u32 %v497, 7
        %v499 = vsub.s32 4, %v498
        %v500 = vrot.slane %v442, %v499
        %502 = vbcast.lane.b32.xlu0 %v500, 256
        %v503 = vpop.permute.xlu0 %502
        %s505 = sor.u32 256, 8
        %506 = vbcast.lane.b32.xlu0 %v500, %s505
        %v507 = vpop.permute.xlu0 %506
        %v508 = vlaneseq
        %v509 = vshrl.u32 %v508, 7
        %v510 = vsub.s32 5, %v509
        %v511 = vrot.slane %v442, %v510
        %513 = vbcast.lane.b32.xlu0 %v511, 256
        %v514 = vpop.permute.xlu0 %513
        %s516 = sor.u32 256, 8
        %517 = vbcast.lane.b32.xlu0 %v511, %s516
        %v518 = vpop.permute.xlu0 %517
        %v519 = vlaneseq
        %v520 = vshrl.u32 %v519, 7
        %v521 = vsub.s32 6, %v520
        %v522 = vrot.slane %v442, %v521
        %524 = vbcast.lane.b32.xlu0 %v522, 256
        %v525 = vpop.permute.xlu0 %524
        %s527 = sor.u32 256, 8
        %528 = vbcast.lane.b32.xlu0 %v522, %s527
        %v529 = vpop.permute.xlu0 %528
        %v530 = vlaneseq
        %v531 = vshrl.u32 %v530, 7
        %v532 = vsub.s32 7, %v531
        %v533 = vrot.slane %v442, %v532
        %535 = vbcast.lane.b32.xlu0 %v533, 256
        %v536 = vpop.permute.xlu0 %535
        %s538 = sor.u32 256, 8
        %539 = vbcast.lane.b32.xlu0 %v533, %s538
        %v540 = vpop.permute.xlu0 %539
        %vm541 = vcmp.eq.s32.totalorder %v459, %v452
        %vm542 = vcmp.eq.s32.totalorder %v463, %v452
        %vm543 = vcmp.eq.s32.totalorder %v470, %v452
        %vm544 = vcmp.eq.s32.totalorder %v474, %v452
        %vm545 = vcmp.eq.s32.totalorder %v481, %v452
        %vm546 = vcmp.eq.s32.totalorder %v485, %v452
        %vm547 = vcmp.eq.s32.totalorder %v492, %v452
        %vm548 = vcmp.eq.s32.totalorder %v496, %v452
        %vm549 = vcmp.eq.s32.totalorder %v503, %v452
        %vm550 = vcmp.eq.s32.totalorder %v507, %v452
        %vm551 = vcmp.eq.s32.totalorder %v514, %v452
        %vm552 = vcmp.eq.s32.totalorder %v518, %v452
        %vm553 = vcmp.eq.s32.totalorder %v525, %v452
        %vm554 = vcmp.eq.s32.totalorder %v529, %v452
        %vm555 = vcmp.eq.s32.totalorder %v536, %v452
        %vm556 = vcmp.eq.s32.totalorder %v540, %v452
        %v557 = vlaneseq
        %v558 = vshrl.u32 %v557, 7
        %v559 = vsub.s32 0, %v558
        %v560 = vrot.slane %v450, %v559
        %562 = vbcast.lane.b32.xlu0 %v560, 256
        %v563 = vpop.permute.xlu0 %562
        %s565 = sor.u32 256, 8
        %566 = vbcast.lane.b32.xlu0 %v560, %s565
        %v567 = vpop.permute.xlu0 %566
        %v568 = vlaneseq
        %v569 = vshrl.u32 %v568, 7
        %v570 = vsub.s32 1, %v569
        %v571 = vrot.slane %v450, %v570
        %573 = vbcast.lane.b32.xlu0 %v571, 256
        %v574 = vpop.permute.xlu0 %573
        %s576 = sor.u32 256, 8
        %577 = vbcast.lane.b32.xlu0 %v571, %s576
        %v578 = vpop.permute.xlu0 %577
        %v579 = vlaneseq
        %v580 = vshrl.u32 %v579, 7
        %v581 = vsub.s32 2, %v580
        %v582 = vrot.slane %v450, %v581
        %584 = vbcast.lane.b32.xlu0 %v582, 256
        %v585 = vpop.permute.xlu0 %584
        %s587 = sor.u32 256, 8
        %588 = vbcast.lane.b32.xlu0 %v582, %s587
        %v589 = vpop.permute.xlu0 %588
        %v590 = vlaneseq
        %v591 = vshrl.u32 %v590, 7
        %v592 = vsub.s32 3, %v591
        %v593 = vrot.slane %v450, %v592
        %595 = vbcast.lane.b32.xlu0 %v593, 256
        %v596 = vpop.permute.xlu0 %595
        %s598 = sor.u32 256, 8
        %599 = vbcast.lane.b32.xlu0 %v593, %s598
        %v600 = vpop.permute.xlu0 %599
        %v601 = vlaneseq
        %v602 = vshrl.u32 %v601, 7
        %v603 = vsub.s32 4, %v602
        %v604 = vrot.slane %v450, %v603
        %606 = vbcast.lane.b32.xlu0 %v604, 256
        %v607 = vpop.permute.xlu0 %606
        %s609 = sor.u32 256, 8
        %610 = vbcast.lane.b32.xlu0 %v604, %s609
        %v611 = vpop.permute.xlu0 %610
        %v612 = vlaneseq
        %v613 = vshrl.u32 %v612, 7
        %v614 = vsub.s32 5, %v613
        %v615 = vrot.slane %v450, %v614
        %617 = vbcast.lane.b32.xlu0 %v615, 256
        %v618 = vpop.permute.xlu0 %617
        %s620 = sor.u32 256, 8
        %621 = vbcast.lane.b32.xlu0 %v615, %s620
        %v622 = vpop.permute.xlu0 %621
        %v623 = vlaneseq
        %v624 = vshrl.u32 %v623, 7
        %v625 = vsub.s32 6, %v624
        %v626 = vrot.slane %v450, %v625
        %628 = vbcast.lane.b32.xlu0 %v626, 256
        %v629 = vpop.permute.xlu0 %628
        %s631 = sor.u32 256, 8
        %632 = vbcast.lane.b32.xlu0 %v626, %s631
        %v633 = vpop.permute.xlu0 %632
        %v634 = vlaneseq
        %v635 = vshrl.u32 %v634, 7
        %v636 = vsub.s32 7, %v635
        %v637 = vrot.slane %v450, %v636
        %639 = vbcast.lane.b32.xlu0 %v637, 256
        %v640 = vpop.permute.xlu0 %639
        %s642 = sor.u32 256, 8
        %643 = vbcast.lane.b32.xlu0 %v637, %s642
        %v644 = vpop.permute.xlu0 %643
        %v645 = vsel %vm541, %v563, 0.0
        %v646 = vsel %vm542, %v567, 0.0
        %v647 = vsel %vm543, %v574, 0.0
        %v648 = vsel %vm544, %v578, 0.0
        %v649 = vsel %vm545, %v585, 0.0
        %v650 = vsel %vm546, %v589, 0.0
        %v651 = vsel %vm547, %v596, 0.0
        %v652 = vsel %vm548, %v600, 0.0
        %v653 = vsel %vm549, %v607, 0.0
        %v654 = vsel %vm550, %v611, 0.0
        %v655 = vsel %vm551, %v618, 0.0
        %v656 = vsel %vm552, %v622, 0.0
        %v657 = vsel %vm553, %v629, 0.0
        %v658 = vsel %vm554, %v633, 0.0
        %v659 = vsel %vm555, %v640, 0.0
        %v660 = vsel %vm556, %v644, 0.0
        %v661 = vadd.f32 %v645, %v646
        %v662 = vrot.slane %v661, 4
        %v663 = vadd.f32 %v661, %v662
        %v664 = vrot.slane %v663, 2
        %v665 = vadd.f32 %v663, %v664
        %v666 = vrot.slane %v665, 1
        %v667 = vadd.f32 %v665, %v666
        %v668 = vadd.f32 %v647, %v648
        %v669 = vrot.slane %v668, 4
        %v670 = vadd.f32 %v668, %v669
        %v671 = vrot.slane %v670, 2
        %v672 = vadd.f32 %v670, %v671
        %v673 = vrot.slane %v672, 1
        %v674 = vadd.f32 %v672, %v673
        %v675 = vadd.f32 %v649, %v650
        %v676 = vrot.slane %v675, 4
        %v677 = vadd.f32 %v675, %v676
        %v678 = vrot.slane %v677, 2
        %v679 = vadd.f32 %v677, %v678
        %v680 = vrot.slane %v679, 1
        %v681 = vadd.f32 %v679, %v680
        %v682 = vadd.f32 %v651, %v652
        %v683 = vrot.slane %v682, 4
        %v684 = vadd.f32 %v682, %v683
        %v685 = vrot.slane %v684, 2
        %v686 = vadd.f32 %v684, %v685
        %v687 = vrot.slane %v686, 1
        %v688 = vadd.f32 %v686, %v687
        %v689 = vadd.f32 %v653, %v654
        %v690 = vrot.slane %v689, 4
        %v691 = vadd.f32 %v689, %v690
        %v692 = vrot.slane %v691, 2
        %v693 = vadd.f32 %v691, %v692
        %v694 = vrot.slane %v693, 1
        %v695 = vadd.f32 %v693, %v694
        %v696 = vadd.f32 %v655, %v656
        %v697 = vrot.slane %v696, 4
        %v698 = vadd.f32 %v696, %v697
        %v699 = vrot.slane %v698, 2
        %v700 = vadd.f32 %v698, %v699
        %v701 = vrot.slane %v700, 1
        %v702 = vadd.f32 %v700, %v701
        %v703 = vadd.f32 %v657, %v658
        %v704 = vrot.slane %v703, 4
        %v705 = vadd.f32 %v703, %v704
        %v706 = vrot.slane %v705, 2
        %v707 = vadd.f32 %v705, %v706
        %v708 = vrot.slane %v707, 1
        %v709 = vadd.f32 %v707, %v708
        %v710 = vadd.f32 %v659, %v660
        %v711 = vrot.slane %v710, 4
        %v712 = vadd.f32 %v710, %v711
        %v713 = vrot.slane %v712, 2
        %v714 = vadd.f32 %v712, %v713
        %v715 = vrot.slane %v714, 1
        %v716 = vadd.f32 %v714, %v715
        %v717 = vpack.c.bf16 %v667, %v667
        %v718 = vpack.c.bf16 %v674, %v674
        %v719 = vpack.c.bf16 %v681, %v681
        %v720 = vpack.c.bf16 %v688, %v688
        %v721 = vpack.c.bf16 %v695, %v695
        %v722 = vpack.c.bf16 %v702, %v702
        %v723 = vpack.c.bf16 %v709, %v709
        %v724 = vpack.c.bf16 %v716, %v716
        %v725 = vld [vmem:[#allocation2] sm:$0xff]
        %v726 = vld [vmem:[#allocation2 + $0x8] sm:$0xff]
        %v727 = vld [vmem:[#allocation2 + $0x10] sm:$0xff]
        %v728 = vld [vmem:[#allocation2 + $0x18] sm:$0xff]
        %v729 = vld [vmem:[#allocation2 + $0x20] sm:$0xff]
        %v730 = vld [vmem:[#allocation2 + $0x28] sm:$0xff]
        %v731 = vld [vmem:[#allocation2 + $0x30] sm:$0xff]
        %v732 = vld [vmem:[#allocation2 + $0x38] sm:$0xff]
        %v733 = vld [vmem:[#allocation2 + $0x40] sm:$0xff]
        %v734 = vld [vmem:[#allocation2 + $0x48] sm:$0xff]
        %v735 = vld [vmem:[#allocation2 + $0x50] sm:$0xff]
        %v736 = vld [vmem:[#allocation2 + $0x58] sm:$0xff]
        %v737 = vld [vmem:[#allocation2 + $0x60] sm:$0xff]
        %v738 = vld [vmem:[#allocation2 + $0x68] sm:$0xff]
        %v739 = vld [vmem:[#allocation2 + $0x70] sm:$0xff]
        %v740 = vld [vmem:[#allocation2 + $0x78] sm:$0xff]
        %v741 = vld [vmem:[#allocation2 + $0x80] sm:$0xff]
        %v742 = vld [vmem:[#allocation2 + $0x88] sm:$0xff]
        %v743 = vld [vmem:[#allocation2 + $0x90] sm:$0xff]
        %v744 = vld [vmem:[#allocation2 + $0x98] sm:$0xff]
        %v745 = vld [vmem:[#allocation2 + $0xa0] sm:$0xff]
        %v746 = vld [vmem:[#allocation2 + $0xa8] sm:$0xff]
        %v747 = vld [vmem:[#allocation2 + $0xb0] sm:$0xff]
        %v748 = vld [vmem:[#allocation2 + $0xb8] sm:$0xff]
        %v749 = vld [vmem:[#allocation2 + $0xc0] sm:$0xff]
        %v750 = vld [vmem:[#allocation2 + $0xc8] sm:$0xff]
        %v751 = vld [vmem:[#allocation2 + $0xd0] sm:$0xff]
        %v752 = vld [vmem:[#allocation2 + $0xd8] sm:$0xff]
        %v753 = vld [vmem:[#allocation2 + $0xe0] sm:$0xff]
        %v754 = vld [vmem:[#allocation2 + $0xe8] sm:$0xff]
        %v755 = vld [vmem:[#allocation2 + $0xf0] sm:$0xff]
        %v756 = vld [vmem:[#allocation2 + $0xf8] sm:$0xff]
        %v757 = vld [vmem:[#allocation2 + $0x100] sm:$0xff]
        %v758 = vld [vmem:[#allocation2 + $0x108] sm:$0xff]
        %v759 = vld [vmem:[#allocation2 + $0x110] sm:$0xff]
        %v760 = vld [vmem:[#allocation2 + $0x118] sm:$0xff]
        %v761 = vld [vmem:[#allocation2 + $0x120] sm:$0xff]
        %v762 = vld [vmem:[#allocation2 + $0x128] sm:$0xff]
        %v763 = vld [vmem:[#allocation2 + $0x130] sm:$0xff]
        %v764 = vld [vmem:[#allocation2 + $0x138] sm:$0xff]
        %v765 = vld [vmem:[#allocation2 + $0x140] sm:$0xff]
        %v766 = vld [vmem:[#allocation2 + $0x148] sm:$0xff]
        %v767 = vld [vmem:[#allocation2 + $0x150] sm:$0xff]
        %v768 = vld [vmem:[#allocation2 + $0x158] sm:$0xff]
        %v769 = vld [vmem:[#allocation2 + $0x160] sm:$0xff]
        %v770 = vld [vmem:[#allocation2 + $0x168] sm:$0xff]
        %v771 = vld [vmem:[#allocation2 + $0x170] sm:$0xff]
        %v772 = vld [vmem:[#allocation2 + $0x178] sm:$0xff]
        %v781 = vunpack.c.l.b16 %v717
        %v782 = vunpack.c.l.b16 %v718
        %v783 = vunpack.c.l.b16 %v719
        %v784 = vunpack.c.l.b16 %v720
        %v785 = vunpack.c.l.b16 %v721
        %v786 = vunpack.c.l.b16 %v722
        %v787 = vunpack.c.l.b16 %v723
        %v788 = vunpack.c.l.b16 %v724
        %vm789 = vcmask 1041409
        %v790 = vsel %vm789, %v782, %v781
        %vm791 = vcmask 1042434
        %v792 = vsel %vm791, %v783, %v790
        %vm793 = vcmask 1043459
        %v794 = vsel %vm793, %v784, %v792
        %vm795 = vcmask 1044484
        %v796 = vsel %vm795, %v785, %v794
        %vm797 = vcmask 1045509
        %v798 = vsel %vm797, %v786, %v796
        %vm799 = vcmask 1046534
        %v800 = vsel %vm799, %v787, %v798
        %vm801 = vcmask 1047559
        %v802 = vsel %vm801, %v788, %v800
        %v803 = vpack.c.b16 %v802, %v802
        %v853 = vunpack.c.l.b16 %v725
        %v854 = vunpack.c.h.b16 %v725
        %v855 = vunpack.c.l.b16 %v726
        %v856 = vunpack.c.h.b16 %v726
        %v857 = vunpack.c.l.b16 %v727
        %v858 = vunpack.c.h.b16 %v727
        %v859 = vunpack.c.l.b16 %v728
        %v860 = vunpack.c.h.b16 %v728
        %v861 = vunpack.c.l.b16 %v729
        %v862 = vunpack.c.h.b16 %v729
        %v863 = vunpack.c.l.b16 %v730
        %v864 = vunpack.c.h.b16 %v730
        %v865 = vunpack.c.l.b16 %v731
        %v866 = vunpack.c.h.b16 %v731
        %v867 = vunpack.c.l.b16 %v732
        %v868 = vunpack.c.h.b16 %v732
        %v869 = vunpack.c.l.b16 %v733
        %v870 = vunpack.c.h.b16 %v733
        %v871 = vunpack.c.l.b16 %v734
        %v872 = vunpack.c.h.b16 %v734
        %v873 = vunpack.c.l.b16 %v735
        %v874 = vunpack.c.h.b16 %v735
        %v875 = vunpack.c.l.b16 %v736
        %v876 = vunpack.c.h.b16 %v736
        %v877 = vunpack.c.l.b16 %v737
        %v878 = vunpack.c.h.b16 %v737
        %v879 = vunpack.c.l.b16 %v738
        %v880 = vunpack.c.h.b16 %v738
        %v881 = vunpack.c.l.b16 %v739
        %v882 = vunpack.c.h.b16 %v739
        %v883 = vunpack.c.l.b16 %v740
        %v884 = vunpack.c.h.b16 %v740
        %v885 = vunpack.c.l.b16 %v741
        %v886 = vunpack.c.h.b16 %v741
        %v887 = vunpack.c.l.b16 %v742
        %v888 = vunpack.c.h.b16 %v742
        %v889 = vunpack.c.l.b16 %v743
        %v890 = vunpack.c.h.b16 %v743
        %v891 = vunpack.c.l.b16 %v744
        %v892 = vunpack.c.h.b16 %v744
        %v893 = vunpack.c.l.b16 %v745
        %v894 = vunpack.c.h.b16 %v745
        %v895 = vunpack.c.l.b16 %v746
        %v896 = vunpack.c.h.b16 %v746
        %v897 = vunpack.c.l.b16 %v747
        %v898 = vunpack.c.h.b16 %v747
        %v899 = vunpack.c.l.b16 %v748
        %v900 = vunpack.c.h.b16 %v748
        %v901 = vunpack.c.l.b16 %v749
        %v902 = vunpack.c.h.b16 %v749
        %v903 = vunpack.c.l.b16 %v750
        %v904 = vunpack.c.h.b16 %v750
        %v905 = vunpack.c.l.b16 %v751
        %v906 = vunpack.c.h.b16 %v751
        %v907 = vunpack.c.l.b16 %v752
        %v908 = vunpack.c.h.b16 %v752
        %v909 = vunpack.c.l.b16 %v753
        %v910 = vunpack.c.h.b16 %v753
        %v911 = vunpack.c.l.b16 %v754
        %v912 = vunpack.c.h.b16 %v754
        %v913 = vunpack.c.l.b16 %v755
        %v914 = vunpack.c.h.b16 %v755
        %v915 = vunpack.c.l.b16 %v756
        %v916 = vunpack.c.h.b16 %v756
        %v917 = vunpack.c.l.b16 %v757
        %v918 = vunpack.c.h.b16 %v757
        %v919 = vunpack.c.l.b16 %v758
        %v920 = vunpack.c.h.b16 %v758
        %v921 = vunpack.c.l.b16 %v759
        %v922 = vunpack.c.h.b16 %v759
        %v923 = vunpack.c.l.b16 %v760
        %v924 = vunpack.c.h.b16 %v760
        %v925 = vunpack.c.l.b16 %v761
        %v926 = vunpack.c.h.b16 %v761
        %v927 = vunpack.c.l.b16 %v762
        %v928 = vunpack.c.h.b16 %v762
        %v929 = vunpack.c.l.b16 %v763
        %v930 = vunpack.c.h.b16 %v763
        %v931 = vunpack.c.l.b16 %v764
        %v932 = vunpack.c.h.b16 %v764
        %v933 = vunpack.c.l.b16 %v765
        %v934 = vunpack.c.h.b16 %v765
        %v935 = vunpack.c.l.b16 %v766
        %v936 = vunpack.c.h.b16 %v766
        %v937 = vunpack.c.l.b16 %v767
        %v938 = vunpack.c.h.b16 %v767
        %v939 = vunpack.c.l.b16 %v768
        %v940 = vunpack.c.h.b16 %v768
        %v941 = vunpack.c.l.b16 %v769
        %v942 = vunpack.c.h.b16 %v769
        %v943 = vunpack.c.l.b16 %v770
        %v944 = vunpack.c.h.b16 %v770
        %v945 = vunpack.c.l.b16 %v771
        %v946 = vunpack.c.h.b16 %v771
        %v947 = vunpack.c.l.b16 %v772
        %v948 = vunpack.c.h.b16 %v772
        %v949 = vpack.c.b16 %v859, %v853
        %v950 = vpack.c.b16 %v860, %v854
        %v951 = vpack.c.b16 %v861, %v855
        %v952 = vpack.c.b16 %v862, %v856
        %v953 = vpack.c.b16 %v863, %v857
        %v954 = vpack.c.b16 %v864, %v858
        %v955 = vpack.c.b16 %v871, %v865
        %v956 = vpack.c.b16 %v872, %v866
        %v957 = vpack.c.b16 %v873, %v867
        %v958 = vpack.c.b16 %v874, %v868
        %v959 = vpack.c.b16 %v875, %v869
        %v960 = vpack.c.b16 %v876, %v870
        %v961 = vpack.c.b16 %v883, %v877
        %v962 = vpack.c.b16 %v884, %v878
        %v963 = vpack.c.b16 %v885, %v879
        %v964 = vpack.c.b16 %v886, %v880
        %v965 = vpack.c.b16 %v887, %v881
        %v966 = vpack.c.b16 %v888, %v882
        %v967 = vpack.c.b16 %v895, %v889
        %v968 = vpack.c.b16 %v896, %v890
        %v969 = vpack.c.b16 %v897, %v891
        %v970 = vpack.c.b16 %v898, %v892
        %v971 = vpack.c.b16 %v899, %v893
        %v972 = vpack.c.b16 %v900, %v894
        %v973 = vpack.c.b16 %v907, %v901
        %v974 = vpack.c.b16 %v908, %v902
        %v975 = vpack.c.b16 %v909, %v903
        %v976 = vpack.c.b16 %v910, %v904
        %v977 = vpack.c.b16 %v911, %v905
        %v978 = vpack.c.b16 %v912, %v906
        %v979 = vpack.c.b16 %v919, %v913
        %v980 = vpack.c.b16 %v920, %v914
        %v981 = vpack.c.b16 %v921, %v915
        %v982 = vpack.c.b16 %v922, %v916
        %v983 = vpack.c.b16 %v923, %v917
        %v984 = vpack.c.b16 %v924, %v918
        %v985 = vpack.c.b16 %v931, %v925
        %v986 = vpack.c.b16 %v932, %v926
        %v987 = vpack.c.b16 %v933, %v927
        %v988 = vpack.c.b16 %v934, %v928
        %v989 = vpack.c.b16 %v935, %v929
        %v990 = vpack.c.b16 %v936, %v930
        %v991 = vpack.c.b16 %v943, %v937
        %v992 = vpack.c.b16 %v944, %v938
        %v993 = vpack.c.b16 %v945, %v939
        %v994 = vpack.c.b16 %v946, %v940
        %v995 = vpack.c.b16 %v947, %v941
        %v996 = vpack.c.b16 %v948, %v942
        %1045 = vmatprep.subr.bf16.mxu0 %v992
        %1046 = vmatpush1.bf16.msra.mxu0 %v991
        %1047 = vmatprep.subr.bf16.mxu0 %v986
        %1048 = vmatpush1.bf16.msra.mxu0 %v985
        %1049 = vmatprep.subr.bf16.mxu0 %v980
        %1050 = vmatpush1.bf16.msra.mxu0 %v979
        %1051 = vmatprep.subr.bf16.mxu0 %v974
        %1052 = vmatpush1.bf16.msra.mxu0 %v973
        %1053 = vmatprep.subr.bf16.mxu0 %v968
        %1054 = vmatpush1.bf16.msra.mxu0 %v967
        %1055 = vmatprep.subr.bf16.mxu0 %v962
        %1056 = vmatpush1.bf16.msra.mxu0 %v961
        %1057 = vmatprep.subr.bf16.mxu0 %v956
        %1058 = vmatpush1.bf16.msra.mxu0 %v955
        %1059 = vmatprep.subr.bf16.mxu0 %v950
        %1060 = vmatpush1.bf16.msra.mxu0 %v949
        %1061 = vmatprep.subr.bf16.mxu0 0
        %1062 = vmatpush2.bf16.msra.mxu0 0
        %1063 = vmatprep.subr.bf16.mxu0 0
        %1064 = vmatpush2.bf16.msra.mxu0 0
        %1065 = vmatprep.subr.bf16.mxu0 0
        %1066 = vmatpush2.bf16.msra.mxu0 0
        %1067 = vmatprep.subr.bf16.mxu0 0
        %1068 = vmatpush2.bf16.msra.mxu0 0
        %1069 = vmatprep.subr.bf16.mxu0 0
        %1070 = vmatpush2.bf16.msra.mxu0 0
        %1071 = vmatprep.subr.bf16.mxu0 0
        %1072 = vmatpush2.bf16.msra.mxu0 0
        %1073 = vmatprep.subr.bf16.mxu0 0
        %1074 = vmatpush2.bf16.msra.mxu0 0
        %1075 = vmatprep.subr.bf16.mxu0 0
        %1076 = vmatpush2.bf16.msra.mxu0 0
        %1077 = vmatprep.mubr.bf16.mxu0 0
        %1078 = vmatmul.mubr.bf16.gmra.mxu0 %v803
        %v1079 = vpop.f32.mrf.mxu0
        %v1080 = vadd.f32 0.0, %v1079
        %v1081 = vpop.f32.mrf.mxu0
        %v1082 = vadd.f32 0.0, %v1081
        %v1083 = vpop.f32.mrf.mxu0
        %v1084 = vpop.f32.mrf.mxu0
        %1085 = vdwg.mxu0
        %1086 = vmatprep.subr.bf16.mxu0 %v994
        %1087 = vmatpush1.bf16.msra.mxu0 %v993
        %1088 = vmatprep.subr.bf16.mxu0 %v988
        %1089 = vmatpush1.bf16.msra.mxu0 %v987
        %1090 = vmatprep.subr.bf16.mxu0 %v982
        %1091 = vmatpush1.bf16.msra.mxu0 %v981
        %1092 = vmatprep.subr.bf16.mxu0 %v976
        %1093 = vmatpush1.bf16.msra.mxu0 %v975
        %1094 = vmatprep.subr.bf16.mxu0 %v970
        %1095 = vmatpush1.bf16.msra.mxu0 %v969
        %1096 = vmatprep.subr.bf16.mxu0 %v964
        %1097 = vmatpush1.bf16.msra.mxu0 %v963
        %1098 = vmatprep.subr.bf16.mxu0 %v958
        %1099 = vmatpush1.bf16.msra.mxu0 %v957
        %1100 = vmatprep.subr.bf16.mxu0 %v952
        %1101 = vmatpush1.bf16.msra.mxu0 %v951
        %1102 = vmatprep.subr.bf16.mxu0 0
        %1103 = vmatpush2.bf16.msra.mxu0 0
        %1104 = vmatprep.subr.bf16.mxu0 0
        %1105 = vmatpush2.bf16.msra.mxu0 0
        %1106 = vmatprep.subr.bf16.mxu0 0
        %1107 = vmatpush2.bf16.msra.mxu0 0
        %1108 = vmatprep.subr.bf16.mxu0 0
        %1109 = vmatpush2.bf16.msra.mxu0 0
        %1110 = vmatprep.subr.bf16.mxu0 0
        %1111 = vmatpush2.bf16.msra.mxu0 0
        %1112 = vmatprep.subr.bf16.mxu0 0
        %1113 = vmatpush2.bf16.msra.mxu0 0
        %1114 = vmatprep.subr.bf16.mxu0 0
        %1115 = vmatpush2.bf16.msra.mxu0 0
        %1116 = vmatprep.subr.bf16.mxu0 0
        %1117 = vmatpush2.bf16.msra.mxu0 0
        %1118 = vmatprep.mubr.bf16.mxu0 0
        %1119 = vmatmul.mubr.bf16.gmra.mxu0 %v803
        %v1120 = vpop.f32.mrf.mxu0
        %v1121 = vadd.f32 0.0, %v1120
        %v1122 = vpop.f32.mrf.mxu0
        %v1123 = vadd.f32 0.0, %v1122
        %v1124 = vpop.f32.mrf.mxu0
        %v1125 = vpop.f32.mrf.mxu0
        %1126 = vdwg.mxu0
        %1127 = vmatprep.subr.bf16.mxu0 %v996
        %1128 = vmatpush1.bf16.msra.mxu0 %v995
        %1129 = vmatprep.subr.bf16.mxu0 %v990
        %1130 = vmatpush1.bf16.msra.mxu0 %v989
        %1131 = vmatprep.subr.bf16.mxu0 %v984
        %1132 = vmatpush1.bf16.msra.mxu0 %v983
        %1133 = vmatprep.subr.bf16.mxu0 %v978
        %1134 = vmatpush1.bf16.msra.mxu0 %v977
        %1135 = vmatprep.subr.bf16.mxu0 %v972
        %1136 = vmatpush1.bf16.msra.mxu0 %v971
        %1137 = vmatprep.subr.bf16.mxu0 %v966
        %1138 = vmatpush1.bf16.msra.mxu0 %v965
        %1139 = vmatprep.subr.bf16.mxu0 %v960
        %1140 = vmatpush1.bf16.msra.mxu0 %v959
        %1141 = vmatprep.subr.bf16.mxu0 %v954
        %1142 = vmatpush1.bf16.msra.mxu0 %v953
        %1143 = vmatprep.subr.bf16.mxu0 0
        %1144 = vmatpush2.bf16.msra.mxu0 0
        %1145 = vmatprep.subr.bf16.mxu0 0
        %1146 = vmatpush2.bf16.msra.mxu0 0
        %1147 = vmatprep.subr.bf16.mxu0 0
        %1148 = vmatpush2.bf16.msra.mxu0 0
        %1149 = vmatprep.subr.bf16.mxu0 0
        %1150 = vmatpush2.bf16.msra.mxu0 0
        %1151 = vmatprep.subr.bf16.mxu0 0
        %1152 = vmatpush2.bf16.msra.mxu0 0
        %1153 = vmatprep.subr.bf16.mxu0 0
        %1154 = vmatpush2.bf16.msra.mxu0 0
        %1155 = vmatprep.subr.bf16.mxu0 0
        %1156 = vmatpush2.bf16.msra.mxu0 0
        %1157 = vmatprep.subr.bf16.mxu0 0
        %1158 = vmatpush2.bf16.msra.mxu0 0
        %1159 = vmatprep.mubr.bf16.mxu0 0
        %1160 = vmatmul.mubr.bf16.gmra.mxu0 %v803
        %v1161 = vpop.f32.mrf.mxu0
        %v1162 = vadd.f32 0.0, %v1161
        %v1163 = vpop.f32.mrf.mxu0
        %v1164 = vadd.f32 0.0, %v1163
        %v1165 = vpop.f32.mrf.mxu0
        %v1166 = vpop.f32.mrf.mxu0
        %1167 = vdwg.mxu0
        %v1168 = vpack.c.bf16 %v1080, %v1080
        %v1169 = vpack.c.bf16 %v1082, %v1082
        %v1170 = vpack.c.bf16 %v1121, %v1121
        %v1171 = vpack.c.bf16 %v1123, %v1123
        %v1172 = vpack.c.bf16 %v1162, %v1162
        %v1173 = vpack.c.bf16 %v1164, %v1164
        %v1174 = vld [vmem:[#allocation4] sm:$0xff]
        %v1175 = vld [vmem:[#allocation4 + $0x8] sm:$0xff]
        %v1176 = vld [vmem:[#allocation4 + $0x10] sm:$0xff]
        %v1177 = vld [vmem:[#allocation4 + $0x18] sm:$0xff]
        %v1178 = vld [vmem:[#allocation4 + $0x20] sm:$0xff]
        %v1179 = vld [vmem:[#allocation4 + $0x28] sm:$0xff]
        %v1180 = vld [vmem:[#allocation4 + $0x30] sm:$0xff]
        %v1181 = vld [vmem:[#allocation4 + $0x38] sm:$0xff]
        %v1182 = vld [vmem:[#allocation4 + $0x40] sm:$0xff]
        %v1183 = vld [vmem:[#allocation4 + $0x48] sm:$0xff]
        %v1184 = vld [vmem:[#allocation4 + $0x50] sm:$0xff]
        %v1185 = vld [vmem:[#allocation4 + $0x58] sm:$0xff]
        %v1186 = vld [vmem:[#allocation4 + $0x60] sm:$0xff]
        %v1187 = vld [vmem:[#allocation4 + $0x68] sm:$0xff]
        %v1188 = vld [vmem:[#allocation4 + $0x70] sm:$0xff]
        %v1189 = vld [vmem:[#allocation4 + $0x78] sm:$0xff]
        %v1190 = vld [vmem:[#allocation4 + $0x80] sm:$0xff]
        %v1191 = vld [vmem:[#allocation4 + $0x88] sm:$0xff]
        %v1192 = vld [vmem:[#allocation4 + $0x90] sm:$0xff]
        %v1193 = vld [vmem:[#allocation4 + $0x98] sm:$0xff]
        %v1194 = vld [vmem:[#allocation4 + $0xa0] sm:$0xff]
        %v1195 = vld [vmem:[#allocation4 + $0xa8] sm:$0xff]
        %v1196 = vld [vmem:[#allocation4 + $0xb0] sm:$0xff]
        %v1197 = vld [vmem:[#allocation4 + $0xb8] sm:$0xff]
        %v1198 = vld [vmem:[#allocation4 + $0xc0] sm:$0xff]
        %v1199 = vld [vmem:[#allocation4 + $0xc8] sm:$0xff]
        %v1200 = vld [vmem:[#allocation4 + $0xd0] sm:$0xff]
        %v1201 = vld [vmem:[#allocation4 + $0xd8] sm:$0xff]
        %v1202 = vld [vmem:[#allocation4 + $0xe0] sm:$0xff]
        %v1203 = vld [vmem:[#allocation4 + $0xe8] sm:$0xff]
        %v1204 = vld [vmem:[#allocation4 + $0xf0] sm:$0xff]
        %v1205 = vld [vmem:[#allocation4 + $0xf8] sm:$0xff]
        %v1206 = vld [vmem:[#allocation4 + $0x100] sm:$0xff]
        %v1207 = vld [vmem:[#allocation4 + $0x108] sm:$0xff]
        %v1208 = vld [vmem:[#allocation4 + $0x110] sm:$0xff]
        %v1209 = vld [vmem:[#allocation4 + $0x118] sm:$0xff]
        %v1210 = vld [vmem:[#allocation4 + $0x120] sm:$0xff]
        %v1211 = vld [vmem:[#allocation4 + $0x128] sm:$0xff]
        %v1212 = vld [vmem:[#allocation4 + $0x130] sm:$0xff]
        %v1213 = vld [vmem:[#allocation4 + $0x138] sm:$0xff]
        %v1214 = vld [vmem:[#allocation4 + $0x140] sm:$0xff]
        %v1215 = vld [vmem:[#allocation4 + $0x148] sm:$0xff]
        %v1216 = vld [vmem:[#allocation4 + $0x150] sm:$0xff]
        %v1217 = vld [vmem:[#allocation4 + $0x158] sm:$0xff]
        %v1218 = vld [vmem:[#allocation4 + $0x160] sm:$0xff]
        %v1219 = vld [vmem:[#allocation4 + $0x168] sm:$0xff]
        %v1220 = vld [vmem:[#allocation4 + $0x170] sm:$0xff]
        %v1221 = vld [vmem:[#allocation4 + $0x178] sm:$0xff]
        %v1222 = vld [vmem:[#allocation4 + $0x180] sm:$0xff]
        %v1223 = vld [vmem:[#allocation4 + $0x188] sm:$0xff]
        %v1224 = vld [vmem:[#allocation4 + $0x190] sm:$0xff]
        %v1225 = vld [vmem:[#allocation4 + $0x198] sm:$0xff]
        %v1226 = vld [vmem:[#allocation4 + $0x1a0] sm:$0xff]
        %v1227 = vld [vmem:[#allocation4 + $0x1a8] sm:$0xff]
        %v1228 = vld [vmem:[#allocation4 + $0x1b0] sm:$0xff]
        %v1229 = vld [vmem:[#allocation4 + $0x1b8] sm:$0xff]
        %v1230 = vld [vmem:[#allocation4 + $0x1c0] sm:$0xff]
        %v1231 = vld [vmem:[#allocation4 + $0x1c8] sm:$0xff]
        %v1232 = vld [vmem:[#allocation4 + $0x1d0] sm:$0xff]
        %v1233 = vld [vmem:[#allocation4 + $0x1d8] sm:$0xff]
        %v1234 = vld [vmem:[#allocation4 + $0x1e0] sm:$0xff]
        %v1235 = vld [vmem:[#allocation4 + $0x1e8] sm:$0xff]
        %v1236 = vld [vmem:[#allocation4 + $0x1f0] sm:$0xff]
        %v1237 = vld [vmem:[#allocation4 + $0x1f8] sm:$0xff]
        %v1238 = vld [vmem:[#allocation4 + $0x200] sm:$0xff]
        %v1239 = vld [vmem:[#allocation4 + $0x208] sm:$0xff]
        %v1240 = vld [vmem:[#allocation4 + $0x210] sm:$0xff]
        %v1241 = vld [vmem:[#allocation4 + $0x218] sm:$0xff]
        %v1242 = vld [vmem:[#allocation4 + $0x220] sm:$0xff]
        %v1243 = vld [vmem:[#allocation4 + $0x228] sm:$0xff]
        %v1244 = vld [vmem:[#allocation4 + $0x230] sm:$0xff]
        %v1245 = vld [vmem:[#allocation4 + $0x238] sm:$0xff]
        %v1246 = vld [vmem:[#allocation4 + $0x240] sm:$0xff]
        %v1247 = vld [vmem:[#allocation4 + $0x248] sm:$0xff]
        %v1248 = vld [vmem:[#allocation4 + $0x250] sm:$0xff]
        %v1249 = vld [vmem:[#allocation4 + $0x258] sm:$0xff]
        %v1250 = vld [vmem:[#allocation4 + $0x260] sm:$0xff]
        %v1251 = vld [vmem:[#allocation4 + $0x268] sm:$0xff]
        %v1252 = vld [vmem:[#allocation4 + $0x270] sm:$0xff]
        %v1253 = vld [vmem:[#allocation4 + $0x278] sm:$0xff]
        %v1254 = vld [vmem:[#allocation4 + $0x280] sm:$0xff]
        %v1255 = vld [vmem:[#allocation4 + $0x288] sm:$0xff]
        %v1256 = vld [vmem:[#allocation4 + $0x290] sm:$0xff]
        %v1257 = vld [vmem:[#allocation4 + $0x298] sm:$0xff]
        %v1258 = vld [vmem:[#allocation4 + $0x2a0] sm:$0xff]
        %v1259 = vld [vmem:[#allocation4 + $0x2a8] sm:$0xff]
        %v1260 = vld [vmem:[#allocation4 + $0x2b0] sm:$0xff]
        %v1261 = vld [vmem:[#allocation4 + $0x2b8] sm:$0xff]
        %v1262 = vld [vmem:[#allocation4 + $0x2c0] sm:$0xff]
        %v1263 = vld [vmem:[#allocation4 + $0x2c8] sm:$0xff]
        %v1264 = vld [vmem:[#allocation4 + $0x2d0] sm:$0xff]
        %v1265 = vld [vmem:[#allocation4 + $0x2d8] sm:$0xff]
        %v1266 = vld [vmem:[#allocation4 + $0x2e0] sm:$0xff]
        %v1267 = vld [vmem:[#allocation4 + $0x2e8] sm:$0xff]
        %v1268 = vld [vmem:[#allocation4 + $0x2f0] sm:$0xff]
        %v1269 = vld [vmem:[#allocation4 + $0x2f8] sm:$0xff]
        %v1270 = vld [vmem:[#allocation4 + $0x300] sm:$0xff]
        %v1271 = vld [vmem:[#allocation4 + $0x308] sm:$0xff]
        %v1272 = vld [vmem:[#allocation4 + $0x310] sm:$0xff]
        %v1273 = vld [vmem:[#allocation4 + $0x318] sm:$0xff]
        %v1274 = vld [vmem:[#allocation4 + $0x320] sm:$0xff]
        %v1275 = vld [vmem:[#allocation4 + $0x328] sm:$0xff]
        %v1276 = vld [vmem:[#allocation4 + $0x330] sm:$0xff]
        %v1277 = vld [vmem:[#allocation4 + $0x338] sm:$0xff]
        %v1278 = vld [vmem:[#allocation4 + $0x340] sm:$0xff]
        %v1279 = vld [vmem:[#allocation4 + $0x348] sm:$0xff]
        %v1280 = vld [vmem:[#allocation4 + $0x350] sm:$0xff]
        %v1281 = vld [vmem:[#allocation4 + $0x358] sm:$0xff]
        %v1282 = vld [vmem:[#allocation4 + $0x360] sm:$0xff]
        %v1283 = vld [vmem:[#allocation4 + $0x368] sm:$0xff]
        %v1284 = vld [vmem:[#allocation4 + $0x370] sm:$0xff]
        %v1285 = vld [vmem:[#allocation4 + $0x378] sm:$0xff]
        %v1286 = vld [vmem:[#allocation4 + $0x380] sm:$0xff]
        %v1287 = vld [vmem:[#allocation4 + $0x388] sm:$0xff]
        %v1288 = vld [vmem:[#allocation4 + $0x390] sm:$0xff]
        %v1289 = vld [vmem:[#allocation4 + $0x398] sm:$0xff]
        %v1290 = vld [vmem:[#allocation4 + $0x3a0] sm:$0xff]
        %v1291 = vld [vmem:[#allocation4 + $0x3a8] sm:$0xff]
        %v1292 = vld [vmem:[#allocation4 + $0x3b0] sm:$0xff]
        %v1293 = vld [vmem:[#allocation4 + $0x3b8] sm:$0xff]
        %v1294 = vld [vmem:[#allocation4 + $0x3c0] sm:$0xff]
        %v1295 = vld [vmem:[#allocation4 + $0x3c8] sm:$0xff]
        %v1296 = vld [vmem:[#allocation4 + $0x3d0] sm:$0xff]
        %v1297 = vld [vmem:[#allocation4 + $0x3d8] sm:$0xff]
        %v1298 = vld [vmem:[#allocation4 + $0x3e0] sm:$0xff]
        %v1299 = vld [vmem:[#allocation4 + $0x3e8] sm:$0xff]
        %v1300 = vld [vmem:[#allocation4 + $0x3f0] sm:$0xff]
        %v1301 = vld [vmem:[#allocation4 + $0x3f8] sm:$0xff]
        %v1302 = vld [vmem:[#allocation4 + $0x400] sm:$0xff]
        %v1303 = vld [vmem:[#allocation4 + $0x408] sm:$0xff]
        %v1304 = vld [vmem:[#allocation4 + $0x410] sm:$0xff]
        %v1305 = vld [vmem:[#allocation4 + $0x418] sm:$0xff]
        %v1306 = vld [vmem:[#allocation4 + $0x420] sm:$0xff]
        %v1307 = vld [vmem:[#allocation4 + $0x428] sm:$0xff]
        %v1308 = vld [vmem:[#allocation4 + $0x430] sm:$0xff]
        %v1309 = vld [vmem:[#allocation4 + $0x438] sm:$0xff]
        %v1310 = vld [vmem:[#allocation4 + $0x440] sm:$0xff]
        %v1311 = vld [vmem:[#allocation4 + $0x448] sm:$0xff]
        %v1312 = vld [vmem:[#allocation4 + $0x450] sm:$0xff]
        %v1313 = vld [vmem:[#allocation4 + $0x458] sm:$0xff]
        %v1314 = vld [vmem:[#allocation4 + $0x460] sm:$0xff]
        %v1315 = vld [vmem:[#allocation4 + $0x468] sm:$0xff]
        %v1316 = vld [vmem:[#allocation4 + $0x470] sm:$0xff]
        %v1317 = vld [vmem:[#allocation4 + $0x478] sm:$0xff]
        %v1318 = vld [vmem:[#allocation4 + $0x480] sm:$0xff]
        %v1319 = vld [vmem:[#allocation4 + $0x488] sm:$0xff]
        %v1320 = vld [vmem:[#allocation4 + $0x490] sm:$0xff]
        %v1321 = vld [vmem:[#allocation4 + $0x498] sm:$0xff]
        %v1322 = vld [vmem:[#allocation4 + $0x4a0] sm:$0xff]
        %v1323 = vld [vmem:[#allocation4 + $0x4a8] sm:$0xff]
        %v1324 = vld [vmem:[#allocation4 + $0x4b0] sm:$0xff]
        %v1325 = vld [vmem:[#allocation4 + $0x4b8] sm:$0xff]
        %v1326 = vld [vmem:[#allocation4 + $0x4c0] sm:$0xff]
        %v1327 = vld [vmem:[#allocation4 + $0x4c8] sm:$0xff]
        %v1328 = vld [vmem:[#allocation4 + $0x4d0] sm:$0xff]
        %v1329 = vld [vmem:[#allocation4 + $0x4d8] sm:$0xff]
        %v1330 = vld [vmem:[#allocation4 + $0x4e0] sm:$0xff]
        %v1331 = vld [vmem:[#allocation4 + $0x4e8] sm:$0xff]
        %v1332 = vld [vmem:[#allocation4 + $0x4f0] sm:$0xff]
        %v1333 = vld [vmem:[#allocation4 + $0x4f8] sm:$0xff]
        %v1334 = vld [vmem:[#allocation4 + $0x500] sm:$0xff]
        %v1335 = vld [vmem:[#allocation4 + $0x508] sm:$0xff]
        %v1336 = vld [vmem:[#allocation4 + $0x510] sm:$0xff]
        %v1337 = vld [vmem:[#allocation4 + $0x518] sm:$0xff]
        %v1338 = vld [vmem:[#allocation4 + $0x520] sm:$0xff]
        %v1339 = vld [vmem:[#allocation4 + $0x528] sm:$0xff]
        %v1340 = vld [vmem:[#allocation4 + $0x530] sm:$0xff]
        %v1341 = vld [vmem:[#allocation4 + $0x538] sm:$0xff]
        %v1342 = vld [vmem:[#allocation4 + $0x540] sm:$0xff]
        %v1343 = vld [vmem:[#allocation4 + $0x548] sm:$0xff]
        %v1344 = vld [vmem:[#allocation4 + $0x550] sm:$0xff]
        %v1345 = vld [vmem:[#allocation4 + $0x558] sm:$0xff]
        %v1346 = vld [vmem:[#allocation4 + $0x560] sm:$0xff]
        %v1347 = vld [vmem:[#allocation4 + $0x568] sm:$0xff]
        %v1348 = vld [vmem:[#allocation4 + $0x570] sm:$0xff]
        %v1349 = vld [vmem:[#allocation4 + $0x578] sm:$0xff]
        %v1350 = vld [vmem:[#allocation4 + $0x580] sm:$0xff]
        %v1351 = vld [vmem:[#allocation4 + $0x588] sm:$0xff]
        %v1352 = vld [vmem:[#allocation4 + $0x590] sm:$0xff]
        %v1353 = vld [vmem:[#allocation4 + $0x598] sm:$0xff]
        %v1354 = vld [vmem:[#allocation4 + $0x5a0] sm:$0xff]
        %v1355 = vld [vmem:[#allocation4 + $0x5a8] sm:$0xff]
        %v1356 = vld [vmem:[#allocation4 + $0x5b0] sm:$0xff]
        %v1357 = vld [vmem:[#allocation4 + $0x5b8] sm:$0xff]
        %v1358 = vld [vmem:[#allocation4 + $0x5c0] sm:$0xff]
        %v1359 = vld [vmem:[#allocation4 + $0x5c8] sm:$0xff]
        %v1360 = vld [vmem:[#allocation4 + $0x5d0] sm:$0xff]
        %v1361 = vld [vmem:[#allocation4 + $0x5d8] sm:$0xff]
        %v1362 = vld [vmem:[#allocation4 + $0x5e0] sm:$0xff]
        %v1363 = vld [vmem:[#allocation4 + $0x5e8] sm:$0xff]
        %v1364 = vld [vmem:[#allocation4 + $0x5f0] sm:$0xff]
        %v1365 = vld [vmem:[#allocation4 + $0x5f8] sm:$0xff]
        %v1366 = vld [vmem:[#allocation4 + $0x600] sm:$0xff]
        %v1367 = vld [vmem:[#allocation4 + $0x608] sm:$0xff]
        %v1368 = vld [vmem:[#allocation4 + $0x610] sm:$0xff]
        %v1369 = vld [vmem:[#allocation4 + $0x618] sm:$0xff]
        %v1370 = vld [vmem:[#allocation4 + $0x620] sm:$0xff]
        %v1371 = vld [vmem:[#allocation4 + $0x628] sm:$0xff]
        %v1372 = vld [vmem:[#allocation4 + $0x630] sm:$0xff]
        %v1373 = vld [vmem:[#allocation4 + $0x638] sm:$0xff]
        %v1374 = vld [vmem:[#allocation4 + $0x640] sm:$0xff]
        %v1375 = vld [vmem:[#allocation4 + $0x648] sm:$0xff]
        %v1376 = vld [vmem:[#allocation4 + $0x650] sm:$0xff]
        %v1377 = vld [vmem:[#allocation4 + $0x658] sm:$0xff]
        %v1378 = vld [vmem:[#allocation4 + $0x660] sm:$0xff]
        %v1379 = vld [vmem:[#allocation4 + $0x668] sm:$0xff]
        %v1380 = vld [vmem:[#allocation4 + $0x670] sm:$0xff]
        %v1381 = vld [vmem:[#allocation4 + $0x678] sm:$0xff]
        %v1382 = vld [vmem:[#allocation4 + $0x680] sm:$0xff]
        %v1383 = vld [vmem:[#allocation4 + $0x688] sm:$0xff]
        %v1384 = vld [vmem:[#allocation4 + $0x690] sm:$0xff]
        %v1385 = vld [vmem:[#allocation4 + $0x698] sm:$0xff]
        %v1386 = vld [vmem:[#allocation4 + $0x6a0] sm:$0xff]
        %v1387 = vld [vmem:[#allocation4 + $0x6a8] sm:$0xff]
        %v1388 = vld [vmem:[#allocation4 + $0x6b0] sm:$0xff]
        %v1389 = vld [vmem:[#allocation4 + $0x6b8] sm:$0xff]
        %v1390 = vld [vmem:[#allocation4 + $0x6c0] sm:$0xff]
        %v1391 = vld [vmem:[#allocation4 + $0x6c8] sm:$0xff]
        %v1392 = vld [vmem:[#allocation4 + $0x6d0] sm:$0xff]
        %v1393 = vld [vmem:[#allocation4 + $0x6d8] sm:$0xff]
        %v1394 = vld [vmem:[#allocation4 + $0x6e0] sm:$0xff]
        %v1395 = vld [vmem:[#allocation4 + $0x6e8] sm:$0xff]
        %v1396 = vld [vmem:[#allocation4 + $0x6f0] sm:$0xff]
        %v1397 = vld [vmem:[#allocation4 + $0x6f8] sm:$0xff]
        %v1398 = vld [vmem:[#allocation4 + $0x700] sm:$0xff]
        %v1399 = vld [vmem:[#allocation4 + $0x708] sm:$0xff]
        %v1400 = vld [vmem:[#allocation4 + $0x710] sm:$0xff]
        %v1401 = vld [vmem:[#allocation4 + $0x718] sm:$0xff]
        %v1402 = vld [vmem:[#allocation4 + $0x720] sm:$0xff]
        %v1403 = vld [vmem:[#allocation4 + $0x728] sm:$0xff]
        %v1404 = vld [vmem:[#allocation4 + $0x730] sm:$0xff]
        %v1405 = vld [vmem:[#allocation4 + $0x738] sm:$0xff]
        %v1406 = vld [vmem:[#allocation4 + $0x740] sm:$0xff]
        %v1407 = vld [vmem:[#allocation4 + $0x748] sm:$0xff]
        %v1408 = vld [vmem:[#allocation4 + $0x750] sm:$0xff]
        %v1409 = vld [vmem:[#allocation4 + $0x758] sm:$0xff]
        %v1410 = vld [vmem:[#allocation4 + $0x760] sm:$0xff]
        %v1411 = vld [vmem:[#allocation4 + $0x768] sm:$0xff]
        %v1412 = vld [vmem:[#allocation4 + $0x770] sm:$0xff]
        %v1413 = vld [vmem:[#allocation4 + $0x778] sm:$0xff]
        %v1414 = vld [vmem:[#allocation4 + $0x780] sm:$0xff]
        %v1415 = vld [vmem:[#allocation4 + $0x788] sm:$0xff]
        %v1416 = vld [vmem:[#allocation4 + $0x790] sm:$0xff]
        %v1417 = vld [vmem:[#allocation4 + $0x798] sm:$0xff]
        %v1418 = vld [vmem:[#allocation4 + $0x7a0] sm:$0xff]
        %v1419 = vld [vmem:[#allocation4 + $0x7a8] sm:$0xff]
        %v1420 = vld [vmem:[#allocation4 + $0x7b0] sm:$0xff]
        %v1421 = vld [vmem:[#allocation4 + $0x7b8] sm:$0xff]
        %v1422 = vld [vmem:[#allocation4 + $0x7c0] sm:$0xff]
        %v1423 = vld [vmem:[#allocation4 + $0x7c8] sm:$0xff]
        %v1424 = vld [vmem:[#allocation4 + $0x7d0] sm:$0xff]
        %v1425 = vld [vmem:[#allocation4 + $0x7d8] sm:$0xff]
        %v1426 = vld [vmem:[#allocation4 + $0x7e0] sm:$0xff]
        %v1427 = vld [vmem:[#allocation4 + $0x7e8] sm:$0xff]
        %v1428 = vld [vmem:[#allocation4 + $0x7f0] sm:$0xff]
        %v1429 = vld [vmem:[#allocation4 + $0x7f8] sm:$0xff]
        %v1430 = vld [vmem:[#allocation4 + $0x800] sm:$0xff]
        %v1431 = vld [vmem:[#allocation4 + $0x808] sm:$0xff]
        %v1432 = vld [vmem:[#allocation4 + $0x810] sm:$0xff]
        %v1433 = vld [vmem:[#allocation4 + $0x818] sm:$0xff]
        %v1434 = vld [vmem:[#allocation4 + $0x820] sm:$0xff]
        %v1435 = vld [vmem:[#allocation4 + $0x828] sm:$0xff]
        %v1436 = vld [vmem:[#allocation4 + $0x830] sm:$0xff]
        %v1437 = vld [vmem:[#allocation4 + $0x838] sm:$0xff]
        %v1438 = vld [vmem:[#allocation4 + $0x840] sm:$0xff]
        %v1439 = vld [vmem:[#allocation4 + $0x848] sm:$0xff]
        %v1440 = vld [vmem:[#allocation4 + $0x850] sm:$0xff]
        %v1441 = vld [vmem:[#allocation4 + $0x858] sm:$0xff]
        %v1442 = vld [vmem:[#allocation4 + $0x860] sm:$0xff]
        %v1443 = vld [vmem:[#allocation4 + $0x868] sm:$0xff]
        %v1444 = vld [vmem:[#allocation4 + $0x870] sm:$0xff]
        %v1445 = vld [vmem:[#allocation4 + $0x878] sm:$0xff]
        %v1446 = vld [vmem:[#allocation4 + $0x880] sm:$0xff]
        %v1447 = vld [vmem:[#allocation4 + $0x888] sm:$0xff]
        %v1448 = vld [vmem:[#allocation4 + $0x890] sm:$0xff]
        %v1449 = vld [vmem:[#allocation4 + $0x898] sm:$0xff]
        %v1450 = vld [vmem:[#allocation4 + $0x8a0] sm:$0xff]
        %v1451 = vld [vmem:[#allocation4 + $0x8a8] sm:$0xff]
        %v1452 = vld [vmem:[#allocation4 + $0x8b0] sm:$0xff]
        %v1453 = vld [vmem:[#allocation4 + $0x8b8] sm:$0xff]
        %v1454 = vld [vmem:[#allocation4 + $0x8c0] sm:$0xff]
        %v1455 = vld [vmem:[#allocation4 + $0x8c8] sm:$0xff]
        %v1456 = vld [vmem:[#allocation4 + $0x8d0] sm:$0xff]
        %v1457 = vld [vmem:[#allocation4 + $0x8d8] sm:$0xff]
        %v1458 = vld [vmem:[#allocation4 + $0x8e0] sm:$0xff]
        %v1459 = vld [vmem:[#allocation4 + $0x8e8] sm:$0xff]
        %v1460 = vld [vmem:[#allocation4 + $0x8f0] sm:$0xff]
        %v1461 = vld [vmem:[#allocation4 + $0x8f8] sm:$0xff]
        %v1462 = vld [vmem:[#allocation6] sm:$0x3f]
        %v1464 = vlaneseq
        %v1465 = vshrl.u32 %v1464, 7
        %v1466 = vsub.s32 0, %v1465
        %v1467 = vrot.slane %v1462, %v1466
        %v1468 = vlaneseq
        %v1469 = vshrl.u32 %v1468, 7
        %v1470 = vsub.s32 1, %v1469
        %v1471 = vrot.slane %v1462, %v1470
        %v1472 = vlaneseq
        %v1473 = vshrl.u32 %v1472, 7
        %v1474 = vsub.s32 2, %v1473
        %v1475 = vrot.slane %v1462, %v1474
        %v1476 = vlaneseq
        %v1477 = vshrl.u32 %v1476, 7
        %v1478 = vsub.s32 3, %v1477
        %v1479 = vrot.slane %v1462, %v1478
        %v1480 = vlaneseq
        %v1481 = vshrl.u32 %v1480, 7
        %v1482 = vsub.s32 4, %v1481
        %v1483 = vrot.slane %v1462, %v1482
        %v1484 = vlaneseq
        %v1485 = vshrl.u32 %v1484, 7
        %v1486 = vsub.s32 5, %v1485
        %v1487 = vrot.slane %v1462, %v1486
        %v1782 = vunpack.c.l.b16 %v1174
        %v1783 = vunpack.c.h.b16 %v1174
        %v1784 = vunpack.c.l.b16 %v1175
        %v1785 = vunpack.c.h.b16 %v1175
        %v1786 = vunpack.c.l.b16 %v1176
        %v1787 = vunpack.c.h.b16 %v1176
        %v1788 = vunpack.c.l.b16 %v1177
        %v1789 = vunpack.c.h.b16 %v1177
        %v1790 = vunpack.c.l.b16 %v1178
        %v1791 = vunpack.c.h.b16 %v1178
        %v1792 = vunpack.c.l.b16 %v1179
        %v1793 = vunpack.c.h.b16 %v1179
        %v1794 = vunpack.c.l.b16 %v1180
        %v1795 = vunpack.c.h.b16 %v1180
        %v1796 = vunpack.c.l.b16 %v1181
        %v1797 = vunpack.c.h.b16 %v1181
        %v1798 = vunpack.c.l.b16 %v1182
        %v1799 = vunpack.c.h.b16 %v1182
        %v1800 = vunpack.c.l.b16 %v1183
        %v1801 = vunpack.c.h.b16 %v1183
        %v1802 = vunpack.c.l.b16 %v1184
        %v1803 = vunpack.c.h.b16 %v1184
        %v1804 = vunpack.c.l.b16 %v1185
        %v1805 = vunpack.c.h.b16 %v1185
        %v1806 = vunpack.c.l.b16 %v1186
        %v1807 = vunpack.c.h.b16 %v1186
        %v1808 = vunpack.c.l.b16 %v1187
        %v1809 = vunpack.c.h.b16 %v1187
        %v1810 = vunpack.c.l.b16 %v1188
        %v1811 = vunpack.c.h.b16 %v1188
        %v1812 = vunpack.c.l.b16 %v1189
        %v1813 = vunpack.c.h.b16 %v1189
        %v1814 = vunpack.c.l.b16 %v1190
        %v1815 = vunpack.c.h.b16 %v1190
        %v1816 = vunpack.c.l.b16 %v1191
        %v1817 = vunpack.c.h.b16 %v1191
        %v1818 = vunpack.c.l.b16 %v1192
        %v1819 = vunpack.c.h.b16 %v1192
        %v1820 = vunpack.c.l.b16 %v1193
        %v1821 = vunpack.c.h.b16 %v1193
        %v1822 = vunpack.c.l.b16 %v1194
        %v1823 = vunpack.c.h.b16 %v1194
        %v1824 = vunpack.c.l.b16 %v1195
        %v1825 = vunpack.c.h.b16 %v1195
        %v1826 = vunpack.c.l.b16 %v1196
        %v1827 = vunpack.c.h.b16 %v1196
        %v1828 = vunpack.c.l.b16 %v1197
        %v1829 = vunpack.c.h.b16 %v1197
        %v1830 = vunpack.c.l.b16 %v1198
        %v1831 = vunpack.c.h.b16 %v1198
        %v1832 = vunpack.c.l.b16 %v1199
        %v1833 = vunpack.c.h.b16 %v1199
        %v1834 = vunpack.c.l.b16 %v1200
        %v1835 = vunpack.c.h.b16 %v1200
        %v1836 = vunpack.c.l.b16 %v1201
        %v1837 = vunpack.c.h.b16 %v1201
        %v1838 = vunpack.c.l.b16 %v1202
        %v1839 = vunpack.c.h.b16 %v1202
        %v1840 = vunpack.c.l.b16 %v1203
        %v1841 = vunpack.c.h.b16 %v1203
        %v1842 = vunpack.c.l.b16 %v1204
        %v1843 = vunpack.c.h.b16 %v1204
        %v1844 = vunpack.c.l.b16 %v1205
        %v1845 = vunpack.c.h.b16 %v1205
        %v1846 = vunpack.c.l.b16 %v1206
        %v1847 = vunpack.c.h.b16 %v1206
        %v1848 = vunpack.c.l.b16 %v1207
        %v1849 = vunpack.c.h.b16 %v1207
        %v1850 = vunpack.c.l.b16 %v1208
        %v1851 = vunpack.c.h.b16 %v1208
        %v1852 = vunpack.c.l.b16 %v1209
        %v1853 = vunpack.c.h.b16 %v1209
        %v1854 = vunpack.c.l.b16 %v1210
        %v1855 = vunpack.c.h.b16 %v1210
        %v1856 = vunpack.c.l.b16 %v1211
        %v1857 = vunpack.c.h.b16 %v1211
        %v1858 = vunpack.c.l.b16 %v1212
        %v1859 = vunpack.c.h.b16 %v1212
        %v1860 = vunpack.c.l.b16 %v1213
        %v1861 = vunpack.c.h.b16 %v1213
        %v1862 = vunpack.c.l.b16 %v1214
        %v1863 = vunpack.c.h.b16 %v1214
        %v1864 = vunpack.c.l.b16 %v1215
        %v1865 = vunpack.c.h.b16 %v1215
        %v1866 = vunpack.c.l.b16 %v1216
        %v1867 = vunpack.c.h.b16 %v1216
        %v1868 = vunpack.c.l.b16 %v1217
        %v1869 = vunpack.c.h.b16 %v1217
        %v1870 = vunpack.c.l.b16 %v1218
        %v1871 = vunpack.c.h.b16 %v1218
        %v1872 = vunpack.c.l.b16 %v1219
        %v1873 = vunpack.c.h.b16 %v1219
        %v1874 = vunpack.c.l.b16 %v1220
        %v1875 = vunpack.c.h.b16 %v1220
        %v1876 = vunpack.c.l.b16 %v1221
        %v1877 = vunpack.c.h.b16 %v1221
        %v1878 = vunpack.c.l.b16 %v1222
        %v1879 = vunpack.c.h.b16 %v1222
        %v1880 = vunpack.c.l.b16 %v1223
        %v1881 = vunpack.c.h.b16 %v1223
        %v1882 = vunpack.c.l.b16 %v1224
        %v1883 = vunpack.c.h.b16 %v1224
        %v1884 = vunpack.c.l.b16 %v1225
        %v1885 = vunpack.c.h.b16 %v1225
        %v1886 = vunpack.c.l.b16 %v1226
        %v1887 = vunpack.c.h.b16 %v1226
        %v1888 = vunpack.c.l.b16 %v1227
        %v1889 = vunpack.c.h.b16 %v1227
        %v1890 = vunpack.c.l.b16 %v1228
        %v1891 = vunpack.c.h.b16 %v1228
        %v1892 = vunpack.c.l.b16 %v1229
        %v1893 = vunpack.c.h.b16 %v1229
        %v1894 = vunpack.c.l.b16 %v1230
        %v1895 = vunpack.c.h.b16 %v1230
        %v1896 = vunpack.c.l.b16 %v1231
        %v1897 = vunpack.c.h.b16 %v1231
        %v1898 = vunpack.c.l.b16 %v1232
        %v1899 = vunpack.c.h.b16 %v1232
        %v1900 = vunpack.c.l.b16 %v1233
        %v1901 = vunpack.c.h.b16 %v1233
        %v1902 = vunpack.c.l.b16 %v1234
        %v1903 = vunpack.c.h.b16 %v1234
        %v1904 = vunpack.c.l.b16 %v1235
        %v1905 = vunpack.c.h.b16 %v1235
        %v1906 = vunpack.c.l.b16 %v1236
        %v1907 = vunpack.c.h.b16 %v1236
        %v1908 = vunpack.c.l.b16 %v1237
        %v1909 = vunpack.c.h.b16 %v1237
        %v1910 = vunpack.c.l.b16 %v1238
        %v1911 = vunpack.c.h.b16 %v1238
        %v1912 = vunpack.c.l.b16 %v1239
        %v1913 = vunpack.c.h.b16 %v1239
        %v1914 = vunpack.c.l.b16 %v1240
        %v1915 = vunpack.c.h.b16 %v1240
        %v1916 = vunpack.c.l.b16 %v1241
        %v1917 = vunpack.c.h.b16 %v1241
        %v1918 = vunpack.c.l.b16 %v1242
        %v1919 = vunpack.c.h.b16 %v1242
        %v1920 = vunpack.c.l.b16 %v1243
        %v1921 = vunpack.c.h.b16 %v1243
        %v1922 = vunpack.c.l.b16 %v1244
        %v1923 = vunpack.c.h.b16 %v1244
        %v1924 = vunpack.c.l.b16 %v1245
        %v1925 = vunpack.c.h.b16 %v1245
        %v1926 = vunpack.c.l.b16 %v1246
        %v1927 = vunpack.c.h.b16 %v1246
        %v1928 = vunpack.c.l.b16 %v1247
        %v1929 = vunpack.c.h.b16 %v1247
        %v1930 = vunpack.c.l.b16 %v1248
        %v1931 = vunpack.c.h.b16 %v1248
        %v1932 = vunpack.c.l.b16 %v1249
        %v1933 = vunpack.c.h.b16 %v1249
        %v1934 = vunpack.c.l.b16 %v1250
        %v1935 = vunpack.c.h.b16 %v1250
        %v1936 = vunpack.c.l.b16 %v1251
        %v1937 = vunpack.c.h.b16 %v1251
        %v1938 = vunpack.c.l.b16 %v1252
        %v1939 = vunpack.c.h.b16 %v1252
        %v1940 = vunpack.c.l.b16 %v1253
        %v1941 = vunpack.c.h.b16 %v1253
        %v1942 = vunpack.c.l.b16 %v1254
        %v1943 = vunpack.c.h.b16 %v1254
        %v1944 = vunpack.c.l.b16 %v1255
        %v1945 = vunpack.c.h.b16 %v1255
        %v1946 = vunpack.c.l.b16 %v1256
        %v1947 = vunpack.c.h.b16 %v1256
        %v1948 = vunpack.c.l.b16 %v1257
        %v1949 = vunpack.c.h.b16 %v1257
        %v1950 = vunpack.c.l.b16 %v1258
        %v1951 = vunpack.c.h.b16 %v1258
        %v1952 = vunpack.c.l.b16 %v1259
        %v1953 = vunpack.c.h.b16 %v1259
        %v1954 = vunpack.c.l.b16 %v1260
        %v1955 = vunpack.c.h.b16 %v1260
        %v1956 = vunpack.c.l.b16 %v1261
        %v1957 = vunpack.c.h.b16 %v1261
        %v1958 = vunpack.c.l.b16 %v1262
        %v1959 = vunpack.c.h.b16 %v1262
        %v1960 = vunpack.c.l.b16 %v1263
        %v1961 = vunpack.c.h.b16 %v1263
        %v1962 = vunpack.c.l.b16 %v1264
        %v1963 = vunpack.c.h.b16 %v1264
        %v1964 = vunpack.c.l.b16 %v1265
        %v1965 = vunpack.c.h.b16 %v1265
        %v1966 = vunpack.c.l.b16 %v1266
        %v1967 = vunpack.c.h.b16 %v1266
        %v1968 = vunpack.c.l.b16 %v1267
        %v1969 = vunpack.c.h.b16 %v1267
        %v1970 = vunpack.c.l.b16 %v1268
        %v1971 = vunpack.c.h.b16 %v1268
        %v1972 = vunpack.c.l.b16 %v1269
        %v1973 = vunpack.c.h.b16 %v1269
        %v1974 = vunpack.c.l.b16 %v1270
        %v1975 = vunpack.c.h.b16 %v1270
        %v1976 = vunpack.c.l.b16 %v1271
        %v1977 = vunpack.c.h.b16 %v1271
        %v1978 = vunpack.c.l.b16 %v1272
        %v1979 = vunpack.c.h.b16 %v1272
        %v1980 = vunpack.c.l.b16 %v1273
        %v1981 = vunpack.c.h.b16 %v1273
        %v1982 = vunpack.c.l.b16 %v1274
        %v1983 = vunpack.c.h.b16 %v1274
        %v1984 = vunpack.c.l.b16 %v1275
        %v1985 = vunpack.c.h.b16 %v1275
        %v1986 = vunpack.c.l.b16 %v1276
        %v1987 = vunpack.c.h.b16 %v1276
        %v1988 = vunpack.c.l.b16 %v1277
        %v1989 = vunpack.c.h.b16 %v1277
        %v1990 = vunpack.c.l.b16 %v1278
        %v1991 = vunpack.c.h.b16 %v1278
        %v1992 = vunpack.c.l.b16 %v1279
        %v1993 = vunpack.c.h.b16 %v1279
        %v1994 = vunpack.c.l.b16 %v1280
        %v1995 = vunpack.c.h.b16 %v1280
        %v1996 = vunpack.c.l.b16 %v1281
        %v1997 = vunpack.c.h.b16 %v1281
        %v1998 = vunpack.c.l.b16 %v1282
        %v1999 = vunpack.c.h.b16 %v1282
        %v2000 = vunpack.c.l.b16 %v1283
        %v2001 = vunpack.c.h.b16 %v1283
        %v2002 = vunpack.c.l.b16 %v1284
        %v2003 = vunpack.c.h.b16 %v1284
        %v2004 = vunpack.c.l.b16 %v1285
        %v2005 = vunpack.c.h.b16 %v1285
        %v2006 = vunpack.c.l.b16 %v1286
        %v2007 = vunpack.c.h.b16 %v1286
        %v2008 = vunpack.c.l.b16 %v1287
        %v2009 = vunpack.c.h.b16 %v1287
        %v2010 = vunpack.c.l.b16 %v1288
        %v2011 = vunpack.c.h.b16 %v1288
        %v2012 = vunpack.c.l.b16 %v1289
        %v2013 = vunpack.c.h.b16 %v1289
        %v2014 = vunpack.c.l.b16 %v1290
        %v2015 = vunpack.c.h.b16 %v1290
        %v2016 = vunpack.c.l.b16 %v1291
        %v2017 = vunpack.c.h.b16 %v1291
        %v2018 = vunpack.c.l.b16 %v1292
        %v2019 = vunpack.c.h.b16 %v1292
        %v2020 = vunpack.c.l.b16 %v1293
        %v2021 = vunpack.c.h.b16 %v1293
        %v2022 = vunpack.c.l.b16 %v1294
        %v2023 = vunpack.c.h.b16 %v1294
        %v2024 = vunpack.c.l.b16 %v1295
        %v2025 = vunpack.c.h.b16 %v1295
        %v2026 = vunpack.c.l.b16 %v1296
        %v2027 = vunpack.c.h.b16 %v1296
        %v2028 = vunpack.c.l.b16 %v1297
        %v2029 = vunpack.c.h.b16 %v1297
        %v2030 = vunpack.c.l.b16 %v1298
        %v2031 = vunpack.c.h.b16 %v1298
        %v2032 = vunpack.c.l.b16 %v1299
        %v2033 = vunpack.c.h.b16 %v1299
        %v2034 = vunpack.c.l.b16 %v1300
        %v2035 = vunpack.c.h.b16 %v1300
        %v2036 = vunpack.c.l.b16 %v1301
        %v2037 = vunpack.c.h.b16 %v1301
        %v2038 = vunpack.c.l.b16 %v1302
        %v2039 = vunpack.c.h.b16 %v1302
        %v2040 = vunpack.c.l.b16 %v1303
        %v2041 = vunpack.c.h.b16 %v1303
        %v2042 = vunpack.c.l.b16 %v1304
        %v2043 = vunpack.c.h.b16 %v1304
        %v2044 = vunpack.c.l.b16 %v1305
        %v2045 = vunpack.c.h.b16 %v1305
        %v2046 = vunpack.c.l.b16 %v1306
        %v2047 = vunpack.c.h.b16 %v1306
        %v2048 = vunpack.c.l.b16 %v1307
        %v2049 = vunpack.c.h.b16 %v1307
        %v2050 = vunpack.c.l.b16 %v1308
        %v2051 = vunpack.c.h.b16 %v1308
        %v2052 = vunpack.c.l.b16 %v1309
        %v2053 = vunpack.c.h.b16 %v1309
        %v2054 = vunpack.c.l.b16 %v1310
        %v2055 = vunpack.c.h.b16 %v1310
        %v2056 = vunpack.c.l.b16 %v1311
        %v2057 = vunpack.c.h.b16 %v1311
        %v2058 = vunpack.c.l.b16 %v1312
        %v2059 = vunpack.c.h.b16 %v1312
        %v2060 = vunpack.c.l.b16 %v1313
        %v2061 = vunpack.c.h.b16 %v1313
        %v2062 = vunpack.c.l.b16 %v1314
        %v2063 = vunpack.c.h.b16 %v1314
        %v2064 = vunpack.c.l.b16 %v1315
        %v2065 = vunpack.c.h.b16 %v1315
        %v2066 = vunpack.c.l.b16 %v1316
        %v2067 = vunpack.c.h.b16 %v1316
        %v2068 = vunpack.c.l.b16 %v1317
        %v2069 = vunpack.c.h.b16 %v1317
        %v2070 = vunpack.c.l.b16 %v1318
        %v2071 = vunpack.c.h.b16 %v1318
        %v2072 = vunpack.c.l.b16 %v1319
        %v2073 = vunpack.c.h.b16 %v1319
        %v2074 = vunpack.c.l.b16 %v1320
        %v2075 = vunpack.c.h.b16 %v1320
        %v2076 = vunpack.c.l.b16 %v1321
        %v2077 = vunpack.c.h.b16 %v1321
        %v2078 = vunpack.c.l.b16 %v1322
        %v2079 = vunpack.c.h.b16 %v1322
        %v2080 = vunpack.c.l.b16 %v1323
        %v2081 = vunpack.c.h.b16 %v1323
        %v2082 = vunpack.c.l.b16 %v1324
        %v2083 = vunpack.c.h.b16 %v1324
        %v2084 = vunpack.c.l.b16 %v1325
        %v2085 = vunpack.c.h.b16 %v1325
        %v2086 = vunpack.c.l.b16 %v1326
        %v2087 = vunpack.c.h.b16 %v1326
        %v2088 = vunpack.c.l.b16 %v1327
        %v2089 = vunpack.c.h.b16 %v1327
        %v2090 = vunpack.c.l.b16 %v1328
        %v2091 = vunpack.c.h.b16 %v1328
        %v2092 = vunpack.c.l.b16 %v1329
        %v2093 = vunpack.c.h.b16 %v1329
        %v2094 = vunpack.c.l.b16 %v1330
        %v2095 = vunpack.c.h.b16 %v1330
        %v2096 = vunpack.c.l.b16 %v1331
        %v2097 = vunpack.c.h.b16 %v1331
        %v2098 = vunpack.c.l.b16 %v1332
        %v2099 = vunpack.c.h.b16 %v1332
        %v2100 = vunpack.c.l.b16 %v1333
        %v2101 = vunpack.c.h.b16 %v1333
        %v2102 = vunpack.c.l.b16 %v1334
        %v2103 = vunpack.c.h.b16 %v1334
        %v2104 = vunpack.c.l.b16 %v1335
        %v2105 = vunpack.c.h.b16 %v1335
        %v2106 = vunpack.c.l.b16 %v1336
        %v2107 = vunpack.c.h.b16 %v1336
        %v2108 = vunpack.c.l.b16 %v1337
        %v2109 = vunpack.c.h.b16 %v1337
        %v2110 = vunpack.c.l.b16 %v1338
        %v2111 = vunpack.c.h.b16 %v1338
        %v2112 = vunpack.c.l.b16 %v1339
        %v2113 = vunpack.c.h.b16 %v1339
        %v2114 = vunpack.c.l.b16 %v1340
        %v2115 = vunpack.c.h.b16 %v1340
        %v2116 = vunpack.c.l.b16 %v1341
        %v2117 = vunpack.c.h.b16 %v1341
        %v2118 = vunpack.c.l.b16 %v1342
        %v2119 = vunpack.c.h.b16 %v1342
        %v2120 = vunpack.c.l.b16 %v1343
        %v2121 = vunpack.c.h.b16 %v1343
        %v2122 = vunpack.c.l.b16 %v1344
        %v2123 = vunpack.c.h.b16 %v1344
        %v2124 = vunpack.c.l.b16 %v1345
        %v2125 = vunpack.c.h.b16 %v1345
        %v2126 = vunpack.c.l.b16 %v1346
        %v2127 = vunpack.c.h.b16 %v1346
        %v2128 = vunpack.c.l.b16 %v1347
        %v2129 = vunpack.c.h.b16 %v1347
        %v2130 = vunpack.c.l.b16 %v1348
        %v2131 = vunpack.c.h.b16 %v1348
        %v2132 = vunpack.c.l.b16 %v1349
        %v2133 = vunpack.c.h.b16 %v1349
        %v2134 = vunpack.c.l.b16 %v1350
        %v2135 = vunpack.c.h.b16 %v1350
        %v2136 = vunpack.c.l.b16 %v1351
        %v2137 = vunpack.c.h.b16 %v1351
        %v2138 = vunpack.c.l.b16 %v1352
        %v2139 = vunpack.c.h.b16 %v1352
        %v2140 = vunpack.c.l.b16 %v1353
        %v2141 = vunpack.c.h.b16 %v1353
        %v2142 = vunpack.c.l.b16 %v1354
        %v2143 = vunpack.c.h.b16 %v1354
        %v2144 = vunpack.c.l.b16 %v1355
        %v2145 = vunpack.c.h.b16 %v1355
        %v2146 = vunpack.c.l.b16 %v1356
        %v2147 = vunpack.c.h.b16 %v1356
        %v2148 = vunpack.c.l.b16 %v1357
        %v2149 = vunpack.c.h.b16 %v1357
        %v2150 = vunpack.c.l.b16 %v1358
        %v2151 = vunpack.c.h.b16 %v1358
        %v2152 = vunpack.c.l.b16 %v1359
        %v2153 = vunpack.c.h.b16 %v1359
        %v2154 = vunpack.c.l.b16 %v1360
        %v2155 = vunpack.c.h.b16 %v1360
        %v2156 = vunpack.c.l.b16 %v1361
        %v2157 = vunpack.c.h.b16 %v1361
        %v2158 = vunpack.c.l.b16 %v1362
        %v2159 = vunpack.c.h.b16 %v1362
        %v2160 = vunpack.c.l.b16 %v1363
        %v2161 = vunpack.c.h.b16 %v1363
        %v2162 = vunpack.c.l.b16 %v1364
        %v2163 = vunpack.c.h.b16 %v1364
        %v2164 = vunpack.c.l.b16 %v1365
        %v2165 = vunpack.c.h.b16 %v1365
        %v2166 = vunpack.c.l.b16 %v1366
        %v2167 = vunpack.c.h.b16 %v1366
        %v2168 = vunpack.c.l.b16 %v1367
        %v2169 = vunpack.c.h.b16 %v1367
        %v2170 = vunpack.c.l.b16 %v1368
        %v2171 = vunpack.c.h.b16 %v1368
        %v2172 = vunpack.c.l.b16 %v1369
        %v2173 = vunpack.c.h.b16 %v1369
        %v2174 = vunpack.c.l.b16 %v1370
        %v2175 = vunpack.c.h.b16 %v1370
        %v2176 = vunpack.c.l.b16 %v1371
        %v2177 = vunpack.c.h.b16 %v1371
        %v2178 = vunpack.c.l.b16 %v1372
        %v2179 = vunpack.c.h.b16 %v1372
        %v2180 = vunpack.c.l.b16 %v1373
        %v2181 = vunpack.c.h.b16 %v1373
        %v2182 = vunpack.c.l.b16 %v1374
        %v2183 = vunpack.c.h.b16 %v1374
        %v2184 = vunpack.c.l.b16 %v1375
        %v2185 = vunpack.c.h.b16 %v1375
        %v2186 = vunpack.c.l.b16 %v1376
        %v2187 = vunpack.c.h.b16 %v1376
        %v2188 = vunpack.c.l.b16 %v1377
        %v2189 = vunpack.c.h.b16 %v1377
        %v2190 = vunpack.c.l.b16 %v1378
        %v2191 = vunpack.c.h.b16 %v1378
        %v2192 = vunpack.c.l.b16 %v1379
        %v2193 = vunpack.c.h.b16 %v1379
        %v2194 = vunpack.c.l.b16 %v1380
        %v2195 = vunpack.c.h.b16 %v1380
        %v2196 = vunpack.c.l.b16 %v1381
        %v2197 = vunpack.c.h.b16 %v1381
        %v2198 = vunpack.c.l.b16 %v1382
        %v2199 = vunpack.c.h.b16 %v1382
        %v2200 = vunpack.c.l.b16 %v1383
        %v2201 = vunpack.c.h.b16 %v1383
        %v2202 = vunpack.c.l.b16 %v1384
        %v2203 = vunpack.c.h.b16 %v1384
        %v2204 = vunpack.c.l.b16 %v1385
        %v2205 = vunpack.c.h.b16 %v1385
        %v2206 = vunpack.c.l.b16 %v1386
        %v2207 = vunpack.c.h.b16 %v1386
        %v2208 = vunpack.c.l.b16 %v1387
        %v2209 = vunpack.c.h.b16 %v1387
        %v2210 = vunpack.c.l.b16 %v1388
        %v2211 = vunpack.c.h.b16 %v1388
        %v2212 = vunpack.c.l.b16 %v1389
        %v2213 = vunpack.c.h.b16 %v1389
        %v2214 = vunpack.c.l.b16 %v1390
        %v2215 = vunpack.c.h.b16 %v1390
        %v2216 = vunpack.c.l.b16 %v1391
        %v2217 = vunpack.c.h.b16 %v1391
        %v2218 = vunpack.c.l.b16 %v1392
        %v2219 = vunpack.c.h.b16 %v1392
        %v2220 = vunpack.c.l.b16 %v1393
        %v2221 = vunpack.c.h.b16 %v1393
        %v2222 = vunpack.c.l.b16 %v1394
        %v2223 = vunpack.c.h.b16 %v1394
        %v2224 = vunpack.c.l.b16 %v1395
        %v2225 = vunpack.c.h.b16 %v1395
        %v2226 = vunpack.c.l.b16 %v1396
        %v2227 = vunpack.c.h.b16 %v1396
        %v2228 = vunpack.c.l.b16 %v1397
        %v2229 = vunpack.c.h.b16 %v1397
        %v2230 = vunpack.c.l.b16 %v1398
        %v2231 = vunpack.c.h.b16 %v1398
        %v2232 = vunpack.c.l.b16 %v1399
        %v2233 = vunpack.c.h.b16 %v1399
        %v2234 = vunpack.c.l.b16 %v1400
        %v2235 = vunpack.c.h.b16 %v1400
        %v2236 = vunpack.c.l.b16 %v1401
        %v2237 = vunpack.c.h.b16 %v1401
        %v2238 = vunpack.c.l.b16 %v1402
        %v2239 = vunpack.c.h.b16 %v1402
        %v2240 = vunpack.c.l.b16 %v1403
        %v2241 = vunpack.c.h.b16 %v1403
        %v2242 = vunpack.c.l.b16 %v1404
        %v2243 = vunpack.c.h.b16 %v1404
        %v2244 = vunpack.c.l.b16 %v1405
        %v2245 = vunpack.c.h.b16 %v1405
        %v2246 = vunpack.c.l.b16 %v1406
        %v2247 = vunpack.c.h.b16 %v1406
        %v2248 = vunpack.c.l.b16 %v1407
        %v2249 = vunpack.c.h.b16 %v1407
        %v2250 = vunpack.c.l.b16 %v1408
        %v2251 = vunpack.c.h.b16 %v1408
        %v2252 = vunpack.c.l.b16 %v1409
        %v2253 = vunpack.c.h.b16 %v1409
        %v2254 = vunpack.c.l.b16 %v1410
        %v2255 = vunpack.c.h.b16 %v1410
        %v2256 = vunpack.c.l.b16 %v1411
        %v2257 = vunpack.c.h.b16 %v1411
        %v2258 = vunpack.c.l.b16 %v1412
        %v2259 = vunpack.c.h.b16 %v1412
        %v2260 = vunpack.c.l.b16 %v1413
        %v2261 = vunpack.c.h.b16 %v1413
        %v2262 = vunpack.c.l.b16 %v1414
        %v2263 = vunpack.c.h.b16 %v1414
        %v2264 = vunpack.c.l.b16 %v1415
        %v2265 = vunpack.c.h.b16 %v1415
        %v2266 = vunpack.c.l.b16 %v1416
        %v2267 = vunpack.c.h.b16 %v1416
        %v2268 = vunpack.c.l.b16 %v1417
        %v2269 = vunpack.c.h.b16 %v1417
        %v2270 = vunpack.c.l.b16 %v1418
        %v2271 = vunpack.c.h.b16 %v1418
        %v2272 = vunpack.c.l.b16 %v1419
        %v2273 = vunpack.c.h.b16 %v1419
        %v2274 = vunpack.c.l.b16 %v1420
        %v2275 = vunpack.c.h.b16 %v1420
        %v2276 = vunpack.c.l.b16 %v1421
        %v2277 = vunpack.c.h.b16 %v1421
        %v2278 = vunpack.c.l.b16 %v1422
        %v2279 = vunpack.c.h.b16 %v1422
        %v2280 = vunpack.c.l.b16 %v1423
        %v2281 = vunpack.c.h.b16 %v1423
        %v2282 = vunpack.c.l.b16 %v1424
        %v2283 = vunpack.c.h.b16 %v1424
        %v2284 = vunpack.c.l.b16 %v1425
        %v2285 = vunpack.c.h.b16 %v1425
        %v2286 = vunpack.c.l.b16 %v1426
        %v2287 = vunpack.c.h.b16 %v1426
        %v2288 = vunpack.c.l.b16 %v1427
        %v2289 = vunpack.c.h.b16 %v1427
        %v2290 = vunpack.c.l.b16 %v1428
        %v2291 = vunpack.c.h.b16 %v1428
        %v2292 = vunpack.c.l.b16 %v1429
        %v2293 = vunpack.c.h.b16 %v1429
        %v2294 = vunpack.c.l.b16 %v1430
        %v2295 = vunpack.c.h.b16 %v1430
        %v2296 = vunpack.c.l.b16 %v1431
        %v2297 = vunpack.c.h.b16 %v1431
        %v2298 = vunpack.c.l.b16 %v1432
        %v2299 = vunpack.c.h.b16 %v1432
        %v2300 = vunpack.c.l.b16 %v1433
        %v2301 = vunpack.c.h.b16 %v1433
        %v2302 = vunpack.c.l.b16 %v1434
        %v2303 = vunpack.c.h.b16 %v1434
        %v2304 = vunpack.c.l.b16 %v1435
        %v2305 = vunpack.c.h.b16 %v1435
        %v2306 = vunpack.c.l.b16 %v1436
        %v2307 = vunpack.c.h.b16 %v1436
        %v2308 = vunpack.c.l.b16 %v1437
        %v2309 = vunpack.c.h.b16 %v1437
        %v2310 = vunpack.c.l.b16 %v1438
        %v2311 = vunpack.c.h.b16 %v1438
        %v2312 = vunpack.c.l.b16 %v1439
        %v2313 = vunpack.c.h.b16 %v1439
        %v2314 = vunpack.c.l.b16 %v1440
        %v2315 = vunpack.c.h.b16 %v1440
        %v2316 = vunpack.c.l.b16 %v1441
        %v2317 = vunpack.c.h.b16 %v1441
        %v2318 = vunpack.c.l.b16 %v1442
        %v2319 = vunpack.c.h.b16 %v1442
        %v2320 = vunpack.c.l.b16 %v1443
        %v2321 = vunpack.c.h.b16 %v1443
        %v2322 = vunpack.c.l.b16 %v1444
        %v2323 = vunpack.c.h.b16 %v1444
        %v2324 = vunpack.c.l.b16 %v1445
        %v2325 = vunpack.c.h.b16 %v1445
        %v2326 = vunpack.c.l.b16 %v1446
        %v2327 = vunpack.c.h.b16 %v1446
        %v2328 = vunpack.c.l.b16 %v1447
        %v2329 = vunpack.c.h.b16 %v1447
        %v2330 = vunpack.c.l.b16 %v1448
        %v2331 = vunpack.c.h.b16 %v1448
        %v2332 = vunpack.c.l.b16 %v1449
        %v2333 = vunpack.c.h.b16 %v1449
        %v2334 = vunpack.c.l.b16 %v1450
        %v2335 = vunpack.c.h.b16 %v1450
        %v2336 = vunpack.c.l.b16 %v1451
        %v2337 = vunpack.c.h.b16 %v1451
        %v2338 = vunpack.c.l.b16 %v1452
        %v2339 = vunpack.c.h.b16 %v1452
        %v2340 = vunpack.c.l.b16 %v1453
        %v2341 = vunpack.c.h.b16 %v1453
        %v2342 = vunpack.c.l.b16 %v1454
        %v2343 = vunpack.c.h.b16 %v1454
        %v2344 = vunpack.c.l.b16 %v1455
        %v2345 = vunpack.c.h.b16 %v1455
        %v2346 = vunpack.c.l.b16 %v1456
        %v2347 = vunpack.c.h.b16 %v1456
        %v2348 = vunpack.c.l.b16 %v1457
        %v2349 = vunpack.c.h.b16 %v1457
        %v2350 = vunpack.c.l.b16 %v1458
        %v2351 = vunpack.c.h.b16 %v1458
        %v2352 = vunpack.c.l.b16 %v1459
        %v2353 = vunpack.c.h.b16 %v1459
        %v2354 = vunpack.c.l.b16 %v1460
        %v2355 = vunpack.c.h.b16 %v1460
        %v2356 = vunpack.c.l.b16 %v1461
        %v2357 = vunpack.c.h.b16 %v1461
        %v2358 = vpack.c.b16 %v1788, %v1782
        %v2359 = vpack.c.b16 %v1789, %v1783
        %v2360 = vpack.c.b16 %v1790, %v1784
        %v2361 = vpack.c.b16 %v1791, %v1785
        %v2362 = vpack.c.b16 %v1792, %v1786
        %v2363 = vpack.c.b16 %v1793, %v1787
        %v2364 = vpack.c.b16 %v1800, %v1794
        %v2365 = vpack.c.b16 %v1801, %v1795
        %v2366 = vpack.c.b16 %v1802, %v1796
        %v2367 = vpack.c.b16 %v1803, %v1797
        %v2368 = vpack.c.b16 %v1804, %v1798
        %v2369 = vpack.c.b16 %v1805, %v1799
        %v2370 = vpack.c.b16 %v1812, %v1806
        %v2371 = vpack.c.b16 %v1813, %v1807
        %v2372 = vpack.c.b16 %v1814, %v1808
        %v2373 = vpack.c.b16 %v1815, %v1809
        %v2374 = vpack.c.b16 %v1816, %v1810
        %v2375 = vpack.c.b16 %v1817, %v1811
        %v2376 = vpack.c.b16 %v1824, %v1818
        %v2377 = vpack.c.b16 %v1825, %v1819
        %v2378 = vpack.c.b16 %v1826, %v1820
        %v2379 = vpack.c.b16 %v1827, %v1821
        %v2380 = vpack.c.b16 %v1828, %v1822
        %v2381 = vpack.c.b16 %v1829, %v1823
        %v2382 = vpack.c.b16 %v1836, %v1830
        %v2383 = vpack.c.b16 %v1837, %v1831
        %v2384 = vpack.c.b16 %v1838, %v1832
        %v2385 = vpack.c.b16 %v1839, %v1833
        %v2386 = vpack.c.b16 %v1840, %v1834
        %v2387 = vpack.c.b16 %v1841, %v1835
        %v2388 = vpack.c.b16 %v1848, %v1842
        %v2389 = vpack.c.b16 %v1849, %v1843
        %v2390 = vpack.c.b16 %v1850, %v1844
        %v2391 = vpack.c.b16 %v1851, %v1845
        %v2392 = vpack.c.b16 %v1852, %v1846
        %v2393 = vpack.c.b16 %v1853, %v1847
        %v2394 = vpack.c.b16 %v1860, %v1854
        %v2395 = vpack.c.b16 %v1861, %v1855
        %v2396 = vpack.c.b16 %v1862, %v1856
        %v2397 = vpack.c.b16 %v1863, %v1857
        %v2398 = vpack.c.b16 %v1864, %v1858
        %v2399 = vpack.c.b16 %v1865, %v1859
        %v2400 = vpack.c.b16 %v1872, %v1866
        %v2401 = vpack.c.b16 %v1873, %v1867
        %v2402 = vpack.c.b16 %v1874, %v1868
        %v2403 = vpack.c.b16 %v1875, %v1869
        %v2404 = vpack.c.b16 %v1876, %v1870
        %v2405 = vpack.c.b16 %v1877, %v1871
        %v2406 = vpack.c.b16 %v1884, %v1878
        %v2407 = vpack.c.b16 %v1885, %v1879
        %v2408 = vpack.c.b16 %v1886, %v1880
        %v2409 = vpack.c.b16 %v1887, %v1881
        %v2410 = vpack.c.b16 %v1888, %v1882
        %v2411 = vpack.c.b16 %v1889, %v1883
        %v2412 = vpack.c.b16 %v1896, %v1890
        %v2413 = vpack.c.b16 %v1897, %v1891
        %v2414 = vpack.c.b16 %v1898, %v1892
        %v2415 = vpack.c.b16 %v1899, %v1893
        %v2416 = vpack.c.b16 %v1900, %v1894
        %v2417 = vpack.c.b16 %v1901, %v1895
        %v2418 = vpack.c.b16 %v1908, %v1902
        %v2419 = vpack.c.b16 %v1909, %v1903
        %v2420 = vpack.c.b16 %v1910, %v1904
        %v2421 = vpack.c.b16 %v1911, %v1905
        %v2422 = vpack.c.b16 %v1912, %v1906
        %v2423 = vpack.c.b16 %v1913, %v1907
        %v2424 = vpack.c.b16 %v1920, %v1914
        %v2425 = vpack.c.b16 %v1921, %v1915
        %v2426 = vpack.c.b16 %v1922, %v1916
        %v2427 = vpack.c.b16 %v1923, %v1917
        %v2428 = vpack.c.b16 %v1924, %v1918
        %v2429 = vpack.c.b16 %v1925, %v1919
        %v2430 = vpack.c.b16 %v1932, %v1926
        %v2431 = vpack.c.b16 %v1933, %v1927
        %v2432 = vpack.c.b16 %v1934, %v1928
        %v2433 = vpack.c.b16 %v1935, %v1929
        %v2434 = vpack.c.b16 %v1936, %v1930
        %v2435 = vpack.c.b16 %v1937, %v1931
        %v2436 = vpack.c.b16 %v1944, %v1938
        %v2437 = vpack.c.b16 %v1945, %v1939
        %v2438 = vpack.c.b16 %v1946, %v1940
        %v2439 = vpack.c.b16 %v1947, %v1941
        %v2440 = vpack.c.b16 %v1948, %v1942
        %v2441 = vpack.c.b16 %v1949, %v1943
        %v2442 = vpack.c.b16 %v1956, %v1950
        %v2443 = vpack.c.b16 %v1957, %v1951
        %v2444 = vpack.c.b16 %v1958, %v1952
        %v2445 = vpack.c.b16 %v1959, %v1953
        %v2446 = vpack.c.b16 %v1960, %v1954
        %v2447 = vpack.c.b16 %v1961, %v1955
        %v2448 = vpack.c.b16 %v1968, %v1962
        %v2449 = vpack.c.b16 %v1969, %v1963
        %v2450 = vpack.c.b16 %v1970, %v1964
        %v2451 = vpack.c.b16 %v1971, %v1965
        %v2452 = vpack.c.b16 %v1972, %v1966
        %v2453 = vpack.c.b16 %v1973, %v1967
        %v2454 = vpack.c.b16 %v1980, %v1974
        %v2455 = vpack.c.b16 %v1981, %v1975
        %v2456 = vpack.c.b16 %v1982, %v1976
        %v2457 = vpack.c.b16 %v1983, %v1977
        %v2458 = vpack.c.b16 %v1984, %v1978
        %v2459 = vpack.c.b16 %v1985, %v1979
        %v2460 = vpack.c.b16 %v1992, %v1986
        %v2461 = vpack.c.b16 %v1993, %v1987
        %v2462 = vpack.c.b16 %v1994, %v1988
        %v2463 = vpack.c.b16 %v1995, %v1989
        %v2464 = vpack.c.b16 %v1996, %v1990
        %v2465 = vpack.c.b16 %v1997, %v1991
        %v2466 = vpack.c.b16 %v2004, %v1998
        %v2467 = vpack.c.b16 %v2005, %v1999
        %v2468 = vpack.c.b16 %v2006, %v2000
        %v2469 = vpack.c.b16 %v2007, %v2001
        %v2470 = vpack.c.b16 %v2008, %v2002
        %v2471 = vpack.c.b16 %v2009, %v2003
        %v2472 = vpack.c.b16 %v2016, %v2010
        %v2473 = vpack.c.b16 %v2017, %v2011
        %v2474 = vpack.c.b16 %v2018, %v2012
        %v2475 = vpack.c.b16 %v2019, %v2013
        %v2476 = vpack.c.b16 %v2020, %v2014
        %v2477 = vpack.c.b16 %v2021, %v2015
        %v2478 = vpack.c.b16 %v2028, %v2022
        %v2479 = vpack.c.b16 %v2029, %v2023
        %v2480 = vpack.c.b16 %v2030, %v2024
        %v2481 = vpack.c.b16 %v2031, %v2025
        %v2482 = vpack.c.b16 %v2032, %v2026
        %v2483 = vpack.c.b16 %v2033, %v2027
        %v2484 = vpack.c.b16 %v2040, %v2034
        %v2485 = vpack.c.b16 %v2041, %v2035
        %v2486 = vpack.c.b16 %v2042, %v2036
        %v2487 = vpack.c.b16 %v2043, %v2037
        %v2488 = vpack.c.b16 %v2044, %v2038
        %v2489 = vpack.c.b16 %v2045, %v2039
        %v2490 = vpack.c.b16 %v2052, %v2046
        %v2491 = vpack.c.b16 %v2053, %v2047
        %v2492 = vpack.c.b16 %v2054, %v2048
        %v2493 = vpack.c.b16 %v2055, %v2049
        %v2494 = vpack.c.b16 %v2056, %v2050
        %v2495 = vpack.c.b16 %v2057, %v2051
        %v2496 = vpack.c.b16 %v2064, %v2058
        %v2497 = vpack.c.b16 %v2065, %v2059
        %v2498 = vpack.c.b16 %v2066, %v2060
        %v2499 = vpack.c.b16 %v2067, %v2061
        %v2500 = vpack.c.b16 %v2068, %v2062
        %v2501 = vpack.c.b16 %v2069, %v2063
        %v2502 = vpack.c.b16 %v2076, %v2070
        %v2503 = vpack.c.b16 %v2077, %v2071
        %v2504 = vpack.c.b16 %v2078, %v2072
        %v2505 = vpack.c.b16 %v2079, %v2073
        %v2506 = vpack.c.b16 %v2080, %v2074
        %v2507 = vpack.c.b16 %v2081, %v2075
        %v2508 = vpack.c.b16 %v2088, %v2082
        %v2509 = vpack.c.b16 %v2089, %v2083
        %v2510 = vpack.c.b16 %v2090, %v2084
        %v2511 = vpack.c.b16 %v2091, %v2085
        %v2512 = vpack.c.b16 %v2092, %v2086
        %v2513 = vpack.c.b16 %v2093, %v2087
        %v2514 = vpack.c.b16 %v2100, %v2094
        %v2515 = vpack.c.b16 %v2101, %v2095
        %v2516 = vpack.c.b16 %v2102, %v2096
        %v2517 = vpack.c.b16 %v2103, %v2097
        %v2518 = vpack.c.b16 %v2104, %v2098
        %v2519 = vpack.c.b16 %v2105, %v2099
        %v2520 = vpack.c.b16 %v2112, %v2106
        %v2521 = vpack.c.b16 %v2113, %v2107
        %v2522 = vpack.c.b16 %v2114, %v2108
        %v2523 = vpack.c.b16 %v2115, %v2109
        %v2524 = vpack.c.b16 %v2116, %v2110
        %v2525 = vpack.c.b16 %v2117, %v2111
        %v2526 = vpack.c.b16 %v2124, %v2118
        %v2527 = vpack.c.b16 %v2125, %v2119
        %v2528 = vpack.c.b16 %v2126, %v2120
        %v2529 = vpack.c.b16 %v2127, %v2121
        %v2530 = vpack.c.b16 %v2128, %v2122
        %v2531 = vpack.c.b16 %v2129, %v2123
        %v2532 = vpack.c.b16 %v2136, %v2130
        %v2533 = vpack.c.b16 %v2137, %v2131
        %v2534 = vpack.c.b16 %v2138, %v2132
        %v2535 = vpack.c.b16 %v2139, %v2133
        %v2536 = vpack.c.b16 %v2140, %v2134
        %v2537 = vpack.c.b16 %v2141, %v2135
        %v2538 = vpack.c.b16 %v2148, %v2142
        %v2539 = vpack.c.b16 %v2149, %v2143
        %v2540 = vpack.c.b16 %v2150, %v2144
        %v2541 = vpack.c.b16 %v2151, %v2145
        %v2542 = vpack.c.b16 %v2152, %v2146
        %v2543 = vpack.c.b16 %v2153, %v2147
        %v2544 = vpack.c.b16 %v2160, %v2154
        %v2545 = vpack.c.b16 %v2161, %v2155
        %v2546 = vpack.c.b16 %v2162, %v2156
        %v2547 = vpack.c.b16 %v2163, %v2157
        %v2548 = vpack.c.b16 %v2164, %v2158
        %v2549 = vpack.c.b16 %v2165, %v2159
        %v2550 = vpack.c.b16 %v2172, %v2166
        %v2551 = vpack.c.b16 %v2173, %v2167
        %v2552 = vpack.c.b16 %v2174, %v2168
        %v2553 = vpack.c.b16 %v2175, %v2169
        %v2554 = vpack.c.b16 %v2176, %v2170
        %v2555 = vpack.c.b16 %v2177, %v2171
        %v2556 = vpack.c.b16 %v2184, %v2178
        %v2557 = vpack.c.b16 %v2185, %v2179
        %v2558 = vpack.c.b16 %v2186, %v2180
        %v2559 = vpack.c.b16 %v2187, %v2181
        %v2560 = vpack.c.b16 %v2188, %v2182
        %v2561 = vpack.c.b16 %v2189, %v2183
        %v2562 = vpack.c.b16 %v2196, %v2190
        %v2563 = vpack.c.b16 %v2197, %v2191
        %v2564 = vpack.c.b16 %v2198, %v2192
        %v2565 = vpack.c.b16 %v2199, %v2193
        %v2566 = vpack.c.b16 %v2200, %v2194
        %v2567 = vpack.c.b16 %v2201, %v2195
        %v2568 = vpack.c.b16 %v2208, %v2202
        %v2569 = vpack.c.b16 %v2209, %v2203
        %v2570 = vpack.c.b16 %v2210, %v2204
        %v2571 = vpack.c.b16 %v2211, %v2205
        %v2572 = vpack.c.b16 %v2212, %v2206
        %v2573 = vpack.c.b16 %v2213, %v2207
        %v2574 = vpack.c.b16 %v2220, %v2214
        %v2575 = vpack.c.b16 %v2221, %v2215
        %v2576 = vpack.c.b16 %v2222, %v2216
        %v2577 = vpack.c.b16 %v2223, %v2217
        %v2578 = vpack.c.b16 %v2224, %v2218
        %v2579 = vpack.c.b16 %v2225, %v2219
        %v2580 = vpack.c.b16 %v2232, %v2226
        %v2581 = vpack.c.b16 %v2233, %v2227
        %v2582 = vpack.c.b16 %v2234, %v2228
        %v2583 = vpack.c.b16 %v2235, %v2229
        %v2584 = vpack.c.b16 %v2236, %v2230
        %v2585 = vpack.c.b16 %v2237, %v2231
        %v2586 = vpack.c.b16 %v2244, %v2238
        %v2587 = vpack.c.b16 %v2245, %v2239
        %v2588 = vpack.c.b16 %v2246, %v2240
        %v2589 = vpack.c.b16 %v2247, %v2241
        %v2590 = vpack.c.b16 %v2248, %v2242
        %v2591 = vpack.c.b16 %v2249, %v2243
        %v2592 = vpack.c.b16 %v2256, %v2250
        %v2593 = vpack.c.b16 %v2257, %v2251
        %v2594 = vpack.c.b16 %v2258, %v2252
        %v2595 = vpack.c.b16 %v2259, %v2253
        %v2596 = vpack.c.b16 %v2260, %v2254
        %v2597 = vpack.c.b16 %v2261, %v2255
        %v2598 = vpack.c.b16 %v2268, %v2262
        %v2599 = vpack.c.b16 %v2269, %v2263
        %v2600 = vpack.c.b16 %v2270, %v2264
        %v2601 = vpack.c.b16 %v2271, %v2265
        %v2602 = vpack.c.b16 %v2272, %v2266
        %v2603 = vpack.c.b16 %v2273, %v2267
        %v2604 = vpack.c.b16 %v2280, %v2274
        %v2605 = vpack.c.b16 %v2281, %v2275
        %v2606 = vpack.c.b16 %v2282, %v2276
        %v2607 = vpack.c.b16 %v2283, %v2277
        %v2608 = vpack.c.b16 %v2284, %v2278
        %v2609 = vpack.c.b16 %v2285, %v2279
        %v2610 = vpack.c.b16 %v2292, %v2286
        %v2611 = vpack.c.b16 %v2293, %v2287
        %v2612 = vpack.c.b16 %v2294, %v2288
        %v2613 = vpack.c.b16 %v2295, %v2289
        %v2614 = vpack.c.b16 %v2296, %v2290
        %v2615 = vpack.c.b16 %v2297, %v2291
        %v2616 = vpack.c.b16 %v2304, %v2298
        %v2617 = vpack.c.b16 %v2305, %v2299
        %v2618 = vpack.c.b16 %v2306, %v2300
        %v2619 = vpack.c.b16 %v2307, %v2301
        %v2620 = vpack.c.b16 %v2308, %v2302
        %v2621 = vpack.c.b16 %v2309, %v2303
        %v2622 = vpack.c.b16 %v2316, %v2310
        %v2623 = vpack.c.b16 %v2317, %v2311
        %v2624 = vpack.c.b16 %v2318, %v2312
        %v2625 = vpack.c.b16 %v2319, %v2313
        %v2626 = vpack.c.b16 %v2320, %v2314
        %v2627 = vpack.c.b16 %v2321, %v2315
        %v2628 = vpack.c.b16 %v2328, %v2322
        %v2629 = vpack.c.b16 %v2329, %v2323
        %v2630 = vpack.c.b16 %v2330, %v2324
        %v2631 = vpack.c.b16 %v2331, %v2325
        %v2632 = vpack.c.b16 %v2332, %v2326
        %v2633 = vpack.c.b16 %v2333, %v2327
        %v2634 = vpack.c.b16 %v2340, %v2334
        %v2635 = vpack.c.b16 %v2341, %v2335
        %v2636 = vpack.c.b16 %v2342, %v2336
        %v2637 = vpack.c.b16 %v2343, %v2337
        %v2638 = vpack.c.b16 %v2344, %v2338
        %v2639 = vpack.c.b16 %v2345, %v2339
        %v2640 = vpack.c.b16 %v2352, %v2346
        %v2641 = vpack.c.b16 %v2353, %v2347
        %v2642 = vpack.c.b16 %v2354, %v2348
        %v2643 = vpack.c.b16 %v2355, %v2349
        %v2644 = vpack.c.b16 %v2356, %v2350
        %v2645 = vpack.c.b16 %v2357, %v2351
        %2934 = vmatprep.subr.bf16.mxu0 %v2401
        %2935 = vmatpush1.bf16.msra.mxu0 %v2400
        %2936 = vmatprep.subr.bf16.mxu0 %v2395
        %2937 = vmatpush1.bf16.msra.mxu0 %v2394
        %2938 = vmatprep.subr.bf16.mxu0 %v2389
        %2939 = vmatpush1.bf16.msra.mxu0 %v2388
        %2940 = vmatprep.subr.bf16.mxu0 %v2383
        %2941 = vmatpush1.bf16.msra.mxu0 %v2382
        %2942 = vmatprep.subr.bf16.mxu0 %v2377
        %2943 = vmatpush1.bf16.msra.mxu0 %v2376
        %2944 = vmatprep.subr.bf16.mxu0 %v2371
        %2945 = vmatpush1.bf16.msra.mxu0 %v2370
        %2946 = vmatprep.subr.bf16.mxu0 %v2365
        %2947 = vmatpush1.bf16.msra.mxu0 %v2364
        %2948 = vmatprep.subr.bf16.mxu0 %v2359
        %2949 = vmatpush1.bf16.msra.mxu0 %v2358
        %2950 = vmatprep.subr.bf16.mxu0 %v2449
        %2951 = vmatpush2.bf16.msra.mxu0 %v2448
        %2952 = vmatprep.subr.bf16.mxu0 %v2443
        %2953 = vmatpush2.bf16.msra.mxu0 %v2442
        %2954 = vmatprep.subr.bf16.mxu0 %v2437
        %2955 = vmatpush2.bf16.msra.mxu0 %v2436
        %2956 = vmatprep.subr.bf16.mxu0 %v2431
        %2957 = vmatpush2.bf16.msra.mxu0 %v2430
        %2958 = vmatprep.subr.bf16.mxu0 %v2425
        %2959 = vmatpush2.bf16.msra.mxu0 %v2424
        %2960 = vmatprep.subr.bf16.mxu0 %v2419
        %2961 = vmatpush2.bf16.msra.mxu0 %v2418
        %2962 = vmatprep.subr.bf16.mxu0 %v2413
        %2963 = vmatpush2.bf16.msra.mxu0 %v2412
        %2964 = vmatprep.subr.bf16.mxu0 %v2407
        %2965 = vmatpush2.bf16.msra.mxu0 %v2406
        %2966 = vmatprep.mubr.bf16.mxu0 %v1169
        %2967 = vmatmul.mubr.bf16.gmra.mxu0 %v1168
        %v2968 = vpop.f32.mrf.mxu0
        %v2969 = vadd.f32 %v1467, %v2968
        %v2970 = vpop.f32.mrf.mxu0
        %v2971 = vadd.f32 %v1471, %v2970
        %v2972 = vpop.f32.mrf.mxu0
        %v2973 = vpop.f32.mrf.mxu0
        %2974 = vdwg.mxu0
        %2975 = vmatprep.subr.bf16.mxu0 %v2497
        %2976 = vmatpush1.bf16.msra.mxu0 %v2496
        %2977 = vmatprep.subr.bf16.mxu0 %v2491
        %2978 = vmatpush1.bf16.msra.mxu0 %v2490
        %2979 = vmatprep.subr.bf16.mxu0 %v2485
        %2980 = vmatpush1.bf16.msra.mxu0 %v2484
        %2981 = vmatprep.subr.bf16.mxu0 %v2479
        %2982 = vmatpush1.bf16.msra.mxu0 %v2478
        %2983 = vmatprep.subr.bf16.mxu0 %v2473
        %2984 = vmatpush1.bf16.msra.mxu0 %v2472
        %2985 = vmatprep.subr.bf16.mxu0 %v2467
        %2986 = vmatpush1.bf16.msra.mxu0 %v2466
        %2987 = vmatprep.subr.bf16.mxu0 %v2461
        %2988 = vmatpush1.bf16.msra.mxu0 %v2460
        %2989 = vmatprep.subr.bf16.mxu0 %v2455
        %2990 = vmatpush1.bf16.msra.mxu0 %v2454
        %2991 = vmatprep.subr.bf16.mxu0 %v2545
        %2992 = vmatpush2.bf16.msra.mxu0 %v2544
        %2993 = vmatprep.subr.bf16.mxu0 %v2539
        %2994 = vmatpush2.bf16.msra.mxu0 %v2538
        %2995 = vmatprep.subr.bf16.mxu0 %v2533
        %2996 = vmatpush2.bf16.msra.mxu0 %v2532
        %2997 = vmatprep.subr.bf16.mxu0 %v2527
        %2998 = vmatpush2.bf16.msra.mxu0 %v2526
        %2999 = vmatprep.subr.bf16.mxu0 %v2521
        %3000 = vmatpush2.bf16.msra.mxu0 %v2520
        %3001 = vmatprep.subr.bf16.mxu0 %v2515
        %3002 = vmatpush2.bf16.msra.mxu0 %v2514
        %3003 = vmatprep.subr.bf16.mxu0 %v2509
        %3004 = vmatpush2.bf16.msra.mxu0 %v2508
        %3005 = vmatprep.subr.bf16.mxu0 %v2503
        %3006 = vmatpush2.bf16.msra.mxu0 %v2502
        %3007 = vmatprep.mubr.bf16.mxu0 %v1171
        %3008 = vmatmul.mubr.bf16.gmra.mxu0 %v1170
        %v3009 = vpop.f32.mrf.mxu0
        %v3010 = vadd.f32 %v2969, %v3009
        %v3011 = vpop.f32.mrf.mxu0
        %v3012 = vadd.f32 %v2971, %v3011
        %v3013 = vpop.f32.mrf.mxu0
        %v3014 = vpop.f32.mrf.mxu0
        %3015 = vdwg.mxu0
        %3016 = vmatprep.subr.bf16.mxu0 %v2593
        %3017 = vmatpush1.bf16.msra.mxu0 %v2592
        %3018 = vmatprep.subr.bf16.mxu0 %v2587
        %3019 = vmatpush1.bf16.msra.mxu0 %v2586
        %3020 = vmatprep.subr.bf16.mxu0 %v2581
        %3021 = vmatpush1.bf16.msra.mxu0 %v2580
        %3022 = vmatprep.subr.bf16.mxu0 %v2575
        %3023 = vmatpush1.bf16.msra.mxu0 %v2574
        %3024 = vmatprep.subr.bf16.mxu0 %v2569
        %3025 = vmatpush1.bf16.msra.mxu0 %v2568
        %3026 = vmatprep.subr.bf16.mxu0 %v2563
        %3027 = vmatpush1.bf16.msra.mxu0 %v2562
        %3028 = vmatprep.subr.bf16.mxu0 %v2557
        %3029 = vmatpush1.bf16.msra.mxu0 %v2556
        %3030 = vmatprep.subr.bf16.mxu0 %v2551
        %3031 = vmatpush1.bf16.msra.mxu0 %v2550
        %3032 = vmatprep.subr.bf16.mxu0 %v2641
        %3033 = vmatpush2.bf16.msra.mxu0 %v2640
        %3034 = vmatprep.subr.bf16.mxu0 %v2635
        %3035 = vmatpush2.bf16.msra.mxu0 %v2634
        %3036 = vmatprep.subr.bf16.mxu0 %v2629
        %3037 = vmatpush2.bf16.msra.mxu0 %v2628
        %3038 = vmatprep.subr.bf16.mxu0 %v2623
        %3039 = vmatpush2.bf16.msra.mxu0 %v2622
        %3040 = vmatprep.subr.bf16.mxu0 %v2617
        %3041 = vmatpush2.bf16.msra.mxu0 %v2616
        %3042 = vmatprep.subr.bf16.mxu0 %v2611
        %3043 = vmatpush2.bf16.msra.mxu0 %v2610
        %3044 = vmatprep.subr.bf16.mxu0 %v2605
        %3045 = vmatpush2.bf16.msra.mxu0 %v2604
        %3046 = vmatprep.subr.bf16.mxu0 %v2599
        %3047 = vmatpush2.bf16.msra.mxu0 %v2598
        %3048 = vmatprep.mubr.bf16.mxu0 %v1173
        %3049 = vmatmul.mubr.bf16.gmra.mxu0 %v1172
        %v3050 = vpop.f32.mrf.mxu0
        %v3051 = vadd.f32 %v3010, %v3050
        %v3052 = vpop.f32.mrf.mxu0
        %v3053 = vadd.f32 %v3012, %v3052
        %v3054 = vpop.f32.mrf.mxu0
        %v3055 = vpop.f32.mrf.mxu0
        %3056 = vdwg.mxu0
        %3057 = vmatprep.subr.bf16.mxu0 %v2403
        %3058 = vmatpush1.bf16.msra.mxu0 %v2402
        %3059 = vmatprep.subr.bf16.mxu0 %v2397
        %3060 = vmatpush1.bf16.msra.mxu0 %v2396
        %3061 = vmatprep.subr.bf16.mxu0 %v2391
        %3062 = vmatpush1.bf16.msra.mxu0 %v2390
        %3063 = vmatprep.subr.bf16.mxu0 %v2385
        %3064 = vmatpush1.bf16.msra.mxu0 %v2384
        %3065 = vmatprep.subr.bf16.mxu0 %v2379
        %3066 = vmatpush1.bf16.msra.mxu0 %v2378
        %3067 = vmatprep.subr.bf16.mxu0 %v2373
        %3068 = vmatpush1.bf16.msra.mxu0 %v2372
        %3069 = vmatprep.subr.bf16.mxu0 %v2367
        %3070 = vmatpush1.bf16.msra.mxu0 %v2366
        %3071 = vmatprep.subr.bf16.mxu0 %v2361
        %3072 = vmatpush1.bf16.msra.mxu0 %v2360
        %3073 = vmatprep.subr.bf16.mxu0 %v2451
        %3074 = vmatpush2.bf16.msra.mxu0 %v2450
        %3075 = vmatprep.subr.bf16.mxu0 %v2445
        %3076 = vmatpush2.bf16.msra.mxu0 %v2444
        %3077 = vmatprep.subr.bf16.mxu0 %v2439
        %3078 = vmatpush2.bf16.msra.mxu0 %v2438
        %3079 = vmatprep.subr.bf16.mxu0 %v2433
        %3080 = vmatpush2.bf16.msra.mxu0 %v2432
        %3081 = vmatprep.subr.bf16.mxu0 %v2427
        %3082 = vmatpush2.bf16.msra.mxu0 %v2426
        %3083 = vmatprep.subr.bf16.mxu0 %v2421
        %3084 = vmatpush2.bf16.msra.mxu0 %v2420
        %3085 = vmatprep.subr.bf16.mxu0 %v2415
        %3086 = vmatpush2.bf16.msra.mxu0 %v2414
        %3087 = vmatprep.subr.bf16.mxu0 %v2409
        %3088 = vmatpush2.bf16.msra.mxu0 %v2408
        %3089 = vmatprep.mubr.bf16.mxu0 %v1169
        %3090 = vmatmul.mubr.bf16.gmra.mxu0 %v1168
        %v3091 = vpop.f32.mrf.mxu0
        %v3092 = vadd.f32 %v1475, %v3091
        %v3093 = vpop.f32.mrf.mxu0
        %v3094 = vadd.f32 %v1479, %v3093
        %v3095 = vpop.f32.mrf.mxu0
        %v3096 = vpop.f32.mrf.mxu0
        %3097 = vdwg.mxu0
        %3098 = vmatprep.subr.bf16.mxu0 %v2499
        %3099 = vmatpush1.bf16.msra.mxu0 %v2498
        %3100 = vmatprep.subr.bf16.mxu0 %v2493
        %3101 = vmatpush1.bf16.msra.mxu0 %v2492
        %3102 = vmatprep.subr.bf16.mxu0 %v2487
        %3103 = vmatpush1.bf16.msra.mxu0 %v2486
        %3104 = vmatprep.subr.bf16.mxu0 %v2481
        %3105 = vmatpush1.bf16.msra.mxu0 %v2480
        %3106 = vmatprep.subr.bf16.mxu0 %v2475
        %3107 = vmatpush1.bf16.msra.mxu0 %v2474
        %3108 = vmatprep.subr.bf16.mxu0 %v2469
        %3109 = vmatpush1.bf16.msra.mxu0 %v2468
        %3110 = vmatprep.subr.bf16.mxu0 %v2463
        %3111 = vmatpush1.bf16.msra.mxu0 %v2462
        %3112 = vmatprep.subr.bf16.mxu0 %v2457
        %3113 = vmatpush1.bf16.msra.mxu0 %v2456
        %3114 = vmatprep.subr.bf16.mxu0 %v2547
        %3115 = vmatpush2.bf16.msra.mxu0 %v2546
        %3116 = vmatprep.subr.bf16.mxu0 %v2541
        %3117 = vmatpush2.bf16.msra.mxu0 %v2540
        %3118 = vmatprep.subr.bf16.mxu0 %v2535
        %3119 = vmatpush2.bf16.msra.mxu0 %v2534
        %3120 = vmatprep.subr.bf16.mxu0 %v2529
        %3121 = vmatpush2.bf16.msra.mxu0 %v2528
        %3122 = vmatprep.subr.bf16.mxu0 %v2523
        %3123 = vmatpush2.bf16.msra.mxu0 %v2522
        %3124 = vmatprep.subr.bf16.mxu0 %v2517
        %3125 = vmatpush2.bf16.msra.mxu0 %v2516
        %3126 = vmatprep.subr.bf16.mxu0 %v2511
        %3127 = vmatpush2.bf16.msra.mxu0 %v2510
        %3128 = vmatprep.subr.bf16.mxu0 %v2505
        %3129 = vmatpush2.bf16.msra.mxu0 %v2504
        %3130 = vmatprep.mubr.bf16.mxu0 %v1171
        %3131 = vmatmul.mubr.bf16.gmra.mxu0 %v1170
        %v3132 = vpop.f32.mrf.mxu0
        %v3133 = vadd.f32 %v3092, %v3132
        %v3134 = vpop.f32.mrf.mxu0
        %v3135 = vadd.f32 %v3094, %v3134
        %v3136 = vpop.f32.mrf.mxu0
        %v3137 = vpop.f32.mrf.mxu0
        %3138 = vdwg.mxu0
        %3139 = vmatprep.subr.bf16.mxu0 %v2595
        %3140 = vmatpush1.bf16.msra.mxu0 %v2594
        %3141 = vmatprep.subr.bf16.mxu0 %v2589
        %3142 = vmatpush1.bf16.msra.mxu0 %v2588
        %3143 = vmatprep.subr.bf16.mxu0 %v2583
        %3144 = vmatpush1.bf16.msra.mxu0 %v2582
        %3145 = vmatprep.subr.bf16.mxu0 %v2577
        %3146 = vmatpush1.bf16.msra.mxu0 %v2576
        %3147 = vmatprep.subr.bf16.mxu0 %v2571
        %3148 = vmatpush1.bf16.msra.mxu0 %v2570
        %3149 = vmatprep.subr.bf16.mxu0 %v2565
        %3150 = vmatpush1.bf16.msra.mxu0 %v2564
        %3151 = vmatprep.subr.bf16.mxu0 %v2559
        %3152 = vmatpush1.bf16.msra.mxu0 %v2558
        %3153 = vmatprep.subr.bf16.mxu0 %v2553
        %3154 = vmatpush1.bf16.msra.mxu0 %v2552
        %3155 = vmatprep.subr.bf16.mxu0 %v2643
        %3156 = vmatpush2.bf16.msra.mxu0 %v2642
        %3157 = vmatprep.subr.bf16.mxu0 %v2637
        %3158 = vmatpush2.bf16.msra.mxu0 %v2636
        %3159 = vmatprep.subr.bf16.mxu0 %v2631
        %3160 = vmatpush2.bf16.msra.mxu0 %v2630
        %3161 = vmatprep.subr.bf16.mxu0 %v2625
        %3162 = vmatpush2.bf16.msra.mxu0 %v2624
        %3163 = vmatprep.subr.bf16.mxu0 %v2619
        %3164 = vmatpush2.bf16.msra.mxu0 %v2618
        %3165 = vmatprep.subr.bf16.mxu0 %v2613
        %3166 = vmatpush2.bf16.msra.mxu0 %v2612
        %3167 = vmatprep.subr.bf16.mxu0 %v2607
        %3168 = vmatpush2.bf16.msra.mxu0 %v2606
        %3169 = vmatprep.subr.bf16.mxu0 %v2601
        %3170 = vmatpush2.bf16.msra.mxu0 %v2600
        %3171 = vmatprep.mubr.bf16.mxu0 %v1173
        %3172 = vmatmul.mubr.bf16.gmra.mxu0 %v1172
        %v3173 = vpop.f32.mrf.mxu0
        %v3174 = vadd.f32 %v3133, %v3173
        %v3175 = vpop.f32.mrf.mxu0
        %v3176 = vadd.f32 %v3135, %v3175
        %v3177 = vpop.f32.mrf.mxu0
        %v3178 = vpop.f32.mrf.mxu0
        %3179 = vdwg.mxu0
        %3180 = vmatprep.subr.bf16.mxu0 %v2405
        %3181 = vmatpush1.bf16.msra.mxu0 %v2404
        %3182 = vmatprep.subr.bf16.mxu0 %v2399
        %3183 = vmatpush1.bf16.msra.mxu0 %v2398
        %3184 = vmatprep.subr.bf16.mxu0 %v2393
        %3185 = vmatpush1.bf16.msra.mxu0 %v2392
        %3186 = vmatprep.subr.bf16.mxu0 %v2387
        %3187 = vmatpush1.bf16.msra.mxu0 %v2386
        %3188 = vmatprep.subr.bf16.mxu0 %v2381
        %3189 = vmatpush1.bf16.msra.mxu0 %v2380
        %3190 = vmatprep.subr.bf16.mxu0 %v2375
        %3191 = vmatpush1.bf16.msra.mxu0 %v2374
        %3192 = vmatprep.subr.bf16.mxu0 %v2369
        %3193 = vmatpush1.bf16.msra.mxu0 %v2368
        %3194 = vmatprep.subr.bf16.mxu0 %v2363
        %3195 = vmatpush1.bf16.msra.mxu0 %v2362
        %3196 = vmatprep.subr.bf16.mxu0 %v2453
        %3197 = vmatpush2.bf16.msra.mxu0 %v2452
        %3198 = vmatprep.subr.bf16.mxu0 %v2447
        %3199 = vmatpush2.bf16.msra.mxu0 %v2446
        %3200 = vmatprep.subr.bf16.mxu0 %v2441
        %3201 = vmatpush2.bf16.msra.mxu0 %v2440
        %3202 = vmatprep.subr.bf16.mxu0 %v2435
        %3203 = vmatpush2.bf16.msra.mxu0 %v2434
        %3204 = vmatprep.subr.bf16.mxu0 %v2429
        %3205 = vmatpush2.bf16.msra.mxu0 %v2428
        %3206 = vmatprep.subr.bf16.mxu0 %v2423
        %3207 = vmatpush2.bf16.msra.mxu0 %v2422
        %3208 = vmatprep.subr.bf16.mxu0 %v2417
        %3209 = vmatpush2.bf16.msra.mxu0 %v2416
        %3210 = vmatprep.subr.bf16.mxu0 %v2411
        %3211 = vmatpush2.bf16.msra.mxu0 %v2410
        %3212 = vmatprep.mubr.bf16.mxu0 %v1169
        %3213 = vmatmul.mubr.bf16.gmra.mxu0 %v1168
        %v3214 = vpop.f32.mrf.mxu0
        %v3215 = vadd.f32 %v1483, %v3214
        %v3216 = vpop.f32.mrf.mxu0
        %v3217 = vadd.f32 %v1487, %v3216
        %v3218 = vpop.f32.mrf.mxu0
        %v3219 = vpop.f32.mrf.mxu0
        %3220 = vdwg.mxu0
        %3221 = vmatprep.subr.bf16.mxu0 %v2501
        %3222 = vmatpush1.bf16.msra.mxu0 %v2500
        %3223 = vmatprep.subr.bf16.mxu0 %v2495
        %3224 = vmatpush1.bf16.msra.mxu0 %v2494
        %3225 = vmatprep.subr.bf16.mxu0 %v2489
        %3226 = vmatpush1.bf16.msra.mxu0 %v2488
        %3227 = vmatprep.subr.bf16.mxu0 %v2483
        %3228 = vmatpush1.bf16.msra.mxu0 %v2482
        %3229 = vmatprep.subr.bf16.mxu0 %v2477
        %3230 = vmatpush1.bf16.msra.mxu0 %v2476
        %3231 = vmatprep.subr.bf16.mxu0 %v2471
        %3232 = vmatpush1.bf16.msra.mxu0 %v2470
        %3233 = vmatprep.subr.bf16.mxu0 %v2465
        %3234 = vmatpush1.bf16.msra.mxu0 %v2464
        %3235 = vmatprep.subr.bf16.mxu0 %v2459
        %3236 = vmatpush1.bf16.msra.mxu0 %v2458
        %3237 = vmatprep.subr.bf16.mxu0 %v2549
        %3238 = vmatpush2.bf16.msra.mxu0 %v2548
        %3239 = vmatprep.subr.bf16.mxu0 %v2543
        %3240 = vmatpush2.bf16.msra.mxu0 %v2542
        %3241 = vmatprep.subr.bf16.mxu0 %v2537
        %3242 = vmatpush2.bf16.msra.mxu0 %v2536
        %3243 = vmatprep.subr.bf16.mxu0 %v2531
        %3244 = vmatpush2.bf16.msra.mxu0 %v2530
        %3245 = vmatprep.subr.bf16.mxu0 %v2525
        %3246 = vmatpush2.bf16.msra.mxu0 %v2524
        %3247 = vmatprep.subr.bf16.mxu0 %v2519
        %3248 = vmatpush2.bf16.msra.mxu0 %v2518
        %3249 = vmatprep.subr.bf16.mxu0 %v2513
        %3250 = vmatpush2.bf16.msra.mxu0 %v2512
        %3251 = vmatprep.subr.bf16.mxu0 %v2507
        %3252 = vmatpush2.bf16.msra.mxu0 %v2506
        %3253 = vmatprep.mubr.bf16.mxu0 %v1171
        %3254 = vmatmul.mubr.bf16.gmra.mxu0 %v1170
        %v3255 = vpop.f32.mrf.mxu0
        %v3256 = vadd.f32 %v3215, %v3255
        %v3257 = vpop.f32.mrf.mxu0
        %v3258 = vadd.f32 %v3217, %v3257
        %v3259 = vpop.f32.mrf.mxu0
        %v3260 = vpop.f32.mrf.mxu0
        %3261 = vdwg.mxu0
        %3262 = vmatprep.subr.bf16.mxu0 %v2597
        %3263 = vmatpush1.bf16.msra.mxu0 %v2596
        %3264 = vmatprep.subr.bf16.mxu0 %v2591
        %3265 = vmatpush1.bf16.msra.mxu0 %v2590
        %3266 = vmatprep.subr.bf16.mxu0 %v2585
        %3267 = vmatpush1.bf16.msra.mxu0 %v2584
        %3268 = vmatprep.subr.bf16.mxu0 %v2579
        %3269 = vmatpush1.bf16.msra.mxu0 %v2578
        %3270 = vmatprep.subr.bf16.mxu0 %v2573
        %3271 = vmatpush1.bf16.msra.mxu0 %v2572
        %3272 = vmatprep.subr.bf16.mxu0 %v2567
        %3273 = vmatpush1.bf16.msra.mxu0 %v2566
        %3274 = vmatprep.subr.bf16.mxu0 %v2561
        %3275 = vmatpush1.bf16.msra.mxu0 %v2560
        %3276 = vmatprep.subr.bf16.mxu0 %v2555
        %3277 = vmatpush1.bf16.msra.mxu0 %v2554
        %3278 = vmatprep.subr.bf16.mxu0 %v2645
        %3279 = vmatpush2.bf16.msra.mxu0 %v2644
        %3280 = vmatprep.subr.bf16.mxu0 %v2639
        %3281 = vmatpush2.bf16.msra.mxu0 %v2638
        %3282 = vmatprep.subr.bf16.mxu0 %v2633
        %3283 = vmatpush2.bf16.msra.mxu0 %v2632
        %3284 = vmatprep.subr.bf16.mxu0 %v2627
        %3285 = vmatpush2.bf16.msra.mxu0 %v2626
        %3286 = vmatprep.subr.bf16.mxu0 %v2621
        %3287 = vmatpush2.bf16.msra.mxu0 %v2620
        %3288 = vmatprep.subr.bf16.mxu0 %v2615
        %3289 = vmatpush2.bf16.msra.mxu0 %v2614
        %3290 = vmatprep.subr.bf16.mxu0 %v2609
        %3291 = vmatpush2.bf16.msra.mxu0 %v2608
        %3292 = vmatprep.subr.bf16.mxu0 %v2603
        %3293 = vmatpush2.bf16.msra.mxu0 %v2602
        %3294 = vmatprep.mubr.bf16.mxu0 %v1173
        %3295 = vmatmul.mubr.bf16.gmra.mxu0 %v1172
        %v3296 = vpop.f32.mrf.mxu0
        %v3297 = vadd.f32 %v3256, %v3296
        %v3298 = vpop.f32.mrf.mxu0
        %v3299 = vadd.f32 %v3258, %v3298
        %v3300 = vpop.f32.mrf.mxu0
        %v3301 = vpop.f32.mrf.mxu0
        %3302 = vdwg.mxu0
        %v3303 = vtanh.pop %v3051
        %v3304 = vtanh.pop %v3053
        %v3305 = vtanh.pop %v3174
        %v3306 = vtanh.pop %v3176
        %v3307 = vtanh.pop %v3297
        %v3308 = vtanh.pop %v3299
        %v3309 = vpack.c.bf16 %v3303, %v3303
        %v3310 = vpack.c.bf16 %v3304, %v3304
        %v3311 = vpack.c.bf16 %v3305, %v3305
        %v3312 = vpack.c.bf16 %v3306, %v3306
        %v3313 = vpack.c.bf16 %v3307, %v3307
        %v3314 = vpack.c.bf16 %v3308, %v3308
        %v3315 = vld [vmem:[#allocation7] sm:$0xff]
        %v3316 = vld [vmem:[#allocation7 + $0x8] sm:$0xff]
        %v3317 = vld [vmem:[#allocation7 + $0x10] sm:$0xff]
        %v3318 = vld [vmem:[#allocation7 + $0x18] sm:$0xff]
        %v3319 = vld [vmem:[#allocation7 + $0x20] sm:$0xff]
        %v3320 = vld [vmem:[#allocation7 + $0x28] sm:$0xff]
        %v3321 = vld [vmem:[#allocation7 + $0x30] sm:$0xff]
        %v3322 = vld [vmem:[#allocation7 + $0x38] sm:$0xff]
        %v3323 = vld [vmem:[#allocation7 + $0x40] sm:$0xff]
        %v3324 = vld [vmem:[#allocation7 + $0x48] sm:$0xff]
        %v3325 = vld [vmem:[#allocation7 + $0x50] sm:$0xff]
        %v3326 = vld [vmem:[#allocation7 + $0x58] sm:$0xff]
        %v3327 = vld [vmem:[#allocation7 + $0x60] sm:$0xff]
        %v3328 = vld [vmem:[#allocation7 + $0x68] sm:$0xff]
        %v3329 = vld [vmem:[#allocation7 + $0x70] sm:$0xff]
        %v3330 = vld [vmem:[#allocation7 + $0x78] sm:$0xff]
        %v3331 = vld [vmem:[#allocation7 + $0x80] sm:$0xff]
        %v3332 = vld [vmem:[#allocation7 + $0x88] sm:$0xff]
        %v3333 = vld [vmem:[#allocation7 + $0x90] sm:$0xff]
        %v3334 = vld [vmem:[#allocation7 + $0x98] sm:$0xff]
        %v3335 = vld [vmem:[#allocation7 + $0xa0] sm:$0xff]
        %v3336 = vld [vmem:[#allocation7 + $0xa8] sm:$0xff]
        %v3337 = vld [vmem:[#allocation7 + $0xb0] sm:$0xff]
        %v3338 = vld [vmem:[#allocation7 + $0xb8] sm:$0xff]
        %v3339 = vld [vmem:[#allocation7 + $0xc0] sm:$0xff]
        %v3340 = vld [vmem:[#allocation7 + $0xc8] sm:$0xff]
        %v3341 = vld [vmem:[#allocation7 + $0xd0] sm:$0xff]
        %v3342 = vld [vmem:[#allocation7 + $0xd8] sm:$0xff]
        %v3343 = vld [vmem:[#allocation7 + $0xe0] sm:$0xff]
        %v3344 = vld [vmem:[#allocation7 + $0xe8] sm:$0xff]
        %v3345 = vld [vmem:[#allocation7 + $0xf0] sm:$0xff]
        %v3346 = vld [vmem:[#allocation7 + $0xf8] sm:$0xff]
        %v3347 = vld [vmem:[#allocation7 + $0x100] sm:$0xff]
        %v3348 = vld [vmem:[#allocation7 + $0x108] sm:$0xff]
        %v3349 = vld [vmem:[#allocation7 + $0x110] sm:$0xff]
        %v3350 = vld [vmem:[#allocation7 + $0x118] sm:$0xff]
        %v3351 = vld [vmem:[#allocation7 + $0x120] sm:$0xff]
        %v3352 = vld [vmem:[#allocation7 + $0x128] sm:$0xff]
        %v3353 = vld [vmem:[#allocation7 + $0x130] sm:$0xff]
        %v3354 = vld [vmem:[#allocation7 + $0x138] sm:$0xff]
        %v3355 = vld [vmem:[#allocation7 + $0x140] sm:$0xff]
        %v3356 = vld [vmem:[#allocation7 + $0x148] sm:$0xff]
        %v3357 = vld [vmem:[#allocation7 + $0x150] sm:$0xff]
        %v3358 = vld [vmem:[#allocation7 + $0x158] sm:$0xff]
        %v3359 = vld [vmem:[#allocation7 + $0x160] sm:$0xff]
        %v3360 = vld [vmem:[#allocation7 + $0x168] sm:$0xff]
        %v3361 = vld [vmem:[#allocation7 + $0x170] sm:$0xff]
        %v3362 = vld [vmem:[#allocation7 + $0x178] sm:$0xff]
        %v3363 = vld [vmem:[#allocation7 + $0x180] sm:$0xff]
        %v3364 = vld [vmem:[#allocation7 + $0x188] sm:$0xff]
        %v3365 = vld [vmem:[#allocation7 + $0x190] sm:$0xff]
        %v3366 = vld [vmem:[#allocation7 + $0x198] sm:$0xff]
        %v3367 = vld [vmem:[#allocation7 + $0x1a0] sm:$0xff]
        %v3368 = vld [vmem:[#allocation7 + $0x1a8] sm:$0xff]
        %v3369 = vld [vmem:[#allocation7 + $0x1b0] sm:$0xff]
        %v3370 = vld [vmem:[#allocation7 + $0x1b8] sm:$0xff]
        %v3371 = vld [vmem:[#allocation7 + $0x1c0] sm:$0xff]
        %v3372 = vld [vmem:[#allocation7 + $0x1c8] sm:$0xff]
        %v3373 = vld [vmem:[#allocation7 + $0x1d0] sm:$0xff]
        %v3374 = vld [vmem:[#allocation7 + $0x1d8] sm:$0xff]
        %v3375 = vld [vmem:[#allocation7 + $0x1e0] sm:$0xff]
        %v3376 = vld [vmem:[#allocation7 + $0x1e8] sm:$0xff]
        %v3377 = vld [vmem:[#allocation7 + $0x1f0] sm:$0xff]
        %v3378 = vld [vmem:[#allocation7 + $0x1f8] sm:$0xff]
        %v3379 = vld [vmem:[#allocation7 + $0x200] sm:$0xff]
        %v3380 = vld [vmem:[#allocation7 + $0x208] sm:$0xff]
        %v3381 = vld [vmem:[#allocation7 + $0x210] sm:$0xff]
        %v3382 = vld [vmem:[#allocation7 + $0x218] sm:$0xff]
        %v3383 = vld [vmem:[#allocation7 + $0x220] sm:$0xff]
        %v3384 = vld [vmem:[#allocation7 + $0x228] sm:$0xff]
        %v3385 = vld [vmem:[#allocation7 + $0x230] sm:$0xff]
        %v3386 = vld [vmem:[#allocation7 + $0x238] sm:$0xff]
        %v3387 = vld [vmem:[#allocation7 + $0x240] sm:$0xff]
        %v3388 = vld [vmem:[#allocation7 + $0x248] sm:$0xff]
        %v3389 = vld [vmem:[#allocation7 + $0x250] sm:$0xff]
        %v3390 = vld [vmem:[#allocation7 + $0x258] sm:$0xff]
        %v3391 = vld [vmem:[#allocation7 + $0x260] sm:$0xff]
        %v3392 = vld [vmem:[#allocation7 + $0x268] sm:$0xff]
        %v3393 = vld [vmem:[#allocation7 + $0x270] sm:$0xff]
        %v3394 = vld [vmem:[#allocation7 + $0x278] sm:$0xff]
        %v3395 = vld [vmem:[#allocation7 + $0x280] sm:$0xff]
        %v3396 = vld [vmem:[#allocation7 + $0x288] sm:$0xff]
        %v3397 = vld [vmem:[#allocation7 + $0x290] sm:$0xff]
        %v3398 = vld [vmem:[#allocation7 + $0x298] sm:$0xff]
        %v3399 = vld [vmem:[#allocation7 + $0x2a0] sm:$0xff]
        %v3400 = vld [vmem:[#allocation7 + $0x2a8] sm:$0xff]
        %v3401 = vld [vmem:[#allocation7 + $0x2b0] sm:$0xff]
        %v3402 = vld [vmem:[#allocation7 + $0x2b8] sm:$0xff]
        %v3403 = vld [vmem:[#allocation7 + $0x2c0] sm:$0xff]
        %v3404 = vld [vmem:[#allocation7 + $0x2c8] sm:$0xff]
        %v3405 = vld [vmem:[#allocation7 + $0x2d0] sm:$0xff]
        %v3406 = vld [vmem:[#allocation7 + $0x2d8] sm:$0xff]
        %v3407 = vld [vmem:[#allocation7 + $0x2e0] sm:$0xff]
        %v3408 = vld [vmem:[#allocation7 + $0x2e8] sm:$0xff]
        %v3409 = vld [vmem:[#allocation7 + $0x2f0] sm:$0xff]
        %v3410 = vld [vmem:[#allocation7 + $0x2f8] sm:$0xff]
        %v3411 = vld [vmem:[#allocation7 + $0x300] sm:$0xff]
        %v3412 = vld [vmem:[#allocation7 + $0x308] sm:$0xff]
        %v3413 = vld [vmem:[#allocation7 + $0x310] sm:$0xff]
        %v3414 = vld [vmem:[#allocation7 + $0x318] sm:$0xff]
        %v3415 = vld [vmem:[#allocation7 + $0x320] sm:$0xff]
        %v3416 = vld [vmem:[#allocation7 + $0x328] sm:$0xff]
        %v3417 = vld [vmem:[#allocation7 + $0x330] sm:$0xff]
        %v3418 = vld [vmem:[#allocation7 + $0x338] sm:$0xff]
        %v3419 = vld [vmem:[#allocation7 + $0x340] sm:$0xff]
        %v3420 = vld [vmem:[#allocation7 + $0x348] sm:$0xff]
        %v3421 = vld [vmem:[#allocation7 + $0x350] sm:$0xff]
        %v3422 = vld [vmem:[#allocation7 + $0x358] sm:$0xff]
        %v3423 = vld [vmem:[#allocation7 + $0x360] sm:$0xff]
        %v3424 = vld [vmem:[#allocation7 + $0x368] sm:$0xff]
        %v3425 = vld [vmem:[#allocation7 + $0x370] sm:$0xff]
        %v3426 = vld [vmem:[#allocation7 + $0x378] sm:$0xff]
        %v3427 = vld [vmem:[#allocation7 + $0x380] sm:$0xff]
        %v3428 = vld [vmem:[#allocation7 + $0x388] sm:$0xff]
        %v3429 = vld [vmem:[#allocation7 + $0x390] sm:$0xff]
        %v3430 = vld [vmem:[#allocation7 + $0x398] sm:$0xff]
        %v3431 = vld [vmem:[#allocation7 + $0x3a0] sm:$0xff]
        %v3432 = vld [vmem:[#allocation7 + $0x3a8] sm:$0xff]
        %v3433 = vld [vmem:[#allocation7 + $0x3b0] sm:$0xff]
        %v3434 = vld [vmem:[#allocation7 + $0x3b8] sm:$0xff]
        %v3435 = vld [vmem:[#allocation7 + $0x3c0] sm:$0xff]
        %v3436 = vld [vmem:[#allocation7 + $0x3c8] sm:$0xff]
        %v3437 = vld [vmem:[#allocation7 + $0x3d0] sm:$0xff]
        %v3438 = vld [vmem:[#allocation7 + $0x3d8] sm:$0xff]
        %v3439 = vld [vmem:[#allocation7 + $0x3e0] sm:$0xff]
        %v3440 = vld [vmem:[#allocation7 + $0x3e8] sm:$0xff]
        %v3441 = vld [vmem:[#allocation7 + $0x3f0] sm:$0xff]
        %v3442 = vld [vmem:[#allocation7 + $0x3f8] sm:$0xff]
        %v3443 = vld [vmem:[#allocation7 + $0x400] sm:$0xff]
        %v3444 = vld [vmem:[#allocation7 + $0x408] sm:$0xff]
        %v3445 = vld [vmem:[#allocation7 + $0x410] sm:$0xff]
        %v3446 = vld [vmem:[#allocation7 + $0x418] sm:$0xff]
        %v3447 = vld [vmem:[#allocation7 + $0x420] sm:$0xff]
        %v3448 = vld [vmem:[#allocation7 + $0x428] sm:$0xff]
        %v3449 = vld [vmem:[#allocation7 + $0x430] sm:$0xff]
        %v3450 = vld [vmem:[#allocation7 + $0x438] sm:$0xff]
        %v3451 = vld [vmem:[#allocation7 + $0x440] sm:$0xff]
        %v3452 = vld [vmem:[#allocation7 + $0x448] sm:$0xff]
        %v3453 = vld [vmem:[#allocation7 + $0x450] sm:$0xff]
        %v3454 = vld [vmem:[#allocation7 + $0x458] sm:$0xff]
        %v3455 = vld [vmem:[#allocation7 + $0x460] sm:$0xff]
        %v3456 = vld [vmem:[#allocation7 + $0x468] sm:$0xff]
        %v3457 = vld [vmem:[#allocation7 + $0x470] sm:$0xff]
        %v3458 = vld [vmem:[#allocation7 + $0x478] sm:$0xff]
        %v3459 = vld [vmem:[#allocation7 + $0x480] sm:$0xff]
        %v3460 = vld [vmem:[#allocation7 + $0x488] sm:$0xff]
        %v3461 = vld [vmem:[#allocation7 + $0x490] sm:$0xff]
        %v3462 = vld [vmem:[#allocation7 + $0x498] sm:$0xff]
        %v3463 = vld [vmem:[#allocation7 + $0x4a0] sm:$0xff]
        %v3464 = vld [vmem:[#allocation7 + $0x4a8] sm:$0xff]
        %v3465 = vld [vmem:[#allocation7 + $0x4b0] sm:$0xff]
        %v3466 = vld [vmem:[#allocation7 + $0x4b8] sm:$0xff]
        %v3467 = vld [vmem:[#allocation7 + $0x4c0] sm:$0xff]
        %v3468 = vld [vmem:[#allocation7 + $0x4c8] sm:$0xff]
        %v3469 = vld [vmem:[#allocation7 + $0x4d0] sm:$0xff]
        %v3470 = vld [vmem:[#allocation7 + $0x4d8] sm:$0xff]
        %v3471 = vld [vmem:[#allocation7 + $0x4e0] sm:$0xff]
        %v3472 = vld [vmem:[#allocation7 + $0x4e8] sm:$0xff]
        %v3473 = vld [vmem:[#allocation7 + $0x4f0] sm:$0xff]
        %v3474 = vld [vmem:[#allocation7 + $0x4f8] sm:$0xff]
        %v3475 = vld [vmem:[#allocation7 + $0x500] sm:$0xff]
        %v3476 = vld [vmem:[#allocation7 + $0x508] sm:$0xff]
        %v3477 = vld [vmem:[#allocation7 + $0x510] sm:$0xff]
        %v3478 = vld [vmem:[#allocation7 + $0x518] sm:$0xff]
        %v3479 = vld [vmem:[#allocation7 + $0x520] sm:$0xff]
        %v3480 = vld [vmem:[#allocation7 + $0x528] sm:$0xff]
        %v3481 = vld [vmem:[#allocation7 + $0x530] sm:$0xff]
        %v3482 = vld [vmem:[#allocation7 + $0x538] sm:$0xff]
        %v3483 = vld [vmem:[#allocation7 + $0x540] sm:$0xff]
        %v3484 = vld [vmem:[#allocation7 + $0x548] sm:$0xff]
        %v3485 = vld [vmem:[#allocation7 + $0x550] sm:$0xff]
        %v3486 = vld [vmem:[#allocation7 + $0x558] sm:$0xff]
        %v3487 = vld [vmem:[#allocation7 + $0x560] sm:$0xff]
        %v3488 = vld [vmem:[#allocation7 + $0x568] sm:$0xff]
        %v3489 = vld [vmem:[#allocation7 + $0x570] sm:$0xff]
        %v3490 = vld [vmem:[#allocation7 + $0x578] sm:$0xff]
        %v3491 = vld [vmem:[#allocation7 + $0x580] sm:$0xff]
        %v3492 = vld [vmem:[#allocation7 + $0x588] sm:$0xff]
        %v3493 = vld [vmem:[#allocation7 + $0x590] sm:$0xff]
        %v3494 = vld [vmem:[#allocation7 + $0x598] sm:$0xff]
        %v3495 = vld [vmem:[#allocation7 + $0x5a0] sm:$0xff]
        %v3496 = vld [vmem:[#allocation7 + $0x5a8] sm:$0xff]
        %v3497 = vld [vmem:[#allocation7 + $0x5b0] sm:$0xff]
        %v3498 = vld [vmem:[#allocation7 + $0x5b8] sm:$0xff]
        %v3499 = vld [vmem:[#allocation7 + $0x5c0] sm:$0xff]
        %v3500 = vld [vmem:[#allocation7 + $0x5c8] sm:$0xff]
        %v3501 = vld [vmem:[#allocation7 + $0x5d0] sm:$0xff]
        %v3502 = vld [vmem:[#allocation7 + $0x5d8] sm:$0xff]
        %v3503 = vld [vmem:[#allocation7 + $0x5e0] sm:$0xff]
        %v3504 = vld [vmem:[#allocation7 + $0x5e8] sm:$0xff]
        %v3505 = vld [vmem:[#allocation7 + $0x5f0] sm:$0xff]
        %v3506 = vld [vmem:[#allocation7 + $0x5f8] sm:$0xff]
        %v3507 = vld [vmem:[#allocation9] sm:$0xf]
        %v3509 = vlaneseq
        %v3510 = vshrl.u32 %v3509, 7
        %v3511 = vsub.s32 0, %v3510
        %v3512 = vrot.slane %v3507, %v3511
        %v3513 = vlaneseq
        %v3514 = vshrl.u32 %v3513, 7
        %v3515 = vsub.s32 1, %v3514
        %v3516 = vrot.slane %v3507, %v3515
        %v3517 = vlaneseq
        %v3518 = vshrl.u32 %v3517, 7
        %v3519 = vsub.s32 2, %v3518
        %v3520 = vrot.slane %v3507, %v3519
        %v3521 = vlaneseq
        %v3522 = vshrl.u32 %v3521, 7
        %v3523 = vsub.s32 3, %v3522
        %v3524 = vrot.slane %v3507, %v3523
        %v3721 = vunpack.c.l.b16 %v3315
        %v3722 = vunpack.c.h.b16 %v3315
        %v3723 = vunpack.c.l.b16 %v3316
        %v3724 = vunpack.c.h.b16 %v3316
        %v3725 = vunpack.c.l.b16 %v3317
        %v3726 = vunpack.c.h.b16 %v3317
        %v3727 = vunpack.c.l.b16 %v3318
        %v3728 = vunpack.c.h.b16 %v3318
        %v3729 = vunpack.c.l.b16 %v3319
        %v3730 = vunpack.c.h.b16 %v3319
        %v3731 = vunpack.c.l.b16 %v3320
        %v3732 = vunpack.c.h.b16 %v3320
        %v3733 = vunpack.c.l.b16 %v3321
        %v3734 = vunpack.c.h.b16 %v3321
        %v3735 = vunpack.c.l.b16 %v3322
        %v3736 = vunpack.c.h.b16 %v3322
        %v3737 = vunpack.c.l.b16 %v3323
        %v3738 = vunpack.c.h.b16 %v3323
        %v3739 = vunpack.c.l.b16 %v3324
        %v3740 = vunpack.c.h.b16 %v3324
        %v3741 = vunpack.c.l.b16 %v3325
        %v3742 = vunpack.c.h.b16 %v3325
        %v3743 = vunpack.c.l.b16 %v3326
        %v3744 = vunpack.c.h.b16 %v3326
        %v3745 = vunpack.c.l.b16 %v3327
        %v3746 = vunpack.c.h.b16 %v3327
        %v3747 = vunpack.c.l.b16 %v3328
        %v3748 = vunpack.c.h.b16 %v3328
        %v3749 = vunpack.c.l.b16 %v3329
        %v3750 = vunpack.c.h.b16 %v3329
        %v3751 = vunpack.c.l.b16 %v3330
        %v3752 = vunpack.c.h.b16 %v3330
        %v3753 = vunpack.c.l.b16 %v3331
        %v3754 = vunpack.c.h.b16 %v3331
        %v3755 = vunpack.c.l.b16 %v3332
        %v3756 = vunpack.c.h.b16 %v3332
        %v3757 = vunpack.c.l.b16 %v3333
        %v3758 = vunpack.c.h.b16 %v3333
        %v3759 = vunpack.c.l.b16 %v3334
        %v3760 = vunpack.c.h.b16 %v3334
        %v3761 = vunpack.c.l.b16 %v3335
        %v3762 = vunpack.c.h.b16 %v3335
        %v3763 = vunpack.c.l.b16 %v3336
        %v3764 = vunpack.c.h.b16 %v3336
        %v3765 = vunpack.c.l.b16 %v3337
        %v3766 = vunpack.c.h.b16 %v3337
        %v3767 = vunpack.c.l.b16 %v3338
        %v3768 = vunpack.c.h.b16 %v3338
        %v3769 = vunpack.c.l.b16 %v3339
        %v3770 = vunpack.c.h.b16 %v3339
        %v3771 = vunpack.c.l.b16 %v3340
        %v3772 = vunpack.c.h.b16 %v3340
        %v3773 = vunpack.c.l.b16 %v3341
        %v3774 = vunpack.c.h.b16 %v3341
        %v3775 = vunpack.c.l.b16 %v3342
        %v3776 = vunpack.c.h.b16 %v3342
        %v3777 = vunpack.c.l.b16 %v3343
        %v3778 = vunpack.c.h.b16 %v3343
        %v3779 = vunpack.c.l.b16 %v3344
        %v3780 = vunpack.c.h.b16 %v3344
        %v3781 = vunpack.c.l.b16 %v3345
        %v3782 = vunpack.c.h.b16 %v3345
        %v3783 = vunpack.c.l.b16 %v3346
        %v3784 = vunpack.c.h.b16 %v3346
        %v3785 = vunpack.c.l.b16 %v3347
        %v3786 = vunpack.c.h.b16 %v3347
        %v3787 = vunpack.c.l.b16 %v3348
        %v3788 = vunpack.c.h.b16 %v3348
        %v3789 = vunpack.c.l.b16 %v3349
        %v3790 = vunpack.c.h.b16 %v3349
        %v3791 = vunpack.c.l.b16 %v3350
        %v3792 = vunpack.c.h.b16 %v3350
        %v3793 = vunpack.c.l.b16 %v3351
        %v3794 = vunpack.c.h.b16 %v3351
        %v3795 = vunpack.c.l.b16 %v3352
        %v3796 = vunpack.c.h.b16 %v3352
        %v3797 = vunpack.c.l.b16 %v3353
        %v3798 = vunpack.c.h.b16 %v3353
        %v3799 = vunpack.c.l.b16 %v3354
        %v3800 = vunpack.c.h.b16 %v3354
        %v3801 = vunpack.c.l.b16 %v3355
        %v3802 = vunpack.c.h.b16 %v3355
        %v3803 = vunpack.c.l.b16 %v3356
        %v3804 = vunpack.c.h.b16 %v3356
        %v3805 = vunpack.c.l.b16 %v3357
        %v3806 = vunpack.c.h.b16 %v3357
        %v3807 = vunpack.c.l.b16 %v3358
        %v3808 = vunpack.c.h.b16 %v3358
        %v3809 = vunpack.c.l.b16 %v3359
        %v3810 = vunpack.c.h.b16 %v3359
        %v3811 = vunpack.c.l.b16 %v3360
        %v3812 = vunpack.c.h.b16 %v3360
        %v3813 = vunpack.c.l.b16 %v3361
        %v3814 = vunpack.c.h.b16 %v3361
        %v3815 = vunpack.c.l.b16 %v3362
        %v3816 = vunpack.c.h.b16 %v3362
        %v3817 = vunpack.c.l.b16 %v3363
        %v3818 = vunpack.c.h.b16 %v3363
        %v3819 = vunpack.c.l.b16 %v3364
        %v3820 = vunpack.c.h.b16 %v3364
        %v3821 = vunpack.c.l.b16 %v3365
        %v3822 = vunpack.c.h.b16 %v3365
        %v3823 = vunpack.c.l.b16 %v3366
        %v3824 = vunpack.c.h.b16 %v3366
        %v3825 = vunpack.c.l.b16 %v3367
        %v3826 = vunpack.c.h.b16 %v3367
        %v3827 = vunpack.c.l.b16 %v3368
        %v3828 = vunpack.c.h.b16 %v3368
        %v3829 = vunpack.c.l.b16 %v3369
        %v3830 = vunpack.c.h.b16 %v3369
        %v3831 = vunpack.c.l.b16 %v3370
        %v3832 = vunpack.c.h.b16 %v3370
        %v3833 = vunpack.c.l.b16 %v3371
        %v3834 = vunpack.c.h.b16 %v3371
        %v3835 = vunpack.c.l.b16 %v3372
        %v3836 = vunpack.c.h.b16 %v3372
        %v3837 = vunpack.c.l.b16 %v3373
        %v3838 = vunpack.c.h.b16 %v3373
        %v3839 = vunpack.c.l.b16 %v3374
        %v3840 = vunpack.c.h.b16 %v3374
        %v3841 = vunpack.c.l.b16 %v3375
        %v3842 = vunpack.c.h.b16 %v3375
        %v3843 = vunpack.c.l.b16 %v3376
        %v3844 = vunpack.c.h.b16 %v3376
        %v3845 = vunpack.c.l.b16 %v3377
        %v3846 = vunpack.c.h.b16 %v3377
        %v3847 = vunpack.c.l.b16 %v3378
        %v3848 = vunpack.c.h.b16 %v3378
        %v3849 = vunpack.c.l.b16 %v3379
        %v3850 = vunpack.c.h.b16 %v3379
        %v3851 = vunpack.c.l.b16 %v3380
        %v3852 = vunpack.c.h.b16 %v3380
        %v3853 = vunpack.c.l.b16 %v3381
        %v3854 = vunpack.c.h.b16 %v3381
        %v3855 = vunpack.c.l.b16 %v3382
        %v3856 = vunpack.c.h.b16 %v3382
        %v3857 = vunpack.c.l.b16 %v3383
        %v3858 = vunpack.c.h.b16 %v3383
        %v3859 = vunpack.c.l.b16 %v3384
        %v3860 = vunpack.c.h.b16 %v3384
        %v3861 = vunpack.c.l.b16 %v3385
        %v3862 = vunpack.c.h.b16 %v3385
        %v3863 = vunpack.c.l.b16 %v3386
        %v3864 = vunpack.c.h.b16 %v3386
        %v3865 = vunpack.c.l.b16 %v3387
        %v3866 = vunpack.c.h.b16 %v3387
        %v3867 = vunpack.c.l.b16 %v3388
        %v3868 = vunpack.c.h.b16 %v3388
        %v3869 = vunpack.c.l.b16 %v3389
        %v3870 = vunpack.c.h.b16 %v3389
        %v3871 = vunpack.c.l.b16 %v3390
        %v3872 = vunpack.c.h.b16 %v3390
        %v3873 = vunpack.c.l.b16 %v3391
        %v3874 = vunpack.c.h.b16 %v3391
        %v3875 = vunpack.c.l.b16 %v3392
        %v3876 = vunpack.c.h.b16 %v3392
        %v3877 = vunpack.c.l.b16 %v3393
        %v3878 = vunpack.c.h.b16 %v3393
        %v3879 = vunpack.c.l.b16 %v3394
        %v3880 = vunpack.c.h.b16 %v3394
        %v3881 = vunpack.c.l.b16 %v3395
        %v3882 = vunpack.c.h.b16 %v3395
        %v3883 = vunpack.c.l.b16 %v3396
        %v3884 = vunpack.c.h.b16 %v3396
        %v3885 = vunpack.c.l.b16 %v3397
        %v3886 = vunpack.c.h.b16 %v3397
        %v3887 = vunpack.c.l.b16 %v3398
        %v3888 = vunpack.c.h.b16 %v3398
        %v3889 = vunpack.c.l.b16 %v3399
        %v3890 = vunpack.c.h.b16 %v3399
        %v3891 = vunpack.c.l.b16 %v3400
        %v3892 = vunpack.c.h.b16 %v3400
        %v3893 = vunpack.c.l.b16 %v3401
        %v3894 = vunpack.c.h.b16 %v3401
        %v3895 = vunpack.c.l.b16 %v3402
        %v3896 = vunpack.c.h.b16 %v3402
        %v3897 = vunpack.c.l.b16 %v3403
        %v3898 = vunpack.c.h.b16 %v3403
        %v3899 = vunpack.c.l.b16 %v3404
        %v3900 = vunpack.c.h.b16 %v3404
        %v3901 = vunpack.c.l.b16 %v3405
        %v3902 = vunpack.c.h.b16 %v3405
        %v3903 = vunpack.c.l.b16 %v3406
        %v3904 = vunpack.c.h.b16 %v3406
        %v3905 = vunpack.c.l.b16 %v3407
        %v3906 = vunpack.c.h.b16 %v3407
        %v3907 = vunpack.c.l.b16 %v3408
        %v3908 = vunpack.c.h.b16 %v3408
        %v3909 = vunpack.c.l.b16 %v3409
        %v3910 = vunpack.c.h.b16 %v3409
        %v3911 = vunpack.c.l.b16 %v3410
        %v3912 = vunpack.c.h.b16 %v3410
        %v3913 = vunpack.c.l.b16 %v3411
        %v3914 = vunpack.c.h.b16 %v3411
        %v3915 = vunpack.c.l.b16 %v3412
        %v3916 = vunpack.c.h.b16 %v3412
        %v3917 = vunpack.c.l.b16 %v3413
        %v3918 = vunpack.c.h.b16 %v3413
        %v3919 = vunpack.c.l.b16 %v3414
        %v3920 = vunpack.c.h.b16 %v3414
        %v3921 = vunpack.c.l.b16 %v3415
        %v3922 = vunpack.c.h.b16 %v3415
        %v3923 = vunpack.c.l.b16 %v3416
        %v3924 = vunpack.c.h.b16 %v3416
        %v3925 = vunpack.c.l.b16 %v3417
        %v3926 = vunpack.c.h.b16 %v3417
        %v3927 = vunpack.c.l.b16 %v3418
        %v3928 = vunpack.c.h.b16 %v3418
        %v3929 = vunpack.c.l.b16 %v3419
        %v3930 = vunpack.c.h.b16 %v3419
        %v3931 = vunpack.c.l.b16 %v3420
        %v3932 = vunpack.c.h.b16 %v3420
        %v3933 = vunpack.c.l.b16 %v3421
        %v3934 = vunpack.c.h.b16 %v3421
        %v3935 = vunpack.c.l.b16 %v3422
        %v3936 = vunpack.c.h.b16 %v3422
        %v3937 = vunpack.c.l.b16 %v3423
        %v3938 = vunpack.c.h.b16 %v3423
        %v3939 = vunpack.c.l.b16 %v3424
        %v3940 = vunpack.c.h.b16 %v3424
        %v3941 = vunpack.c.l.b16 %v3425
        %v3942 = vunpack.c.h.b16 %v3425
        %v3943 = vunpack.c.l.b16 %v3426
        %v3944 = vunpack.c.h.b16 %v3426
        %v3945 = vunpack.c.l.b16 %v3427
        %v3946 = vunpack.c.h.b16 %v3427
        %v3947 = vunpack.c.l.b16 %v3428
        %v3948 = vunpack.c.h.b16 %v3428
        %v3949 = vunpack.c.l.b16 %v3429
        %v3950 = vunpack.c.h.b16 %v3429
        %v3951 = vunpack.c.l.b16 %v3430
        %v3952 = vunpack.c.h.b16 %v3430
        %v3953 = vunpack.c.l.b16 %v3431
        %v3954 = vunpack.c.h.b16 %v3431
        %v3955 = vunpack.c.l.b16 %v3432
        %v3956 = vunpack.c.h.b16 %v3432
        %v3957 = vunpack.c.l.b16 %v3433
        %v3958 = vunpack.c.h.b16 %v3433
        %v3959 = vunpack.c.l.b16 %v3434
        %v3960 = vunpack.c.h.b16 %v3434
        %v3961 = vunpack.c.l.b16 %v3435
        %v3962 = vunpack.c.h.b16 %v3435
        %v3963 = vunpack.c.l.b16 %v3436
        %v3964 = vunpack.c.h.b16 %v3436
        %v3965 = vunpack.c.l.b16 %v3437
        %v3966 = vunpack.c.h.b16 %v3437
        %v3967 = vunpack.c.l.b16 %v3438
        %v3968 = vunpack.c.h.b16 %v3438
        %v3969 = vunpack.c.l.b16 %v3439
        %v3970 = vunpack.c.h.b16 %v3439
        %v3971 = vunpack.c.l.b16 %v3440
        %v3972 = vunpack.c.h.b16 %v3440
        %v3973 = vunpack.c.l.b16 %v3441
        %v3974 = vunpack.c.h.b16 %v3441
        %v3975 = vunpack.c.l.b16 %v3442
        %v3976 = vunpack.c.h.b16 %v3442
        %v3977 = vunpack.c.l.b16 %v3443
        %v3978 = vunpack.c.h.b16 %v3443
        %v3979 = vunpack.c.l.b16 %v3444
        %v3980 = vunpack.c.h.b16 %v3444
        %v3981 = vunpack.c.l.b16 %v3445
        %v3982 = vunpack.c.h.b16 %v3445
        %v3983 = vunpack.c.l.b16 %v3446
        %v3984 = vunpack.c.h.b16 %v3446
        %v3985 = vunpack.c.l.b16 %v3447
        %v3986 = vunpack.c.h.b16 %v3447
        %v3987 = vunpack.c.l.b16 %v3448
        %v3988 = vunpack.c.h.b16 %v3448
        %v3989 = vunpack.c.l.b16 %v3449
        %v3990 = vunpack.c.h.b16 %v3449
        %v3991 = vunpack.c.l.b16 %v3450
        %v3992 = vunpack.c.h.b16 %v3450
        %v3993 = vunpack.c.l.b16 %v3451
        %v3994 = vunpack.c.h.b16 %v3451
        %v3995 = vunpack.c.l.b16 %v3452
        %v3996 = vunpack.c.h.b16 %v3452
        %v3997 = vunpack.c.l.b16 %v3453
        %v3998 = vunpack.c.h.b16 %v3453
        %v3999 = vunpack.c.l.b16 %v3454
        %v4000 = vunpack.c.h.b16 %v3454
        %v4001 = vunpack.c.l.b16 %v3455
        %v4002 = vunpack.c.h.b16 %v3455
        %v4003 = vunpack.c.l.b16 %v3456
        %v4004 = vunpack.c.h.b16 %v3456
        %v4005 = vunpack.c.l.b16 %v3457
        %v4006 = vunpack.c.h.b16 %v3457
        %v4007 = vunpack.c.l.b16 %v3458
        %v4008 = vunpack.c.h.b16 %v3458
        %v4009 = vunpack.c.l.b16 %v3459
        %v4010 = vunpack.c.h.b16 %v3459
        %v4011 = vunpack.c.l.b16 %v3460
        %v4012 = vunpack.c.h.b16 %v3460
        %v4013 = vunpack.c.l.b16 %v3461
        %v4014 = vunpack.c.h.b16 %v3461
        %v4015 = vunpack.c.l.b16 %v3462
        %v4016 = vunpack.c.h.b16 %v3462
        %v4017 = vunpack.c.l.b16 %v3463
        %v4018 = vunpack.c.h.b16 %v3463
        %v4019 = vunpack.c.l.b16 %v3464
        %v4020 = vunpack.c.h.b16 %v3464
        %v4021 = vunpack.c.l.b16 %v3465
        %v4022 = vunpack.c.h.b16 %v3465
        %v4023 = vunpack.c.l.b16 %v3466
        %v4024 = vunpack.c.h.b16 %v3466
        %v4025 = vunpack.c.l.b16 %v3467
        %v4026 = vunpack.c.h.b16 %v3467
        %v4027 = vunpack.c.l.b16 %v3468
        %v4028 = vunpack.c.h.b16 %v3468
        %v4029 = vunpack.c.l.b16 %v3469
        %v4030 = vunpack.c.h.b16 %v3469
        %v4031 = vunpack.c.l.b16 %v3470
        %v4032 = vunpack.c.h.b16 %v3470
        %v4033 = vunpack.c.l.b16 %v3471
        %v4034 = vunpack.c.h.b16 %v3471
        %v4035 = vunpack.c.l.b16 %v3472
        %v4036 = vunpack.c.h.b16 %v3472
        %v4037 = vunpack.c.l.b16 %v3473
        %v4038 = vunpack.c.h.b16 %v3473
        %v4039 = vunpack.c.l.b16 %v3474
        %v4040 = vunpack.c.h.b16 %v3474
        %v4041 = vunpack.c.l.b16 %v3475
        %v4042 = vunpack.c.h.b16 %v3475
        %v4043 = vunpack.c.l.b16 %v3476
        %v4044 = vunpack.c.h.b16 %v3476
        %v4045 = vunpack.c.l.b16 %v3477
        %v4046 = vunpack.c.h.b16 %v3477
        %v4047 = vunpack.c.l.b16 %v3478
        %v4048 = vunpack.c.h.b16 %v3478
        %v4049 = vunpack.c.l.b16 %v3479
        %v4050 = vunpack.c.h.b16 %v3479
        %v4051 = vunpack.c.l.b16 %v3480
        %v4052 = vunpack.c.h.b16 %v3480
        %v4053 = vunpack.c.l.b16 %v3481
        %v4054 = vunpack.c.h.b16 %v3481
        %v4055 = vunpack.c.l.b16 %v3482
        %v4056 = vunpack.c.h.b16 %v3482
        %v4057 = vunpack.c.l.b16 %v3483
        %v4058 = vunpack.c.h.b16 %v3483
        %v4059 = vunpack.c.l.b16 %v3484
        %v4060 = vunpack.c.h.b16 %v3484
        %v4061 = vunpack.c.l.b16 %v3485
        %v4062 = vunpack.c.h.b16 %v3485
        %v4063 = vunpack.c.l.b16 %v3486
        %v4064 = vunpack.c.h.b16 %v3486
        %v4065 = vunpack.c.l.b16 %v3487
        %v4066 = vunpack.c.h.b16 %v3487
        %v4067 = vunpack.c.l.b16 %v3488
        %v4068 = vunpack.c.h.b16 %v3488
        %v4069 = vunpack.c.l.b16 %v3489
        %v4070 = vunpack.c.h.b16 %v3489
        %v4071 = vunpack.c.l.b16 %v3490
        %v4072 = vunpack.c.h.b16 %v3490
        %v4073 = vunpack.c.l.b16 %v3491
        %v4074 = vunpack.c.h.b16 %v3491
        %v4075 = vunpack.c.l.b16 %v3492
        %v4076 = vunpack.c.h.b16 %v3492
        %v4077 = vunpack.c.l.b16 %v3493
        %v4078 = vunpack.c.h.b16 %v3493
        %v4079 = vunpack.c.l.b16 %v3494
        %v4080 = vunpack.c.h.b16 %v3494
        %v4081 = vunpack.c.l.b16 %v3495
        %v4082 = vunpack.c.h.b16 %v3495
        %v4083 = vunpack.c.l.b16 %v3496
        %v4084 = vunpack.c.h.b16 %v3496
        %v4085 = vunpack.c.l.b16 %v3497
        %v4086 = vunpack.c.h.b16 %v3497
        %v4087 = vunpack.c.l.b16 %v3498
        %v4088 = vunpack.c.h.b16 %v3498
        %v4089 = vunpack.c.l.b16 %v3499
        %v4090 = vunpack.c.h.b16 %v3499
        %v4091 = vunpack.c.l.b16 %v3500
        %v4092 = vunpack.c.h.b16 %v3500
        %v4093 = vunpack.c.l.b16 %v3501
        %v4094 = vunpack.c.h.b16 %v3501
        %v4095 = vunpack.c.l.b16 %v3502
        %v4096 = vunpack.c.h.b16 %v3502
        %v4097 = vunpack.c.l.b16 %v3503
        %v4098 = vunpack.c.h.b16 %v3503
        %v4099 = vunpack.c.l.b16 %v3504
        %v4100 = vunpack.c.h.b16 %v3504
        %v4101 = vunpack.c.l.b16 %v3505
        %v4102 = vunpack.c.h.b16 %v3505
        %v4103 = vunpack.c.l.b16 %v3506
        %v4104 = vunpack.c.h.b16 %v3506
        %v4105 = vpack.c.b16 %v3725, %v3721
        %v4106 = vpack.c.b16 %v3726, %v3722
        %v4107 = vpack.c.b16 %v3727, %v3723
        %v4108 = vpack.c.b16 %v3728, %v3724
        %v4109 = vpack.c.b16 %v3733, %v3729
        %v4110 = vpack.c.b16 %v3734, %v3730
        %v4111 = vpack.c.b16 %v3735, %v3731
        %v4112 = vpack.c.b16 %v3736, %v3732
        %v4113 = vpack.c.b16 %v3741, %v3737
        %v4114 = vpack.c.b16 %v3742, %v3738
        %v4115 = vpack.c.b16 %v3743, %v3739
        %v4116 = vpack.c.b16 %v3744, %v3740
        %v4117 = vpack.c.b16 %v3749, %v3745
        %v4118 = vpack.c.b16 %v3750, %v3746
        %v4119 = vpack.c.b16 %v3751, %v3747
        %v4120 = vpack.c.b16 %v3752, %v3748
        %v4121 = vpack.c.b16 %v3757, %v3753
        %v4122 = vpack.c.b16 %v3758, %v3754
        %v4123 = vpack.c.b16 %v3759, %v3755
        %v4124 = vpack.c.b16 %v3760, %v3756
        %v4125 = vpack.c.b16 %v3765, %v3761
        %v4126 = vpack.c.b16 %v3766, %v3762
        %v4127 = vpack.c.b16 %v3767, %v3763
        %v4128 = vpack.c.b16 %v3768, %v3764
        %v4129 = vpack.c.b16 %v3773, %v3769
        %v4130 = vpack.c.b16 %v3774, %v3770
        %v4131 = vpack.c.b16 %v3775, %v3771
        %v4132 = vpack.c.b16 %v3776, %v3772
        %v4133 = vpack.c.b16 %v3781, %v3777
        %v4134 = vpack.c.b16 %v3782, %v3778
        %v4135 = vpack.c.b16 %v3783, %v3779
        %v4136 = vpack.c.b16 %v3784, %v3780
        %v4137 = vpack.c.b16 %v3789, %v3785
        %v4138 = vpack.c.b16 %v3790, %v3786
        %v4139 = vpack.c.b16 %v3791, %v3787
        %v4140 = vpack.c.b16 %v3792, %v3788
        %v4141 = vpack.c.b16 %v3797, %v3793
        %v4142 = vpack.c.b16 %v3798, %v3794
        %v4143 = vpack.c.b16 %v3799, %v3795
        %v4144 = vpack.c.b16 %v3800, %v3796
        %v4145 = vpack.c.b16 %v3805, %v3801
        %v4146 = vpack.c.b16 %v3806, %v3802
        %v4147 = vpack.c.b16 %v3807, %v3803
        %v4148 = vpack.c.b16 %v3808, %v3804
        %v4149 = vpack.c.b16 %v3813, %v3809
        %v4150 = vpack.c.b16 %v3814, %v3810
        %v4151 = vpack.c.b16 %v3815, %v3811
        %v4152 = vpack.c.b16 %v3816, %v3812
        %v4153 = vpack.c.b16 %v3821, %v3817
        %v4154 = vpack.c.b16 %v3822, %v3818
        %v4155 = vpack.c.b16 %v3823, %v3819
        %v4156 = vpack.c.b16 %v3824, %v3820
        %v4157 = vpack.c.b16 %v3829, %v3825
        %v4158 = vpack.c.b16 %v3830, %v3826
        %v4159 = vpack.c.b16 %v3831, %v3827
        %v4160 = vpack.c.b16 %v3832, %v3828
        %v4161 = vpack.c.b16 %v3837, %v3833
        %v4162 = vpack.c.b16 %v3838, %v3834
        %v4163 = vpack.c.b16 %v3839, %v3835
        %v4164 = vpack.c.b16 %v3840, %v3836
        %v4165 = vpack.c.b16 %v3845, %v3841
        %v4166 = vpack.c.b16 %v3846, %v3842
        %v4167 = vpack.c.b16 %v3847, %v3843
        %v4168 = vpack.c.b16 %v3848, %v3844
        %v4169 = vpack.c.b16 %v3853, %v3849
        %v4170 = vpack.c.b16 %v3854, %v3850
        %v4171 = vpack.c.b16 %v3855, %v3851
        %v4172 = vpack.c.b16 %v3856, %v3852
        %v4173 = vpack.c.b16 %v3861, %v3857
        %v4174 = vpack.c.b16 %v3862, %v3858
        %v4175 = vpack.c.b16 %v3863, %v3859
        %v4176 = vpack.c.b16 %v3864, %v3860
        %v4177 = vpack.c.b16 %v3869, %v3865
        %v4178 = vpack.c.b16 %v3870, %v3866
        %v4179 = vpack.c.b16 %v3871, %v3867
        %v4180 = vpack.c.b16 %v3872, %v3868
        %v4181 = vpack.c.b16 %v3877, %v3873
        %v4182 = vpack.c.b16 %v3878, %v3874
        %v4183 = vpack.c.b16 %v3879, %v3875
        %v4184 = vpack.c.b16 %v3880, %v3876
        %v4185 = vpack.c.b16 %v3885, %v3881
        %v4186 = vpack.c.b16 %v3886, %v3882
        %v4187 = vpack.c.b16 %v3887, %v3883
        %v4188 = vpack.c.b16 %v3888, %v3884
        %v4189 = vpack.c.b16 %v3893, %v3889
        %v4190 = vpack.c.b16 %v3894, %v3890
        %v4191 = vpack.c.b16 %v3895, %v3891
        %v4192 = vpack.c.b16 %v3896, %v3892
        %v4193 = vpack.c.b16 %v3901, %v3897
        %v4194 = vpack.c.b16 %v3902, %v3898
        %v4195 = vpack.c.b16 %v3903, %v3899
        %v4196 = vpack.c.b16 %v3904, %v3900
        %v4197 = vpack.c.b16 %v3909, %v3905
        %v4198 = vpack.c.b16 %v3910, %v3906
        %v4199 = vpack.c.b16 %v3911, %v3907
        %v4200 = vpack.c.b16 %v3912, %v3908
        %v4201 = vpack.c.b16 %v3917, %v3913
        %v4202 = vpack.c.b16 %v3918, %v3914
        %v4203 = vpack.c.b16 %v3919, %v3915
        %v4204 = vpack.c.b16 %v3920, %v3916
        %v4205 = vpack.c.b16 %v3925, %v3921
        %v4206 = vpack.c.b16 %v3926, %v3922
        %v4207 = vpack.c.b16 %v3927, %v3923
        %v4208 = vpack.c.b16 %v3928, %v3924
        %v4209 = vpack.c.b16 %v3933, %v3929
        %v4210 = vpack.c.b16 %v3934, %v3930
        %v4211 = vpack.c.b16 %v3935, %v3931
        %v4212 = vpack.c.b16 %v3936, %v3932
        %v4213 = vpack.c.b16 %v3941, %v3937
        %v4214 = vpack.c.b16 %v3942, %v3938
        %v4215 = vpack.c.b16 %v3943, %v3939
        %v4216 = vpack.c.b16 %v3944, %v3940
        %v4217 = vpack.c.b16 %v3949, %v3945
        %v4218 = vpack.c.b16 %v3950, %v3946
        %v4219 = vpack.c.b16 %v3951, %v3947
        %v4220 = vpack.c.b16 %v3952, %v3948
        %v4221 = vpack.c.b16 %v3957, %v3953
        %v4222 = vpack.c.b16 %v3958, %v3954
        %v4223 = vpack.c.b16 %v3959, %v3955
        %v4224 = vpack.c.b16 %v3960, %v3956
        %v4225 = vpack.c.b16 %v3965, %v3961
        %v4226 = vpack.c.b16 %v3966, %v3962
        %v4227 = vpack.c.b16 %v3967, %v3963
        %v4228 = vpack.c.b16 %v3968, %v3964
        %v4229 = vpack.c.b16 %v3973, %v3969
        %v4230 = vpack.c.b16 %v3974, %v3970
        %v4231 = vpack.c.b16 %v3975, %v3971
        %v4232 = vpack.c.b16 %v3976, %v3972
        %v4233 = vpack.c.b16 %v3981, %v3977
        %v4234 = vpack.c.b16 %v3982, %v3978
        %v4235 = vpack.c.b16 %v3983, %v3979
        %v4236 = vpack.c.b16 %v3984, %v3980
        %v4237 = vpack.c.b16 %v3989, %v3985
        %v4238 = vpack.c.b16 %v3990, %v3986
        %v4239 = vpack.c.b16 %v3991, %v3987
        %v4240 = vpack.c.b16 %v3992, %v3988
        %v4241 = vpack.c.b16 %v3997, %v3993
        %v4242 = vpack.c.b16 %v3998, %v3994
        %v4243 = vpack.c.b16 %v3999, %v3995
        %v4244 = vpack.c.b16 %v4000, %v3996
        %v4245 = vpack.c.b16 %v4005, %v4001
        %v4246 = vpack.c.b16 %v4006, %v4002
        %v4247 = vpack.c.b16 %v4007, %v4003
        %v4248 = vpack.c.b16 %v4008, %v4004
        %v4249 = vpack.c.b16 %v4013, %v4009
        %v4250 = vpack.c.b16 %v4014, %v4010
        %v4251 = vpack.c.b16 %v4015, %v4011
        %v4252 = vpack.c.b16 %v4016, %v4012
        %v4253 = vpack.c.b16 %v4021, %v4017
        %v4254 = vpack.c.b16 %v4022, %v4018
        %v4255 = vpack.c.b16 %v4023, %v4019
        %v4256 = vpack.c.b16 %v4024, %v4020
        %v4257 = vpack.c.b16 %v4029, %v4025
        %v4258 = vpack.c.b16 %v4030, %v4026
        %v4259 = vpack.c.b16 %v4031, %v4027
        %v4260 = vpack.c.b16 %v4032, %v4028
        %v4261 = vpack.c.b16 %v4037, %v4033
        %v4262 = vpack.c.b16 %v4038, %v4034
        %v4263 = vpack.c.b16 %v4039, %v4035
        %v4264 = vpack.c.b16 %v4040, %v4036
        %v4265 = vpack.c.b16 %v4045, %v4041
        %v4266 = vpack.c.b16 %v4046, %v4042
        %v4267 = vpack.c.b16 %v4047, %v4043
        %v4268 = vpack.c.b16 %v4048, %v4044
        %v4269 = vpack.c.b16 %v4053, %v4049
        %v4270 = vpack.c.b16 %v4054, %v4050
        %v4271 = vpack.c.b16 %v4055, %v4051
        %v4272 = vpack.c.b16 %v4056, %v4052
        %v4273 = vpack.c.b16 %v4061, %v4057
        %v4274 = vpack.c.b16 %v4062, %v4058
        %v4275 = vpack.c.b16 %v4063, %v4059
        %v4276 = vpack.c.b16 %v4064, %v4060
        %v4277 = vpack.c.b16 %v4069, %v4065
        %v4278 = vpack.c.b16 %v4070, %v4066
        %v4279 = vpack.c.b16 %v4071, %v4067
        %v4280 = vpack.c.b16 %v4072, %v4068
        %v4281 = vpack.c.b16 %v4077, %v4073
        %v4282 = vpack.c.b16 %v4078, %v4074
        %v4283 = vpack.c.b16 %v4079, %v4075
        %v4284 = vpack.c.b16 %v4080, %v4076
        %v4285 = vpack.c.b16 %v4085, %v4081
        %v4286 = vpack.c.b16 %v4086, %v4082
        %v4287 = vpack.c.b16 %v4087, %v4083
        %v4288 = vpack.c.b16 %v4088, %v4084
        %v4289 = vpack.c.b16 %v4093, %v4089
        %v4290 = vpack.c.b16 %v4094, %v4090
        %v4291 = vpack.c.b16 %v4095, %v4091
        %v4292 = vpack.c.b16 %v4096, %v4092
        %v4293 = vpack.c.b16 %v4101, %v4097
        %v4294 = vpack.c.b16 %v4102, %v4098
        %v4295 = vpack.c.b16 %v4103, %v4099
        %v4296 = vpack.c.b16 %v4104, %v4100
        %4489 = vmatprep.subr.bf16.mxu0 %v4134
        %4490 = vmatpush1.bf16.msra.mxu0 %v4133
        %4491 = vmatprep.subr.bf16.mxu0 %v4130
        %4492 = vmatpush1.bf16.msra.mxu0 %v4129
        %4493 = vmatprep.subr.bf16.mxu0 %v4126
        %4494 = vmatpush1.bf16.msra.mxu0 %v4125
        %4495 = vmatprep.subr.bf16.mxu0 %v4122
        %4496 = vmatpush1.bf16.msra.mxu0 %v4121
        %4497 = vmatprep.subr.bf16.mxu0 %v4118
        %4498 = vmatpush1.bf16.msra.mxu0 %v4117
        %4499 = vmatprep.subr.bf16.mxu0 %v4114
        %4500 = vmatpush1.bf16.msra.mxu0 %v4113
        %4501 = vmatprep.subr.bf16.mxu0 %v4110
        %4502 = vmatpush1.bf16.msra.mxu0 %v4109
        %4503 = vmatprep.subr.bf16.mxu0 %v4106
        %4504 = vmatpush1.bf16.msra.mxu0 %v4105
        %4505 = vmatprep.subr.bf16.mxu0 %v4166
        %4506 = vmatpush2.bf16.msra.mxu0 %v4165
        %4507 = vmatprep.subr.bf16.mxu0 %v4162
        %4508 = vmatpush2.bf16.msra.mxu0 %v4161
        %4509 = vmatprep.subr.bf16.mxu0 %v4158
        %4510 = vmatpush2.bf16.msra.mxu0 %v4157
        %4511 = vmatprep.subr.bf16.mxu0 %v4154
        %4512 = vmatpush2.bf16.msra.mxu0 %v4153
        %4513 = vmatprep.subr.bf16.mxu0 %v4150
        %4514 = vmatpush2.bf16.msra.mxu0 %v4149
        %4515 = vmatprep.subr.bf16.mxu0 %v4146
        %4516 = vmatpush2.bf16.msra.mxu0 %v4145
        %4517 = vmatprep.subr.bf16.mxu0 %v4142
        %4518 = vmatpush2.bf16.msra.mxu0 %v4141
        %4519 = vmatprep.subr.bf16.mxu0 %v4138
        %4520 = vmatpush2.bf16.msra.mxu0 %v4137
        %4521 = vmatprep.mubr.bf16.mxu0 %v3310
        %4522 = vmatmul.mubr.bf16.gmra.mxu0 %v3309
        %v4523 = vpop.f32.mrf.mxu0
        %v4524 = vadd.f32 %v3512, %v4523
        %v4525 = vpop.f32.mrf.mxu0
        %v4526 = vadd.f32 %v3516, %v4525
        %v4527 = vpop.f32.mrf.mxu0
        %v4528 = vpop.f32.mrf.mxu0
        %4529 = vdwg.mxu0
        %4530 = vmatprep.subr.bf16.mxu0 %v4198
        %4531 = vmatpush1.bf16.msra.mxu0 %v4197
        %4532 = vmatprep.subr.bf16.mxu0 %v4194
        %4533 = vmatpush1.bf16.msra.mxu0 %v4193
        %4534 = vmatprep.subr.bf16.mxu0 %v4190
        %4535 = vmatpush1.bf16.msra.mxu0 %v4189
        %4536 = vmatprep.subr.bf16.mxu0 %v4186
        %4537 = vmatpush1.bf16.msra.mxu0 %v4185
        %4538 = vmatprep.subr.bf16.mxu0 %v4182
        %4539 = vmatpush1.bf16.msra.mxu0 %v4181
        %4540 = vmatprep.subr.bf16.mxu0 %v4178
        %4541 = vmatpush1.bf16.msra.mxu0 %v4177
        %4542 = vmatprep.subr.bf16.mxu0 %v4174
        %4543 = vmatpush1.bf16.msra.mxu0 %v4173
        %4544 = vmatprep.subr.bf16.mxu0 %v4170
        %4545 = vmatpush1.bf16.msra.mxu0 %v4169
        %4546 = vmatprep.subr.bf16.mxu0 %v4230
        %4547 = vmatpush2.bf16.msra.mxu0 %v4229
        %4548 = vmatprep.subr.bf16.mxu0 %v4226
        %4549 = vmatpush2.bf16.msra.mxu0 %v4225
        %4550 = vmatprep.subr.bf16.mxu0 %v4222
        %4551 = vmatpush2.bf16.msra.mxu0 %v4221
        %4552 = vmatprep.subr.bf16.mxu0 %v4218
        %4553 = vmatpush2.bf16.msra.mxu0 %v4217
        %4554 = vmatprep.subr.bf16.mxu0 %v4214
        %4555 = vmatpush2.bf16.msra.mxu0 %v4213
        %4556 = vmatprep.subr.bf16.mxu0 %v4210
        %4557 = vmatpush2.bf16.msra.mxu0 %v4209
        %4558 = vmatprep.subr.bf16.mxu0 %v4206
        %4559 = vmatpush2.bf16.msra.mxu0 %v4205
        %4560 = vmatprep.subr.bf16.mxu0 %v4202
        %4561 = vmatpush2.bf16.msra.mxu0 %v4201
        %4562 = vmatprep.mubr.bf16.mxu0 %v3312
        %4563 = vmatmul.mubr.bf16.gmra.mxu0 %v3311
        %v4564 = vpop.f32.mrf.mxu0
        %v4565 = vadd.f32 %v4524, %v4564
        %v4566 = vpop.f32.mrf.mxu0
        %v4567 = vadd.f32 %v4526, %v4566
        %v4568 = vpop.f32.mrf.mxu0
        %v4569 = vpop.f32.mrf.mxu0
        %4570 = vdwg.mxu0
        %4571 = vmatprep.subr.bf16.mxu0 %v4262
        %4572 = vmatpush1.bf16.msra.mxu0 %v4261
        %4573 = vmatprep.subr.bf16.mxu0 %v4258
        %4574 = vmatpush1.bf16.msra.mxu0 %v4257
        %4575 = vmatprep.subr.bf16.mxu0 %v4254
        %4576 = vmatpush1.bf16.msra.mxu0 %v4253
        %4577 = vmatprep.subr.bf16.mxu0 %v4250
        %4578 = vmatpush1.bf16.msra.mxu0 %v4249
        %4579 = vmatprep.subr.bf16.mxu0 %v4246
        %4580 = vmatpush1.bf16.msra.mxu0 %v4245
        %4581 = vmatprep.subr.bf16.mxu0 %v4242
        %4582 = vmatpush1.bf16.msra.mxu0 %v4241
        %4583 = vmatprep.subr.bf16.mxu0 %v4238
        %4584 = vmatpush1.bf16.msra.mxu0 %v4237
        %4585 = vmatprep.subr.bf16.mxu0 %v4234
        %4586 = vmatpush1.bf16.msra.mxu0 %v4233
        %4587 = vmatprep.subr.bf16.mxu0 %v4294
        %4588 = vmatpush2.bf16.msra.mxu0 %v4293
        %4589 = vmatprep.subr.bf16.mxu0 %v4290
        %4590 = vmatpush2.bf16.msra.mxu0 %v4289
        %4591 = vmatprep.subr.bf16.mxu0 %v4286
        %4592 = vmatpush2.bf16.msra.mxu0 %v4285
        %4593 = vmatprep.subr.bf16.mxu0 %v4282
        %4594 = vmatpush2.bf16.msra.mxu0 %v4281
        %4595 = vmatprep.subr.bf16.mxu0 %v4278
        %4596 = vmatpush2.bf16.msra.mxu0 %v4277
        %4597 = vmatprep.subr.bf16.mxu0 %v4274
        %4598 = vmatpush2.bf16.msra.mxu0 %v4273
        %4599 = vmatprep.subr.bf16.mxu0 %v4270
        %4600 = vmatpush2.bf16.msra.mxu0 %v4269
        %4601 = vmatprep.subr.bf16.mxu0 %v4266
        %4602 = vmatpush2.bf16.msra.mxu0 %v4265
        %4603 = vmatprep.mubr.bf16.mxu0 %v3314
        %4604 = vmatmul.mubr.bf16.gmra.mxu0 %v3313
        %v4605 = vpop.f32.mrf.mxu0
        %v4606 = vadd.f32 %v4565, %v4605
        %v4607 = vpop.f32.mrf.mxu0
        %v4608 = vadd.f32 %v4567, %v4607
        %v4609 = vpop.f32.mrf.mxu0
        %v4610 = vpop.f32.mrf.mxu0
        %4611 = vdwg.mxu0
        %4612 = vmatprep.subr.bf16.mxu0 %v4136
        %4613 = vmatpush1.bf16.msra.mxu0 %v4135
        %4614 = vmatprep.subr.bf16.mxu0 %v4132
        %4615 = vmatpush1.bf16.msra.mxu0 %v4131
        %4616 = vmatprep.subr.bf16.mxu0 %v4128
        %4617 = vmatpush1.bf16.msra.mxu0 %v4127
        %4618 = vmatprep.subr.bf16.mxu0 %v4124
        %4619 = vmatpush1.bf16.msra.mxu0 %v4123
        %4620 = vmatprep.subr.bf16.mxu0 %v4120
        %4621 = vmatpush1.bf16.msra.mxu0 %v4119
        %4622 = vmatprep.subr.bf16.mxu0 %v4116
        %4623 = vmatpush1.bf16.msra.mxu0 %v4115
        %4624 = vmatprep.subr.bf16.mxu0 %v4112
        %4625 = vmatpush1.bf16.msra.mxu0 %v4111
        %4626 = vmatprep.subr.bf16.mxu0 %v4108
        %4627 = vmatpush1.bf16.msra.mxu0 %v4107
        %4628 = vmatprep.subr.bf16.mxu0 %v4168
        %4629 = vmatpush2.bf16.msra.mxu0 %v4167
        %4630 = vmatprep.subr.bf16.mxu0 %v4164
        %4631 = vmatpush2.bf16.msra.mxu0 %v4163
        %4632 = vmatprep.subr.bf16.mxu0 %v4160
        %4633 = vmatpush2.bf16.msra.mxu0 %v4159
        %4634 = vmatprep.subr.bf16.mxu0 %v4156
        %4635 = vmatpush2.bf16.msra.mxu0 %v4155
        %4636 = vmatprep.subr.bf16.mxu0 %v4152
        %4637 = vmatpush2.bf16.msra.mxu0 %v4151
        %4638 = vmatprep.subr.bf16.mxu0 %v4148
        %4639 = vmatpush2.bf16.msra.mxu0 %v4147
        %4640 = vmatprep.subr.bf16.mxu0 %v4144
        %4641 = vmatpush2.bf16.msra.mxu0 %v4143
        %4642 = vmatprep.subr.bf16.mxu0 %v4140
        %4643 = vmatpush2.bf16.msra.mxu0 %v4139
        %4644 = vmatprep.mubr.bf16.mxu0 %v3310
        %4645 = vmatmul.mubr.bf16.gmra.mxu0 %v3309
        %v4646 = vpop.f32.mrf.mxu0
        %v4647 = vadd.f32 %v3520, %v4646
        %v4648 = vpop.f32.mrf.mxu0
        %v4649 = vadd.f32 %v3524, %v4648
        %v4650 = vpop.f32.mrf.mxu0
        %v4651 = vpop.f32.mrf.mxu0
        %4652 = vdwg.mxu0
        %4653 = vmatprep.subr.bf16.mxu0 %v4200
        %4654 = vmatpush1.bf16.msra.mxu0 %v4199
        %4655 = vmatprep.subr.bf16.mxu0 %v4196
        %4656 = vmatpush1.bf16.msra.mxu0 %v4195
        %4657 = vmatprep.subr.bf16.mxu0 %v4192
        %4658 = vmatpush1.bf16.msra.mxu0 %v4191
        %4659 = vmatprep.subr.bf16.mxu0 %v4188
        %4660 = vmatpush1.bf16.msra.mxu0 %v4187
        %4661 = vmatprep.subr.bf16.mxu0 %v4184
        %4662 = vmatpush1.bf16.msra.mxu0 %v4183
        %4663 = vmatprep.subr.bf16.mxu0 %v4180
        %4664 = vmatpush1.bf16.msra.mxu0 %v4179
        %4665 = vmatprep.subr.bf16.mxu0 %v4176
        %4666 = vmatpush1.bf16.msra.mxu0 %v4175
        %4667 = vmatprep.subr.bf16.mxu0 %v4172
        %4668 = vmatpush1.bf16.msra.mxu0 %v4171
        %4669 = vmatprep.subr.bf16.mxu0 %v4232
        %4670 = vmatpush2.bf16.msra.mxu0 %v4231
        %4671 = vmatprep.subr.bf16.mxu0 %v4228
        %4672 = vmatpush2.bf16.msra.mxu0 %v4227
        %4673 = vmatprep.subr.bf16.mxu0 %v4224
        %4674 = vmatpush2.bf16.msra.mxu0 %v4223
        %4675 = vmatprep.subr.bf16.mxu0 %v4220
        %4676 = vmatpush2.bf16.msra.mxu0 %v4219
        %4677 = vmatprep.subr.bf16.mxu0 %v4216
        %4678 = vmatpush2.bf16.msra.mxu0 %v4215
        %4679 = vmatprep.subr.bf16.mxu0 %v4212
        %4680 = vmatpush2.bf16.msra.mxu0 %v4211
        %4681 = vmatprep.subr.bf16.mxu0 %v4208
        %4682 = vmatpush2.bf16.msra.mxu0 %v4207
        %4683 = vmatprep.subr.bf16.mxu0 %v4204
        %4684 = vmatpush2.bf16.msra.mxu0 %v4203
        %4685 = vmatprep.mubr.bf16.mxu0 %v3312
        %4686 = vmatmul.mubr.bf16.gmra.mxu0 %v3311
        %v4687 = vpop.f32.mrf.mxu0
        %v4688 = vadd.f32 %v4647, %v4687
        %v4689 = vpop.f32.mrf.mxu0
        %v4690 = vadd.f32 %v4649, %v4689
        %v4691 = vpop.f32.mrf.mxu0
        %v4692 = vpop.f32.mrf.mxu0
        %4693 = vdwg.mxu0
        %4694 = vmatprep.subr.bf16.mxu0 %v4264
        %4695 = vmatpush1.bf16.msra.mxu0 %v4263
        %4696 = vmatprep.subr.bf16.mxu0 %v4260
        %4697 = vmatpush1.bf16.msra.mxu0 %v4259
        %4698 = vmatprep.subr.bf16.mxu0 %v4256
        %4699 = vmatpush1.bf16.msra.mxu0 %v4255
        %4700 = vmatprep.subr.bf16.mxu0 %v4252
        %4701 = vmatpush1.bf16.msra.mxu0 %v4251
        %4702 = vmatprep.subr.bf16.mxu0 %v4248
        %4703 = vmatpush1.bf16.msra.mxu0 %v4247
        %4704 = vmatprep.subr.bf16.mxu0 %v4244
        %4705 = vmatpush1.bf16.msra.mxu0 %v4243
        %4706 = vmatprep.subr.bf16.mxu0 %v4240
        %4707 = vmatpush1.bf16.msra.mxu0 %v4239
        %4708 = vmatprep.subr.bf16.mxu0 %v4236
        %4709 = vmatpush1.bf16.msra.mxu0 %v4235
        %4710 = vmatprep.subr.bf16.mxu0 %v4296
        %4711 = vmatpush2.bf16.msra.mxu0 %v4295
        %4712 = vmatprep.subr.bf16.mxu0 %v4292
        %4713 = vmatpush2.bf16.msra.mxu0 %v4291
        %4714 = vmatprep.subr.bf16.mxu0 %v4288
        %4715 = vmatpush2.bf16.msra.mxu0 %v4287
        %4716 = vmatprep.subr.bf16.mxu0 %v4284
        %4717 = vmatpush2.bf16.msra.mxu0 %v4283
        %4718 = vmatprep.subr.bf16.mxu0 %v4280
        %4719 = vmatpush2.bf16.msra.mxu0 %v4279
        %4720 = vmatprep.subr.bf16.mxu0 %v4276
        %4721 = vmatpush2.bf16.msra.mxu0 %v4275
        %4722 = vmatprep.subr.bf16.mxu0 %v4272
        %4723 = vmatpush2.bf16.msra.mxu0 %v4271
        %4724 = vmatprep.subr.bf16.mxu0 %v4268
        %4725 = vmatpush2.bf16.msra.mxu0 %v4267
        %4726 = vmatprep.mubr.bf16.mxu0 %v3314
        %4727 = vmatmul.mubr.bf16.gmra.mxu0 %v3313
        %v4728 = vpop.f32.mrf.mxu0
        %v4729 = vadd.f32 %v4688, %v4728
        %v4730 = vpop.f32.mrf.mxu0
        %v4731 = vadd.f32 %v4690, %v4730
        %v4732 = vpop.f32.mrf.mxu0
        %v4733 = vpop.f32.mrf.mxu0
        %4734 = vdwg.mxu0
        %v4735 = vmax.f32 %v4606, 0.0
        %v4736 = vmax.f32 %v4608, 0.0
        %v4737 = vmax.f32 %v4729, 0.0
        %v4738 = vmax.f32 %v4731, 0.0
        %v4739 = vpack.c.bf16 %v4735, %v4735
        %v4740 = vpack.c.bf16 %v4736, %v4736
        %v4741 = vpack.c.bf16 %v4737, %v4737
        %v4742 = vpack.c.bf16 %v4738, %v4738
        %v4743 = vld [vmem:[#allocation10] sm:$0xf]
        %v4744 = vld [vmem:[#allocation10 + $0x4] sm:$0xf]
        %v4745 = vld [vmem:[#allocation10 + $0x8] sm:$0xf]
        %v4746 = vld [vmem:[#allocation10 + $0xc] sm:$0xf]
        %v4747 = vld [vmem:[#allocation10 + $0x10] sm:$0xf]
        %v4748 = vld [vmem:[#allocation10 + $0x14] sm:$0xf]
        %v4749 = vld [vmem:[#allocation10 + $0x18] sm:$0xf]
        %v4750 = vld [vmem:[#allocation10 + $0x1c] sm:$0xf]
        %v4751 = vld [vmem:[#allocation10 + $0x20] sm:$0xf]
        %v4752 = vld [vmem:[#allocation10 + $0x24] sm:$0xf]
        %v4753 = vld [vmem:[#allocation10 + $0x28] sm:$0xf]
        %v4754 = vld [vmem:[#allocation10 + $0x2c] sm:$0xf]
        %v4755 = vld [vmem:[#allocation10 + $0x30] sm:$0xf]
        %v4756 = vld [vmem:[#allocation10 + $0x34] sm:$0xf]
        %v4757 = vld [vmem:[#allocation10 + $0x38] sm:$0xf]
        %v4758 = vld [vmem:[#allocation10 + $0x3c] sm:$0xf]
        %v4759 = vld [vmem:[#allocation10 + $0x40] sm:$0xf]
        %v4760 = vld [vmem:[#allocation10 + $0x44] sm:$0xf]
        %v4761 = vld [vmem:[#allocation10 + $0x48] sm:$0xf]
        %v4762 = vld [vmem:[#allocation10 + $0x4c] sm:$0xf]
        %v4763 = vld [vmem:[#allocation10 + $0x50] sm:$0xf]
        %v4764 = vld [vmem:[#allocation10 + $0x54] sm:$0xf]
        %v4765 = vld [vmem:[#allocation10 + $0x58] sm:$0xf]
        %v4766 = vld [vmem:[#allocation10 + $0x5c] sm:$0xf]
        %v4767 = vld [vmem:[#allocation10 + $0x60] sm:$0xf]
        %v4768 = vld [vmem:[#allocation10 + $0x64] sm:$0xf]
        %v4769 = vld [vmem:[#allocation10 + $0x68] sm:$0xf]
        %v4770 = vld [vmem:[#allocation10 + $0x6c] sm:$0xf]
        %v4771 = vld [vmem:[#allocation10 + $0x70] sm:$0xf]
        %v4772 = vld [vmem:[#allocation10 + $0x74] sm:$0xf]
        %v4773 = vld [vmem:[#allocation10 + $0x78] sm:$0xf]
        %v4774 = vld [vmem:[#allocation10 + $0x7c] sm:$0xf]
        %v4775 = vld [vmem:[#allocation10 + $0x80] sm:$0xf]
        %v4776 = vld [vmem:[#allocation10 + $0x84] sm:$0xf]
        %v4777 = vld [vmem:[#allocation10 + $0x88] sm:$0xf]
        %v4778 = vld [vmem:[#allocation10 + $0x8c] sm:$0xf]
        %v4779 = vld [vmem:[#allocation10 + $0x90] sm:$0xf]
        %v4780 = vld [vmem:[#allocation10 + $0x94] sm:$0xf]
        %v4781 = vld [vmem:[#allocation10 + $0x98] sm:$0xf]
        %v4782 = vld [vmem:[#allocation10 + $0x9c] sm:$0xf]
        %v4783 = vld [vmem:[#allocation10 + $0xa0] sm:$0xf]
        %v4784 = vld [vmem:[#allocation10 + $0xa4] sm:$0xf]
        %v4785 = vld [vmem:[#allocation10 + $0xa8] sm:$0xf]
        %v4786 = vld [vmem:[#allocation10 + $0xac] sm:$0xf]
        %v4787 = vld [vmem:[#allocation10 + $0xb0] sm:$0xf]
        %v4788 = vld [vmem:[#allocation10 + $0xb4] sm:$0xf]
        %v4789 = vld [vmem:[#allocation10 + $0xb8] sm:$0xf]
        %v4790 = vld [vmem:[#allocation10 + $0xbc] sm:$0xf]
        %v4791 = vld [vmem:[#allocation10 + $0xc0] sm:$0xf]
        %v4792 = vld [vmem:[#allocation10 + $0xc4] sm:$0xf]
        %v4793 = vld [vmem:[#allocation10 + $0xc8] sm:$0xf]
        %v4794 = vld [vmem:[#allocation10 + $0xcc] sm:$0xf]
        %v4795 = vld [vmem:[#allocation10 + $0xd0] sm:$0xf]
        %v4796 = vld [vmem:[#allocation10 + $0xd4] sm:$0xf]
        %v4797 = vld [vmem:[#allocation10 + $0xd8] sm:$0xf]
        %v4798 = vld [vmem:[#allocation10 + $0xdc] sm:$0xf]
        %v4799 = vld [vmem:[#allocation10 + $0xe0] sm:$0xf]
        %v4800 = vld [vmem:[#allocation10 + $0xe4] sm:$0xf]
        %v4801 = vld [vmem:[#allocation10 + $0xe8] sm:$0xf]
        %v4802 = vld [vmem:[#allocation10 + $0xec] sm:$0xf]
        %v4803 = vld [vmem:[#allocation10 + $0xf0] sm:$0xf]
        %v4804 = vld [vmem:[#allocation10 + $0xf4] sm:$0xf]
        %v4805 = vld [vmem:[#allocation10 + $0xf8] sm:$0xf]
        %v4806 = vld [vmem:[#allocation10 + $0xfc] sm:$0xf]
        %v4807 = vld [vmem:[#allocation12] sm:$0x1]
        %v4809 = vlaneseq
        %v4810 = vshrl.u32 %v4809, 7
        %v4811 = vsub.s32 0, %v4810
        %v4812 = vrot.slane %v4807, %v4811
        %v4878 = vunpack.c.l.b16 %v4743
        %v4879 = vunpack.c.l.b16 %v4744
        %v4880 = vunpack.c.l.b16 %v4745
        %v4881 = vunpack.c.l.b16 %v4746
        %v4882 = vunpack.c.l.b16 %v4747
        %v4883 = vunpack.c.l.b16 %v4748
        %v4884 = vunpack.c.l.b16 %v4749
        %v4885 = vunpack.c.l.b16 %v4750
        %v4886 = vunpack.c.l.b16 %v4751
        %v4887 = vunpack.c.l.b16 %v4752
        %v4888 = vunpack.c.l.b16 %v4753
        %v4889 = vunpack.c.l.b16 %v4754
        %v4890 = vunpack.c.l.b16 %v4755
        %v4891 = vunpack.c.l.b16 %v4756
        %v4892 = vunpack.c.l.b16 %v4757
        %v4893 = vunpack.c.l.b16 %v4758
        %v4894 = vunpack.c.l.b16 %v4759
        %v4895 = vunpack.c.l.b16 %v4760
        %v4896 = vunpack.c.l.b16 %v4761
        %v4897 = vunpack.c.l.b16 %v4762
        %v4898 = vunpack.c.l.b16 %v4763
        %v4899 = vunpack.c.l.b16 %v4764
        %v4900 = vunpack.c.l.b16 %v4765
        %v4901 = vunpack.c.l.b16 %v4766
        %v4902 = vunpack.c.l.b16 %v4767
        %v4903 = vunpack.c.l.b16 %v4768
        %v4904 = vunpack.c.l.b16 %v4769
        %v4905 = vunpack.c.l.b16 %v4770
        %v4906 = vunpack.c.l.b16 %v4771
        %v4907 = vunpack.c.l.b16 %v4772
        %v4908 = vunpack.c.l.b16 %v4773
        %v4909 = vunpack.c.l.b16 %v4774
        %v4910 = vunpack.c.l.b16 %v4775
        %v4911 = vunpack.c.l.b16 %v4776
        %v4912 = vunpack.c.l.b16 %v4777
        %v4913 = vunpack.c.l.b16 %v4778
        %v4914 = vunpack.c.l.b16 %v4779
        %v4915 = vunpack.c.l.b16 %v4780
        %v4916 = vunpack.c.l.b16 %v4781
        %v4917 = vunpack.c.l.b16 %v4782
        %v4918 = vunpack.c.l.b16 %v4783
        %v4919 = vunpack.c.l.b16 %v4784
        %v4920 = vunpack.c.l.b16 %v4785
        %v4921 = vunpack.c.l.b16 %v4786
        %v4922 = vunpack.c.l.b16 %v4787
        %v4923 = vunpack.c.l.b16 %v4788
        %v4924 = vunpack.c.l.b16 %v4789
        %v4925 = vunpack.c.l.b16 %v4790
        %v4926 = vunpack.c.l.b16 %v4791
        %v4927 = vunpack.c.l.b16 %v4792
        %v4928 = vunpack.c.l.b16 %v4793
        %v4929 = vunpack.c.l.b16 %v4794
        %v4930 = vunpack.c.l.b16 %v4795
        %v4931 = vunpack.c.l.b16 %v4796
        %v4932 = vunpack.c.l.b16 %v4797
        %v4933 = vunpack.c.l.b16 %v4798
        %v4934 = vunpack.c.l.b16 %v4799
        %v4935 = vunpack.c.l.b16 %v4800
        %v4936 = vunpack.c.l.b16 %v4801
        %v4937 = vunpack.c.l.b16 %v4802
        %v4938 = vunpack.c.l.b16 %v4803
        %v4939 = vunpack.c.l.b16 %v4804
        %v4940 = vunpack.c.l.b16 %v4805
        %v4941 = vunpack.c.l.b16 %v4806
        %v4942 = vpack.c.b16 %v4879, %v4878
        %v4943 = vpack.c.b16 %v4881, %v4880
        %v4944 = vpack.c.b16 %v4883, %v4882
        %v4945 = vpack.c.b16 %v4885, %v4884
        %v4946 = vpack.c.b16 %v4887, %v4886
        %v4947 = vpack.c.b16 %v4889, %v4888
        %v4948 = vpack.c.b16 %v4891, %v4890
        %v4949 = vpack.c.b16 %v4893, %v4892
        %v4950 = vpack.c.b16 %v4895, %v4894
        %v4951 = vpack.c.b16 %v4897, %v4896
        %v4952 = vpack.c.b16 %v4899, %v4898
        %v4953 = vpack.c.b16 %v4901, %v4900
        %v4954 = vpack.c.b16 %v4903, %v4902
        %v4955 = vpack.c.b16 %v4905, %v4904
        %v4956 = vpack.c.b16 %v4907, %v4906
        %v4957 = vpack.c.b16 %v4909, %v4908
        %v4958 = vpack.c.b16 %v4911, %v4910
        %v4959 = vpack.c.b16 %v4913, %v4912
        %v4960 = vpack.c.b16 %v4915, %v4914
        %v4961 = vpack.c.b16 %v4917, %v4916
        %v4962 = vpack.c.b16 %v4919, %v4918
        %v4963 = vpack.c.b16 %v4921, %v4920
        %v4964 = vpack.c.b16 %v4923, %v4922
        %v4965 = vpack.c.b16 %v4925, %v4924
        %v4966 = vpack.c.b16 %v4927, %v4926
        %v4967 = vpack.c.b16 %v4929, %v4928
        %v4968 = vpack.c.b16 %v4931, %v4930
        %v4969 = vpack.c.b16 %v4933, %v4932
        %v4970 = vpack.c.b16 %v4935, %v4934
        %v4971 = vpack.c.b16 %v4937, %v4936
        %v4972 = vpack.c.b16 %v4939, %v4938
        %v4973 = vpack.c.b16 %v4941, %v4940
        %5006 = vmatprep.subr.bf16.mxu0 0
        %5007 = vmatpush1.bf16.msra.mxu0 %v4949
        %5008 = vmatprep.subr.bf16.mxu0 0
        %5009 = vmatpush1.bf16.msra.mxu0 %v4948
        %5010 = vmatprep.subr.bf16.mxu0 0
        %5011 = vmatpush1.bf16.msra.mxu0 %v4947
        %5012 = vmatprep.subr.bf16.mxu0 0
        %5013 = vmatpush1.bf16.msra.mxu0 %v4946
        %5014 = vmatprep.subr.bf16.mxu0 0
        %5015 = vmatpush1.bf16.msra.mxu0 %v4945
        %5016 = vmatprep.subr.bf16.mxu0 0
        %5017 = vmatpush1.bf16.msra.mxu0 %v4944
        %5018 = vmatprep.subr.bf16.mxu0 0
        %5019 = vmatpush1.bf16.msra.mxu0 %v4943
        %5020 = vmatprep.subr.bf16.mxu0 0
        %5021 = vmatpush1.bf16.msra.mxu0 %v4942
        %5022 = vmatprep.subr.bf16.mxu0 0
        %5023 = vmatpush2.bf16.msra.mxu0 %v4957
        %5024 = vmatprep.subr.bf16.mxu0 0
        %5025 = vmatpush2.bf16.msra.mxu0 %v4956
        %5026 = vmatprep.subr.bf16.mxu0 0
        %5027 = vmatpush2.bf16.msra.mxu0 %v4955
        %5028 = vmatprep.subr.bf16.mxu0 0
        %5029 = vmatpush2.bf16.msra.mxu0 %v4954
        %5030 = vmatprep.subr.bf16.mxu0 0
        %5031 = vmatpush2.bf16.msra.mxu0 %v4953
        %5032 = vmatprep.subr.bf16.mxu0 0
        %5033 = vmatpush2.bf16.msra.mxu0 %v4952
        %5034 = vmatprep.subr.bf16.mxu0 0
        %5035 = vmatpush2.bf16.msra.mxu0 %v4951
        %5036 = vmatprep.subr.bf16.mxu0 0
        %5037 = vmatpush2.bf16.msra.mxu0 %v4950
        %5038 = vmatprep.mubr.bf16.mxu0 %v4740
        %5039 = vmatmul.mubr.bf16.gmra.mxu0 %v4739
        %v5040 = vpop.f32.mrf.mxu0
        %v5041 = vadd.f32 %v4812, %v5040
        %v5042 = vpop.f32.mrf.mxu0
        %v5043 = vpop.f32.mrf.mxu0
        %v5044 = vpop.f32.mrf.mxu0
        %5045 = vdwg.mxu0
        %5046 = vmatprep.subr.bf16.mxu0 0
        %5047 = vmatpush1.bf16.msra.mxu0 %v4965
        %5048 = vmatprep.subr.bf16.mxu0 0
        %5049 = vmatpush1.bf16.msra.mxu0 %v4964
        %5050 = vmatprep.subr.bf16.mxu0 0
        %5051 = vmatpush1.bf16.msra.mxu0 %v4963
        %5052 = vmatprep.subr.bf16.mxu0 0
        %5053 = vmatpush1.bf16.msra.mxu0 %v4962
        %5054 = vmatprep.subr.bf16.mxu0 0
        %5055 = vmatpush1.bf16.msra.mxu0 %v4961
        %5056 = vmatprep.subr.bf16.mxu0 0
        %5057 = vmatpush1.bf16.msra.mxu0 %v4960
        %5058 = vmatprep.subr.bf16.mxu0 0
        %5059 = vmatpush1.bf16.msra.mxu0 %v4959
        %5060 = vmatprep.subr.bf16.mxu0 0
        %5061 = vmatpush1.bf16.msra.mxu0 %v4958
        %5062 = vmatprep.subr.bf16.mxu0 0
        %5063 = vmatpush2.bf16.msra.mxu0 %v4973
        %5064 = vmatprep.subr.bf16.mxu0 0
        %5065 = vmatpush2.bf16.msra.mxu0 %v4972
        %5066 = vmatprep.subr.bf16.mxu0 0
        %5067 = vmatpush2.bf16.msra.mxu0 %v4971
        %5068 = vmatprep.subr.bf16.mxu0 0
        %5069 = vmatpush2.bf16.msra.mxu0 %v4970
        %5070 = vmatprep.subr.bf16.mxu0 0
        %5071 = vmatpush2.bf16.msra.mxu0 %v4969
        %5072 = vmatprep.subr.bf16.mxu0 0
        %5073 = vmatpush2.bf16.msra.mxu0 %v4968
        %5074 = vmatprep.subr.bf16.mxu0 0
        %5075 = vmatpush2.bf16.msra.mxu0 %v4967
        %5076 = vmatprep.subr.bf16.mxu0 0
        %5077 = vmatpush2.bf16.msra.mxu0 %v4966
        %5078 = vmatprep.mubr.bf16.mxu0 %v4742
        %5079 = vmatmul.mubr.bf16.gmra.mxu0 %v4741
        %v5080 = vpop.f32.mrf.mxu0
        %v5081 = vadd.f32 %v5041, %v5080
        %v5082 = vpop.f32.mrf.mxu0
        %v5083 = vpop.f32.mrf.mxu0
        %v5084 = vpop.f32.mrf.mxu0
        %5085 = vdwg.mxu0
        %vm5086 = vcmp.lt.s32.totalorder %v452, 2
        %v5087 = vsel %vm5086, %v5081, -1e+30
        %5088 = vmax.xlane.f32.xlu0 %v5087
        %v5089 = vpop.xlane.xlu0 %5088
        %v5090 = vsub.f32 %v5087, %v5089
        %v5091 = vmul.f32 %v5090, 1.442695
        %v5092 = vpow.pop %v5091
        %5093 = vadd.xlane.f32.xlu0 %v5092
        %v5094 = vpop.xlane.xlu0 %5093
        %v5095 = vlog2.pop %v5094
        %v5096 = vmul.f32 %v5095, 0.6931472
        %v5097 = vsub.f32 %v5090, %v5096
        %5098 = vst [vmem:[%s440] sm:$0xff] %v5097
        %p5099 = scmp.lt.s32.totalorder %s24, 1
        %s5100 = scalar_select %p5099, %s24, 1
        %s5101 = smul.addr %s5100, 8
        %s5102 = scalar_lea.vmem %s9, %s5101
        // Predicated region
        $region85: #{forward.1} parent=55 // pred_check
          %p5103 = pneg %p241
        $region86: #{forward.1} parent=55 // pred_check_branch
          %5105 = sbr.rel (%p5103) target = $region88
        $region87: #{forward.1} parent=55 // pred_region
          _
        $region88: #{forward.1} parent=55 // pred_fallthru
          _
      $region56: #{forward.1} parent=5 // pred_fallthru
        _
      %p5106 = scmp.le.s32.totalorder 2, %s19
      // Predicated region
      $region89: #{forward.1} parent=5 // pred_check
        %p5107 = pneg %p5106
      $region90: #{forward.1} parent=5 // pred_check_branch
        %5109 = sbr.rel (%p5107) target = $region92
      $region91: #{forward.1} parent=5 // pred_region
        %s5110 = ssub.s32 %s19, 2
        // Predicated region
        $region93: #{forward.1} parent=91 // pred_check
          %p5111 = pneg %p247
        $region94: #{forward.1} parent=91 // pred_check_branch
          %5113 = sbr.rel (%p5111) target = $region96
        $region95: #{forward.1} parent=91 // pred_region
          %p5114 = scmp.lt.s32.totalorder %s25, 1
          %s5115 = scalar_select %p5114, %s25, 1
          %s5116 = smul.addr %s5115, 8
          %s5117 = scalar_lea.vmem %s9, %s5116
        $region96: #{forward.1} parent=91 // pred_fallthru
          _
      $region92: #{forward.1} parent=5 // pred_fallthru
        _
    $region6: #{forward.1} parent=1 // loop_footer
      %s23 = sadd.s32 1, %s19
    $region7: #{forward.1} parent=1 // loop_footer_branch
      %18 = sbr.rel target = $region3
    $region8: #{forward.1} parent=1 // loop_exit
      _
    %5118 = vsyncpa [#allocation3], 1
    %s5119 = scalar_lea.sflag [#allocation3], 1
    %5120 = vsyncpa %s5119, 1
    %5121 = vsyncpa [#allocation5], 1
    %5122 = vsyncpa [#allocation8], 1
    %5123 = vsyncpa [#allocation11], 1

</llo_original>
